<compile_context>
chip_gen: v5e
topology: v5e:2x2
jax: 0.10.0
libtpu: 0.0.40
codegen_flags: <defaults>
</compile_context>

<pallas_src>
import math
from functools import partial

import jax
import jax.numpy as jnp
from jax import lax
from jax.experimental import pallas as pl
from jax.experimental.pallas import tpu as pltpu

T_TOTAL = 2 ** 5 - 1          # 31 spiking time steps; time_step == wait_time == T_TOTAL

# ----- small hyper-parameters consistent with MySpikeGPT's args -----
VOCAB = 64
EMBED = 32
CTX = 8
N_HEADS = 4
HEAD_DIM = EMBED // N_HEADS   # 8
N_LAYERS = 2
FFN_HIDDEN = 64
BATCH = 2
LN_EPS = 1e-5
M_ROWS = BATCH * CTX          # 16 rows (batch * seq)

# MXU operand dtype.  bf16 is the native single-pass MXU path on v6e/v7x and is
# cast only immediately before each dot (all IF / LayerNorm / softmax math
# stays f32, so v5e's f32-only VPU/EUP never see bf16).  The IF spike sums fed
# to the MXU are exact multiples of alpha (<= 248), so their bf16 casts are
# lossless.  Set to jnp.float32 for the closest parity with the f32 reference.
MXU_DTYPE = jnp.bfloat16


# =====================  in-kernel helpers (inlined at trace time)  =====================

def _if_count(msum, alpha):
    """Exact closed form of the IF neuron spike count for step == T.

    Reference semantics: membrane m0 = 0.5*alpha + sum_t x[t] (the whole window
    is accumulated BEFORE any spiking because step == T), then T sequential
    steps of (spike = m > alpha; m -= alpha*spike).  Spike count =
        #{k in 1..T : m0 > k*alpha} = clip(ceil(m0/alpha) - 1, 0, T)
    which reproduces the strict '>' edge case (m0 == k*alpha gives k-1 spikes;
    alpha = 8 is a power of two so the division is exact).  This holds even
    when the per-timestep inputs vary over t (weight_if / o_if / ffn.spike1).
    # TODO(synk): fp associativity differs from the 31 sequential membrane adds
    #             of the PyTorch loop (bit-identical up to ~1 ulp on the membrane).
    """
    m0 = msum + 0.5 * alpha
    return jnp.clip(jnp.ceil(m0 * (1.0 / alpha)) - 1.0, 0.0, float(T_TOTAL))


def _if_sum(msum, alpha):
    """Sum over the T timesteps of the IF output (== alpha * spike count)."""
    return alpha * _if_count(msum, alpha)


def _if_mean(msum, alpha):
    """Mean over the T timesteps of the IF output."""
    return (alpha / float(T_TOTAL)) * _if_count(msum, alpha)


def _layernorm(x, w_row, b_row, eps=LN_EPS):
    mu = jnp.mean(x, axis=-1, keepdims=True)
    xc = x - mu
    var = jnp.mean(xc * xc, axis=-1, keepdims=True)
    return xc * lax.rsqrt(var + eps) * w_row + b_row


def _split_heads(x):
    """(B*S, H*Hd) slab -> (B*H, S, Hd) for the batched attention einsums."""
    return (x.reshape(BATCH, CTX, N_HEADS, HEAD_DIM)
             .transpose(0, 2, 1, 3)
             .reshape(BATCH * N_HEADS, CTX, HEAD_DIM))


def _merge_heads(x):
    """(B*H, S, Hd) -> (B*S, H*Hd) slab (stays in registers, no scratch)."""
    return (x.reshape(BATCH, N_HEADS, CTX, HEAD_DIM)
             .transpose(0, 2, 1, 3)
             .reshape(M_ROWS, EMBED))


# =====================  the single fused forward kernel  =====================

def _fused_forward_kernel(tok_ref, emb_ref, pos_ref, norms_ref, wqkv_ref,
                          wo_ref, l1_ref, l2_ref, wout_ref, out_ref,
                          *, alphas, init_alpha):
    f32 = jnp.float32

    # ---- embedding lookup as one-hot matmul (stays on the MXU) + position ----
    tok = tok_ref[...]                                             # (M, 1) int32
    cols = lax.broadcasted_iota(jnp.int32, (M_ROWS, VOCAB), 1)
    onehot = (cols == tok).astype(MXU_DTYPE)                       # exact 0/1 in bf16
    x0 = jnp.dot(onehot, emb_ref[...], preferred_element_type=f32) + pos_ref[...]

    # ---- model-level init_spike: T identical inputs -> membrane sum = T*x0 ----
    x_real = _if_mean(float(T_TOTAL) * x0, init_alpha)             # (M, D) time-mean

    # causal mask generated in-kernel (finite large-negative instead of -inf)
    row_i = lax.broadcasted_iota(jnp.int32, (CTX, CTX), 0)
    col_i = lax.broadcasted_iota(jnp.int32, (CTX, CTX), 1)
    causal_mask = jnp.where(col_i > row_i, -1e30, 0.0).astype(f32)[None]   # (1,S,S)
    inv_T = 1.0 / float(T_TOTAL)
    # SpikeInnerProduct's two time-means and the 1/sqrt(embed) scale, folded into
    # one scalar applied AFTER the q@k^T matmul so the matmul operands stay the
    # exact (bf16-lossless) integer-valued spike sums.
    score_scale = inv_T * inv_T / math.sqrt(EMBED)

    for l in range(N_LAYERS):                  # static unroll; weights stay in VMEM
        a = alphas[l]
        norms = norms_ref[l]                                       # (4, D) f32

        # ============================ SDSA ============================
        u = _layernorm(x_real, norms[0:1, :], norms[1:2, :])
        qkv = jnp.dot(u.astype(MXU_DTYPE), wqkv_ref[l],
                      preferred_element_type=f32)                  # fused QKV (M, 3D)
        # q/k/v IF in ONE full-width closed-form chain (q/k/v alphas are equal;
        # per-timestep input identical -> membrane sum = T * projection).
        qkv_sum = _if_sum(float(T_TOTAL) * qkv, a['q'])            # (M, 3D), multiples of alpha
        q3 = _split_heads(qkv_sum[:, 0:EMBED])                     # (B*H, S, Hd)
        k3 = _split_heads(qkv_sum[:, EMBED:2 * EMBED])
        v3 = _split_heads(qkv_sum[:, 2 * EMBED:3 * EMBED])         # downstream needs time-SUM

        # one batched attention over all (batch, head) slices
        s = jnp.einsum('bqd,bkd->bqk', q3.astype(MXU_DTYPE), k3.astype(MXU_DTYPE),
                       preferred_element_type=f32)                 # (B*H, S, S)
        s = s * score_scale + causal_mask
        m = jnp.max(s, axis=-1, keepdims=True)
        e = jnp.exp(s - m)
        p = e / jnp.sum(e, axis=-1, keepdims=True)                 # exact division
        p = jnp.clip(p, 0.0, a['softmax'])                         # .clamp(0, softmax_if.alpha)
        o3 = jnp.einsum('bqk,bkd->bqd', p.astype(MXU_DTYPE), v3.astype(MXU_DTYPE),
                        preferred_element_type=f32)                # sum_t (P @ V_if[t])
        attn = _merge_heads(o3)                                    # (M, D), kept in registers

        w_sum = _if_sum(attn, a['weight'])                         # weight_if (summed over t)
        o = jnp.dot(w_sum.astype(MXU_DTYPE), wo_ref[l],
                    preferred_element_type=f32)                    # == sum_t wo(weight_if[t])
        h_real = x_real + _if_mean(o, a['o'])                      # + time-mean of o_if

        # ================= FFN (norm of x_real, as in the reference) =================
        g = _layernorm(x_real, norms[2:3, :], norms[3:4, :])
        h1 = jnp.dot(g.astype(MXU_DTYPE), l1_ref[l], preferred_element_type=f32)
        h1_sum = _if_sum(float(T_TOTAL) * h1, a['ffn_init'])       # ffn.init_spike
        o2 = jnp.dot(h1_sum.astype(MXU_DTYPE), l2_ref[l], preferred_element_type=f32)
        x_real = h_real + _if_mean(o2, a['ffn_spike1'])            # + time-mean of ffn.spike1

    # ---- output head on the full (M, D) slab: dense sublane store; the wrapper
    #      picks the last sequence position of each batch row outside the kernel ----
    out_ref[...] = jnp.dot(x_real.astype(MXU_DTYPE), wout_ref[...],
                           preferred_element_type=f32)


# =====================  wrapper / parameters  =====================

def build_forward(params):
    alphas = params['alphas']
    for a in alphas:
        # the single closed-form pass over the fused qkv slab assumes equal alphas
        assert a['q'] == a['k'] == a['v'], 'fused qkv IF assumes equal q/k/v alphas'
    kernel = partial(_fused_forward_kernel,
                     alphas=alphas, init_alpha=params['init_alpha'])

    # weights feeding the MXU live in VMEM in the MXU operand dtype;
    # LayerNorm params stay f32 (elementwise path).
    emb = params['emb'].astype(MXU_DTYPE)
    pos = params['pos']
    norms = params['norms']
    wqkv = params['wqkv'].astype(MXU_DTYPE)
    wo = params['wo'].astype(MXU_DTYPE)
    l1 = params['l1'].astype(MXU_DTYPE)
    l2 = params['l2'].astype(MXU_DTYPE)
    w_out = params['w_out'].astype(MXU_DTYPE)

    def full_spec(x):
        nd = x.ndim
        return pl.BlockSpec(x.shape, lambda i, _nd=nd: (0,) * _nd)

    def fwd(tokens):
        B, S = tokens.shape
        assert S == CTX, 'input sequence length is not equal to ctx_len!'
        assert B == BATCH
        tok2 = tokens.reshape(B * S, 1).astype(jnp.int32)
        pos_full = jnp.tile(pos, (B, 1))                           # (B*S, D)
        ins = (tok2, emb, pos_full, norms, wqkv, wo, l1, l2, w_out)
        logits = pl.pallas_call(
            kernel,
            out_shape=jax.ShapeDtypeStruct((M_ROWS, VOCAB), jnp.float32),
            grid=(1,),      # single step; total resident footprint << VMEM, no pipelining
            in_specs=[full_spec(x) for x in ins],
            out_specs=pl.BlockSpec((M_ROWS, VOCAB), lambda i: (0, 0)),
            compiler_params=pltpu.CompilerParams(
                dimension_semantics=("arbitrary",)),
        )(*ins)
        # MySpikeGPT returns out[:, -1, :]: slice the last sequence position of
        # each batch row OUTSIDE the kernel so the in-kernel store stays dense.
        return logits.reshape(B, S, VOCAB)[:, -1, :]

    return jax.jit(fwd)


def init_params(key):
    def linear_w(k, fan_in, fan_out):
        bound = 1.0 / math.sqrt(fan_in)
        return jax.random.uniform(k, (fan_in, fan_out), jnp.float32, -bound, bound)

    keys = jax.random.split(key, 2 + N_LAYERS)
    wqkv, wo, l1, l2, norms, alphas = [], [], [], [], [], []
    for i in range(N_LAYERS):
        bk = jax.random.split(keys[2 + i], 6)
        wqkv.append(jnp.concatenate([linear_w(bk[0], EMBED, EMBED),   # q
                                     linear_w(bk[1], EMBED, EMBED),   # k
                                     linear_w(bk[2], EMBED, EMBED)],  # v
                                    axis=1))
        wo.append(linear_w(bk[3], EMBED, EMBED))
        l1.append(linear_w(bk[4], EMBED, FFN_HIDDEN))
        l2.append(linear_w(bk[5], FFN_HIDDEN, EMBED))
        norms.append(jnp.stack([jnp.ones((EMBED,), jnp.float32),      # sdsa_norm w
                                jnp.zeros((EMBED,), jnp.float32),     # sdsa_norm b
                                jnp.ones((EMBED,), jnp.float32),      # ffn_norm w
                                jnp.zeros((EMBED,), jnp.float32)]))   # ffn_norm b
        # all IF alphas are static Python floats (default 8.0), baked into the kernel
        alphas.append({'q': 8.0, 'k': 8.0, 'v': 8.0, 'o': 8.0,
                       'weight': 8.0, 'softmax': 8.0,
                       'ffn_init': 8.0, 'ffn_spike1': 8.0})
    return {
        'emb': jax.random.normal(keys[0], (VOCAB, EMBED), jnp.float32),
        'pos': jnp.zeros((CTX, EMBED), jnp.float32),
        'w_out': linear_w(keys[1], EMBED, VOCAB),
        'norms': jnp.stack(norms),
        'wqkv': jnp.stack(wqkv),
        'wo': jnp.stack(wo),
        'l1': jnp.stack(l1),
        'l2': jnp.stack(l2),
        'init_alpha': 8.0,
        'alphas': alphas,
    }


if __name__ == "__main__":
    key = jax.random.PRNGKey(0)
    pkey, tkey = jax.random.split(key)
    params = init_params(pkey)
    tokens = jax.random.randint(tkey, (BATCH, CTX), 0, VOCAB, dtype=jnp.int32)
    forward = build_forward(params)
    out = forward(tokens)
    out = jax.block_until_ready(out)
    assert out.shape == (BATCH, VOCAB), out.shape
    assert bool(jnp.all(jnp.isfinite(out)))
    print("KERNEL_OK")
</pallas_src>

<mosaic_0001>
module attributes {stable_mosaic.version = 11 : i64} {
  func.func @_fused_forward_kernel(%arg0: i32, %arg1: memref<16x1xi32, #tpu.memory_space<vmem>>, %arg2: memref<64x32xbf16, #tpu.memory_space<vmem>>, %arg3: memref<16x32xf32, #tpu.memory_space<vmem>>, %arg4: memref<2x4x32xf32, #tpu.memory_space<vmem>>, %arg5: memref<2x32x96xbf16, #tpu.memory_space<vmem>>, %arg6: memref<2x32x32xbf16, #tpu.memory_space<vmem>>, %arg7: memref<2x32x64xbf16, #tpu.memory_space<vmem>>, %arg8: memref<2x64x32xbf16, #tpu.memory_space<vmem>>, %arg9: memref<32x64xbf16, #tpu.memory_space<vmem>>, %arg10: memref<16x64xf32, #tpu.memory_space<vmem>>) attributes {dimension_semantics = [#tpu.dimension_semantics<arbitrary>], iteration_bounds = array<i64: 1>, scalar_prefetch = 0 : i64, scratch_operands = 0 : i64, tpu.core_type = #tpu.core_type<tc>, window_params = [{pipeline_mode = #tpu.pipeline_mode<synchronous>, transform_indices = @transform_0, window_bounds = array<i64: 16, 1>}, {pipeline_mode = #tpu.pipeline_mode<synchronous>, transform_indices = @transform_1, window_bounds = array<i64: 64, 32>}, {pipeline_mode = #tpu.pipeline_mode<synchronous>, transform_indices = @transform_2, window_bounds = array<i64: 16, 32>}, {pipeline_mode = #tpu.pipeline_mode<synchronous>, transform_indices = @transform_3, window_bounds = array<i64: 2, 4, 32>}, {pipeline_mode = #tpu.pipeline_mode<synchronous>, transform_indices = @transform_4, window_bounds = array<i64: 2, 32, 96>}, {pipeline_mode = #tpu.pipeline_mode<synchronous>, transform_indices = @transform_5, window_bounds = array<i64: 2, 32, 32>}, {pipeline_mode = #tpu.pipeline_mode<synchronous>, transform_indices = @transform_6, window_bounds = array<i64: 2, 32, 64>}, {pipeline_mode = #tpu.pipeline_mode<synchronous>, transform_indices = @transform_7, window_bounds = array<i64: 2, 64, 32>}, {pipeline_mode = #tpu.pipeline_mode<synchronous>, transform_indices = @transform_8, window_bounds = array<i64: 32, 64>}, {pipeline_mode = #tpu.pipeline_mode<synchronous>, transform_indices = @transform_9, window_bounds = array<i64: 16, 64>}]} {
    %c0 = arith.constant 0 : index
    %c0_0 = arith.constant 0 : index
    %0 = vector.load %arg1[%c0, %c0_0] : memref<16x1xi32, #tpu.memory_space<vmem>>, vector<16x1xi32>
    %1 = tpu.iota {dimensions = array<i32: 1>} : vector<16x64xi32>
    %2 = vector.broadcast %0 : vector<16x1xi32> to vector<16x64xi32>
    %3 = arith.cmpi eq, %1, %2 : vector<16x64xi32>
    %4 = arith.extui %3 : vector<16x64xi1> to vector<16x64xi32>
    %5 = arith.sitofp %4 : vector<16x64xi32> to vector<16x64xf32>
    %6 = arith.truncf %5 : vector<16x64xf32> to vector<16x64xbf16>
    %c0_1 = arith.constant 0 : index
    %c0_2 = arith.constant 0 : index
    %7 = vector.load %arg2[%c0_1, %c0_2] : memref<64x32xbf16, #tpu.memory_space<vmem>>, vector<64x32xbf16>
    %cst = arith.constant dense<0.000000e+00> : vector<16x32xf32>
    %8 = tpu.matmul %6, %7, %cst {dimension_numbers = #tpu.dot_dimension_numbers<[1], [0], [0], [1], [0, 0, 1, 1], [], []>} : vector<16x64xbf16>, vector<64x32xbf16>, vector<16x32xf32> -> vector<16x32xf32>
    %c0_3 = arith.constant 0 : index
    %c0_4 = arith.constant 0 : index
    %9 = vector.load %arg3[%c0_3, %c0_4] : memref<16x32xf32, #tpu.memory_space<vmem>>, vector<16x32xf32>
    %10 = arith.addf %8, %9 : vector<16x32xf32>
    %cst_5 = arith.constant 3.100000e+01 : f32
    %11 = vector.broadcast %cst_5 : f32 to vector<16x32xf32>
    %12 = arith.mulf %11, %10 : vector<16x32xf32>
    %cst_6 = arith.constant 4.000000e+00 : f32
    %13 = vector.broadcast %cst_6 : f32 to vector<16x32xf32>
    %14 = arith.addf %12, %13 : vector<16x32xf32>
    %cst_7 = arith.constant 1.250000e-01 : f32
    %15 = vector.broadcast %cst_7 : f32 to vector<16x32xf32>
    %16 = arith.mulf %14, %15 : vector<16x32xf32>
    %17 = math.ceil %16 : vector<16x32xf32>
    %cst_8 = arith.constant 1.000000e+00 : f32
    %18 = vector.broadcast %cst_8 : f32 to vector<16x32xf32>
    %19 = arith.subf %17, %18 : vector<16x32xf32>
    %cst_9 = arith.constant 0.000000e+00 : f32
    %cst_10 = arith.constant 3.100000e+01 : f32
    %20 = vector.broadcast %cst_9 : f32 to vector<16x32xf32>
    %21 = arith.maximumf %20, %19 : vector<16x32xf32>
    %22 = vector.broadcast %cst_10 : f32 to vector<16x32xf32>
    %23 = arith.minimumf %22, %21 : vector<16x32xf32>
    %cst_11 = arith.constant 0.258064508 : f32
    %24 = vector.broadcast %cst_11 : f32 to vector<16x32xf32>
    %25 = arith.mulf %24, %23 : vector<16x32xf32>
    %26 = tpu.iota {dimensions = array<i32: 0>} : vector<8x8xi32>
    %27 = tpu.iota {dimensions = array<i32: 1>} : vector<8x8xi32>
    %28 = arith.cmpi sgt, %27, %26 : vector<8x8xi32>
    %cst_12 = arith.constant -1.000000e+30 : f32
    %cst_13 = arith.constant 0.000000e+00 : f32
    %29 = vector.broadcast %cst_12 : f32 to vector<8x8xf32>
    %30 = vector.broadcast %cst_13 : f32 to vector<8x8xf32>
    %31 = arith.select %28, %29, %30 : vector<8x8xi1>, vector<8x8xf32>
    %32 = vector.shape_cast %31 : vector<8x8xf32> to vector<1x8x8xf32>
    %c0_14 = arith.constant 0 : index
    %c0_15 = arith.constant 0 : index
    %c0_16 = arith.constant 0 : index
    %33 = vector.load %arg4[%c0_14, %c0_15, %c0_16] : memref<2x4x32xf32, #tpu.memory_space<vmem>>, vector<1x4x32xf32>
    %34 = vector.shape_cast %33 : vector<1x4x32xf32> to vector<4x32xf32>
    %35 = vector.extract_strided_slice %34 {offsets = [0, 0], sizes = [1, 32], strides = [1, 1]} : vector<4x32xf32> to vector<1x32xf32>
    %36 = vector.extract_strided_slice %34 {offsets = [1, 0], sizes = [1, 32], strides = [1, 1]} : vector<4x32xf32> to vector<1x32xf32>
    %cst_17 = arith.constant dense<0.000000e+00> : vector<16xf32>
    %37 = vector.multi_reduction <add>, %25, %cst_17 [1] : vector<16x32xf32> to vector<16xf32>
    %38 = vector.shape_cast %37 : vector<16xf32> to vector<16x1xf32>
    %cst_18 = arith.constant 3.200000e+01 : f32
    %39 = vector.broadcast %cst_18 : f32 to vector<16x1xf32>
    %40 = arith.divf %38, %39 : vector<16x1xf32>
    %41 = vector.broadcast %40 : vector<16x1xf32> to vector<16x32xf32>
    %42 = arith.subf %25, %41 : vector<16x32xf32>
    %43 = arith.mulf %42, %42 : vector<16x32xf32>
    %cst_19 = arith.constant dense<0.000000e+00> : vector<16xf32>
    %44 = vector.multi_reduction <add>, %43, %cst_19 [1] : vector<16x32xf32> to vector<16xf32>
    %45 = vector.shape_cast %44 : vector<16xf32> to vector<16x1xf32>
    %cst_20 = arith.constant 3.200000e+01 : f32
    %46 = vector.broadcast %cst_20 : f32 to vector<16x1xf32>
    %47 = arith.divf %45, %46 : vector<16x1xf32>
    %cst_21 = arith.constant 9.99999974E-6 : f32
    %48 = vector.broadcast %cst_21 : f32 to vector<16x1xf32>
    %49 = arith.addf %47, %48 : vector<16x1xf32>
    %50 = math.rsqrt %49 : vector<16x1xf32>
    %51 = vector.broadcast %50 : vector<16x1xf32> to vector<16x32xf32>
    %52 = arith.mulf %42, %51 : vector<16x32xf32>
    %53 = vector.broadcast %35 : vector<1x32xf32> to vector<16x32xf32>
    %54 = arith.mulf %52, %53 : vector<16x32xf32>
    %55 = vector.broadcast %36 : vector<1x32xf32> to vector<16x32xf32>
    %56 = arith.addf %54, %55 : vector<16x32xf32>
    %57 = arith.truncf %56 : vector<16x32xf32> to vector<16x32xbf16>
    %c0_22 = arith.constant 0 : index
    %c0_23 = arith.constant 0 : index
    %c0_24 = arith.constant 0 : index
    %58 = vector.load %arg5[%c0_22, %c0_23, %c0_24] : memref<2x32x96xbf16, #tpu.memory_space<vmem>>, vector<1x32x96xbf16>
    %59 = vector.shape_cast %58 : vector<1x32x96xbf16> to vector<32x96xbf16>
    %cst_25 = arith.constant dense<0.000000e+00> : vector<16x96xf32>
    %60 = tpu.matmul %57, %59, %cst_25 {dimension_numbers = #tpu.dot_dimension_numbers<[1], [0], [0], [1], [0, 0, 1, 1], [], []>} : vector<16x32xbf16>, vector<32x96xbf16>, vector<16x96xf32> -> vector<16x96xf32>
    %cst_26 = arith.constant 3.100000e+01 : f32
    %61 = vector.broadcast %cst_26 : f32 to vector<16x96xf32>
    %62 = arith.mulf %61, %60 : vector<16x96xf32>
    %cst_27 = arith.constant 4.000000e+00 : f32
    %63 = vector.broadcast %cst_27 : f32 to vector<16x96xf32>
    %64 = arith.addf %62, %63 : vector<16x96xf32>
    %cst_28 = arith.constant 1.250000e-01 : f32
    %65 = vector.broadcast %cst_28 : f32 to vector<16x96xf32>
    %66 = arith.mulf %64, %65 : vector<16x96xf32>
    %67 = math.ceil %66 : vector<16x96xf32>
    %cst_29 = arith.constant 1.000000e+00 : f32
    %68 = vector.broadcast %cst_29 : f32 to vector<16x96xf32>
    %69 = arith.subf %67, %68 : vector<16x96xf32>
    %cst_30 = arith.constant 0.000000e+00 : f32
    %cst_31 = arith.constant 3.100000e+01 : f32
    %70 = vector.broadcast %cst_30 : f32 to vector<16x96xf32>
    %71 = arith.maximumf %70, %69 : vector<16x96xf32>
    %72 = vector.broadcast %cst_31 : f32 to vector<16x96xf32>
    %73 = arith.minimumf %72, %71 : vector<16x96xf32>
    %cst_32 = arith.constant 8.000000e+00 : f32
    %74 = vector.broadcast %cst_32 : f32 to vector<16x96xf32>
    %75 = arith.mulf %74, %73 : vector<16x96xf32>
    %76 = vector.extract_strided_slice %75 {offsets = [0, 0], sizes = [16, 32], strides = [1, 1]} : vector<16x96xf32> to vector<16x32xf32>
    %77 = vector.shape_cast %76 : vector<16x32xf32> to vector<2x8x4x8xf32>
    %78 = tpu.transpose %77, [0, 2, 1, 3] : vector<2x8x4x8xf32> -> vector<2x4x8x8xf32>
    %79 = vector.shape_cast %78 : vector<2x4x8x8xf32> to vector<8x8x8xf32>
    %80 = vector.extract_strided_slice %75 {offsets = [0, 32], sizes = [16, 32], strides = [1, 1]} : vector<16x96xf32> to vector<16x32xf32>
    %81 = vector.shape_cast %80 : vector<16x32xf32> to vector<2x8x4x8xf32>
    %82 = tpu.transpose %81, [0, 2, 1, 3] : vector<2x8x4x8xf32> -> vector<2x4x8x8xf32>
    %83 = vector.shape_cast %82 : vector<2x4x8x8xf32> to vector<8x8x8xf32>
    %84 = vector.extract_strided_slice %75 {offsets = [0, 64], sizes = [16, 32], strides = [1, 1]} : vector<16x96xf32> to vector<16x32xf32>
    %85 = vector.shape_cast %84 : vector<16x32xf32> to vector<2x8x4x8xf32>
    %86 = tpu.transpose %85, [0, 2, 1, 3] : vector<2x8x4x8xf32> -> vector<2x4x8x8xf32>
    %87 = vector.shape_cast %86 : vector<2x4x8x8xf32> to vector<8x8x8xf32>
    %88 = arith.truncf %79 : vector<8x8x8xf32> to vector<8x8x8xbf16>
    %89 = arith.truncf %83 : vector<8x8x8xf32> to vector<8x8x8xbf16>
    "tpu.trace_start"() <{level = 10 : i32, message = "bqd,bkd->bqk"}> : () -> ()
    %cst_33 = arith.constant dense<0.000000e+00> : vector<8x8x8xf32>
    %90 = tpu.matmul %88, %89, %cst_33 {dimension_numbers = #tpu.dot_dimension_numbers<[2], [2], [1], [1], [0, 0, 0, 1, 1, 1], [0], [0]>} : vector<8x8x8xbf16>, vector<8x8x8xbf16>, vector<8x8x8xf32> -> vector<8x8x8xf32>
    "tpu.trace_stop"() : () -> ()
    %cst_34 = arith.constant 1.83950775E-4 : f32
    %91 = vector.broadcast %cst_34 : f32 to vector<8x8x8xf32>
    %92 = arith.mulf %90, %91 : vector<8x8x8xf32>
    %93 = vector.broadcast %32 : vector<1x8x8xf32> to vector<8x8x8xf32>
    %94 = arith.addf %92, %93 : vector<8x8x8xf32>
    %cst_35 = arith.constant dense<0xFF800000> : vector<8x8xf32>
    %95 = vector.multi_reduction <maximumf>, %94, %cst_35 [2] : vector<8x8x8xf32> to vector<8x8xf32>
    %96 = vector.shape_cast %95 : vector<8x8xf32> to vector<8x8x1xf32>
    %97 = vector.broadcast %96 : vector<8x8x1xf32> to vector<8x8x8xf32>
    %98 = arith.subf %94, %97 : vector<8x8x8xf32>
    %99 = math.exp %98 : vector<8x8x8xf32>
    %cst_36 = arith.constant dense<0.000000e+00> : vector<8x8xf32>
    %100 = vector.multi_reduction <add>, %99, %cst_36 [2] : vector<8x8x8xf32> to vector<8x8xf32>
    %101 = vector.shape_cast %100 : vector<8x8xf32> to vector<8x8x1xf32>
    %102 = vector.broadcast %101 : vector<8x8x1xf32> to vector<8x8x8xf32>
    %103 = arith.divf %99, %102 : vector<8x8x8xf32>
    %cst_37 = arith.constant 0.000000e+00 : f32
    %cst_38 = arith.constant 8.000000e+00 : f32
    %104 = vector.broadcast %cst_37 : f32 to vector<8x8x8xf32>
    %105 = arith.maximumf %104, %103 : vector<8x8x8xf32>
    %106 = vector.broadcast %cst_38 : f32 to vector<8x8x8xf32>
    %107 = arith.minimumf %106, %105 : vector<8x8x8xf32>
    %108 = arith.truncf %107 : vector<8x8x8xf32> to vector<8x8x8xbf16>
    %109 = arith.truncf %87 : vector<8x8x8xf32> to vector<8x8x8xbf16>
    "tpu.trace_start"() <{level = 10 : i32, message = "bqk,bkd->bqd"}> : () -> ()
    %cst_39 = arith.constant dense<0.000000e+00> : vector<8x8x8xf32>
    %110 = tpu.matmul %108, %109, %cst_39 {dimension_numbers = #tpu.dot_dimension_numbers<[2], [1], [1], [2], [0, 0, 0, 1, 1, 2], [0], [0]>} : vector<8x8x8xbf16>, vector<8x8x8xbf16>, vector<8x8x8xf32> -> vector<8x8x8xf32>
    "tpu.trace_stop"() : () -> ()
    %111 = vector.shape_cast %110 : vector<8x8x8xf32> to vector<2x4x8x8xf32>
    %112 = tpu.transpose %111, [0, 2, 1, 3] : vector<2x4x8x8xf32> -> vector<2x8x4x8xf32>
    %113 = vector.shape_cast %112 : vector<2x8x4x8xf32> to vector<16x32xf32>
    %cst_40 = arith.constant 4.000000e+00 : f32
    %114 = vector.broadcast %cst_40 : f32 to vector<16x32xf32>
    %115 = arith.addf %113, %114 : vector<16x32xf32>
    %cst_41 = arith.constant 1.250000e-01 : f32
    %116 = vector.broadcast %cst_41 : f32 to vector<16x32xf32>
    %117 = arith.mulf %115, %116 : vector<16x32xf32>
    %118 = math.ceil %117 : vector<16x32xf32>
    %cst_42 = arith.constant 1.000000e+00 : f32
    %119 = vector.broadcast %cst_42 : f32 to vector<16x32xf32>
    %120 = arith.subf %118, %119 : vector<16x32xf32>
    %cst_43 = arith.constant 0.000000e+00 : f32
    %cst_44 = arith.constant 3.100000e+01 : f32
    %121 = vector.broadcast %cst_43 : f32 to vector<16x32xf32>
    %122 = arith.maximumf %121, %120 : vector<16x32xf32>
    %123 = vector.broadcast %cst_44 : f32 to vector<16x32xf32>
    %124 = arith.minimumf %123, %122 : vector<16x32xf32>
    %cst_45 = arith.constant 8.000000e+00 : f32
    %125 = vector.broadcast %cst_45 : f32 to vector<16x32xf32>
    %126 = arith.mulf %125, %124 : vector<16x32xf32>
    %127 = arith.truncf %126 : vector<16x32xf32> to vector<16x32xbf16>
    %c0_46 = arith.constant 0 : index
    %c0_47 = arith.constant 0 : index
    %c0_48 = arith.constant 0 : index
    %128 = vector.load %arg6[%c0_46, %c0_47, %c0_48] : memref<2x32x32xbf16, #tpu.memory_space<vmem>>, vector<1x32x32xbf16>
    %129 = vector.shape_cast %128 : vector<1x32x32xbf16> to vector<32x32xbf16>
    %cst_49 = arith.constant dense<0.000000e+00> : vector<16x32xf32>
    %130 = tpu.matmul %127, %129, %cst_49 {dimension_numbers = #tpu.dot_dimension_numbers<[1], [0], [0], [1], [0, 0, 1, 1], [], []>} : vector<16x32xbf16>, vector<32x32xbf16>, vector<16x32xf32> -> vector<16x32xf32>
    %cst_50 = arith.constant 4.000000e+00 : f32
    %131 = vector.broadcast %cst_50 : f32 to vector<16x32xf32>
    %132 = arith.addf %130, %131 : vector<16x32xf32>
    %cst_51 = arith.constant 1.250000e-01 : f32
    %133 = vector.broadcast %cst_51 : f32 to vector<16x32xf32>
    %134 = arith.mulf %132, %133 : vector<16x32xf32>
    %135 = math.ceil %134 : vector<16x32xf32>
    %cst_52 = arith.constant 1.000000e+00 : f32
    %136 = vector.broadcast %cst_52 : f32 to vector<16x32xf32>
    %137 = arith.subf %135, %136 : vector<16x32xf32>
    %cst_53 = arith.constant 0.000000e+00 : f32
    %cst_54 = arith.constant 3.100000e+01 : f32
    %138 = vector.broadcast %cst_53 : f32 to vector<16x32xf32>
    %139 = arith.maximumf %138, %137 : vector<16x32xf32>
    %140 = vector.broadcast %cst_54 : f32 to vector<16x32xf32>
    %141 = arith.minimumf %140, %139 : vector<16x32xf32>
    %cst_55 = arith.constant 0.258064508 : f32
    %142 = vector.broadcast %cst_55 : f32 to vector<16x32xf32>
    %143 = arith.mulf %142, %141 : vector<16x32xf32>
    %144 = arith.addf %25, %143 : vector<16x32xf32>
    %145 = vector.extract_strided_slice %34 {offsets = [2, 0], sizes = [1, 32], strides = [1, 1]} : vector<4x32xf32> to vector<1x32xf32>
    %146 = vector.extract_strided_slice %34 {offsets = [3, 0], sizes = [1, 32], strides = [1, 1]} : vector<4x32xf32> to vector<1x32xf32>
    %cst_56 = arith.constant dense<0.000000e+00> : vector<16xf32>
    %147 = vector.multi_reduction <add>, %25, %cst_56 [1] : vector<16x32xf32> to vector<16xf32>
    %148 = vector.shape_cast %147 : vector<16xf32> to vector<16x1xf32>
    %cst_57 = arith.constant 3.200000e+01 : f32
    %149 = vector.broadcast %cst_57 : f32 to vector<16x1xf32>
    %150 = arith.divf %148, %149 : vector<16x1xf32>
    %151 = vector.broadcast %150 : vector<16x1xf32> to vector<16x32xf32>
    %152 = arith.subf %25, %151 : vector<16x32xf32>
    %153 = arith.mulf %152, %152 : vector<16x32xf32>
    %cst_58 = arith.constant dense<0.000000e+00> : vector<16xf32>
    %154 = vector.multi_reduction <add>, %153, %cst_58 [1] : vector<16x32xf32> to vector<16xf32>
    %155 = vector.shape_cast %154 : vector<16xf32> to vector<16x1xf32>
    %cst_59 = arith.constant 3.200000e+01 : f32
    %156 = vector.broadcast %cst_59 : f32 to vector<16x1xf32>
    %157 = arith.divf %155, %156 : vector<16x1xf32>
    %cst_60 = arith.constant 9.99999974E-6 : f32
    %158 = vector.broadcast %cst_60 : f32 to vector<16x1xf32>
    %159 = arith.addf %157, %158 : vector<16x1xf32>
    %160 = math.rsqrt %159 : vector<16x1xf32>
    %161 = vector.broadcast %160 : vector<16x1xf32> to vector<16x32xf32>
    %162 = arith.mulf %152, %161 : vector<16x32xf32>
    %163 = vector.broadcast %145 : vector<1x32xf32> to vector<16x32xf32>
    %164 = arith.mulf %162, %163 : vector<16x32xf32>
    %165 = vector.broadcast %146 : vector<1x32xf32> to vector<16x32xf32>
    %166 = arith.addf %164, %165 : vector<16x32xf32>
    %167 = arith.truncf %166 : vector<16x32xf32> to vector<16x32xbf16>
    %c0_61 = arith.constant 0 : index
    %c0_62 = arith.constant 0 : index
    %c0_63 = arith.constant 0 : index
    %168 = vector.load %arg7[%c0_61, %c0_62, %c0_63] : memref<2x32x64xbf16, #tpu.memory_space<vmem>>, vector<1x32x64xbf16>
    %169 = vector.shape_cast %168 : vector<1x32x64xbf16> to vector<32x64xbf16>
    %cst_64 = arith.constant dense<0.000000e+00> : vector<16x64xf32>
    %170 = tpu.matmul %167, %169, %cst_64 {dimension_numbers = #tpu.dot_dimension_numbers<[1], [0], [0], [1], [0, 0, 1, 1], [], []>} : vector<16x32xbf16>, vector<32x64xbf16>, vector<16x64xf32> -> vector<16x64xf32>
    %cst_65 = arith.constant 3.100000e+01 : f32
    %171 = vector.broadcast %cst_65 : f32 to vector<16x64xf32>
    %172 = arith.mulf %171, %170 : vector<16x64xf32>
    %cst_66 = arith.constant 4.000000e+00 : f32
    %173 = vector.broadcast %cst_66 : f32 to vector<16x64xf32>
    %174 = arith.addf %172, %173 : vector<16x64xf32>
    %cst_67 = arith.constant 1.250000e-01 : f32
    %175 = vector.broadcast %cst_67 : f32 to vector<16x64xf32>
    %176 = arith.mulf %174, %175 : vector<16x64xf32>
    %177 = math.ceil %176 : vector<16x64xf32>
    %cst_68 = arith.constant 1.000000e+00 : f32
    %178 = vector.broadcast %cst_68 : f32 to vector<16x64xf32>
    %179 = arith.subf %177, %178 : vector<16x64xf32>
    %cst_69 = arith.constant 0.000000e+00 : f32
    %cst_70 = arith.constant 3.100000e+01 : f32
    %180 = vector.broadcast %cst_69 : f32 to vector<16x64xf32>
    %181 = arith.maximumf %180, %179 : vector<16x64xf32>
    %182 = vector.broadcast %cst_70 : f32 to vector<16x64xf32>
    %183 = arith.minimumf %182, %181 : vector<16x64xf32>
    %cst_71 = arith.constant 8.000000e+00 : f32
    %184 = vector.broadcast %cst_71 : f32 to vector<16x64xf32>
    %185 = arith.mulf %184, %183 : vector<16x64xf32>
    %186 = arith.truncf %185 : vector<16x64xf32> to vector<16x64xbf16>
    %c0_72 = arith.constant 0 : index
    %c0_73 = arith.constant 0 : index
    %c0_74 = arith.constant 0 : index
    %187 = vector.load %arg8[%c0_72, %c0_73, %c0_74] : memref<2x64x32xbf16, #tpu.memory_space<vmem>>, vector<1x64x32xbf16>
    %188 = vector.shape_cast %187 : vector<1x64x32xbf16> to vector<64x32xbf16>
    %cst_75 = arith.constant dense<0.000000e+00> : vector<16x32xf32>
    %189 = tpu.matmul %186, %188, %cst_75 {dimension_numbers = #tpu.dot_dimension_numbers<[1], [0], [0], [1], [0, 0, 1, 1], [], []>} : vector<16x64xbf16>, vector<64x32xbf16>, vector<16x32xf32> -> vector<16x32xf32>
    %cst_76 = arith.constant 4.000000e+00 : f32
    %190 = vector.broadcast %cst_76 : f32 to vector<16x32xf32>
    %191 = arith.addf %189, %190 : vector<16x32xf32>
    %cst_77 = arith.constant 1.250000e-01 : f32
    %192 = vector.broadcast %cst_77 : f32 to vector<16x32xf32>
    %193 = arith.mulf %191, %192 : vector<16x32xf32>
    %194 = math.ceil %193 : vector<16x32xf32>
    %cst_78 = arith.constant 1.000000e+00 : f32
    %195 = vector.broadcast %cst_78 : f32 to vector<16x32xf32>
    %196 = arith.subf %194, %195 : vector<16x32xf32>
    %cst_79 = arith.constant 0.000000e+00 : f32
    %cst_80 = arith.constant 3.100000e+01 : f32
    %197 = vector.broadcast %cst_79 : f32 to vector<16x32xf32>
    %198 = arith.maximumf %197, %196 : vector<16x32xf32>
    %199 = vector.broadcast %cst_80 : f32 to vector<16x32xf32>
    %200 = arith.minimumf %199, %198 : vector<16x32xf32>
    %cst_81 = arith.constant 0.258064508 : f32
    %201 = vector.broadcast %cst_81 : f32 to vector<16x32xf32>
    %202 = arith.mulf %201, %200 : vector<16x32xf32>
    %203 = arith.addf %144, %202 : vector<16x32xf32>
    %c1 = arith.constant 1 : index
    %c0_82 = arith.constant 0 : index
    %c0_83 = arith.constant 0 : index
    %204 = vector.load %arg4[%c1, %c0_82, %c0_83] : memref<2x4x32xf32, #tpu.memory_space<vmem>>, vector<1x4x32xf32>
    %205 = vector.shape_cast %204 : vector<1x4x32xf32> to vector<4x32xf32>
    %206 = vector.extract_strided_slice %205 {offsets = [0, 0], sizes = [1, 32], strides = [1, 1]} : vector<4x32xf32> to vector<1x32xf32>
    %207 = vector.extract_strided_slice %205 {offsets = [1, 0], sizes = [1, 32], strides = [1, 1]} : vector<4x32xf32> to vector<1x32xf32>
    %cst_84 = arith.constant dense<0.000000e+00> : vector<16xf32>
    %208 = vector.multi_reduction <add>, %203, %cst_84 [1] : vector<16x32xf32> to vector<16xf32>
    %209 = vector.shape_cast %208 : vector<16xf32> to vector<16x1xf32>
    %cst_85 = arith.constant 3.200000e+01 : f32
    %210 = vector.broadcast %cst_85 : f32 to vector<16x1xf32>
    %211 = arith.divf %209, %210 : vector<16x1xf32>
    %212 = vector.broadcast %211 : vector<16x1xf32> to vector<16x32xf32>
    %213 = arith.subf %203, %212 : vector<16x32xf32>
    %214 = arith.mulf %213, %213 : vector<16x32xf32>
    %cst_86 = arith.constant dense<0.000000e+00> : vector<16xf32>
    %215 = vector.multi_reduction <add>, %214, %cst_86 [1] : vector<16x32xf32> to vector<16xf32>
    %216 = vector.shape_cast %215 : vector<16xf32> to vector<16x1xf32>
    %cst_87 = arith.constant 3.200000e+01 : f32
    %217 = vector.broadcast %cst_87 : f32 to vector<16x1xf32>
    %218 = arith.divf %216, %217 : vector<16x1xf32>
    %cst_88 = arith.constant 9.99999974E-6 : f32
    %219 = vector.broadcast %cst_88 : f32 to vector<16x1xf32>
    %220 = arith.addf %218, %219 : vector<16x1xf32>
    %221 = math.rsqrt %220 : vector<16x1xf32>
    %222 = vector.broadcast %221 : vector<16x1xf32> to vector<16x32xf32>
    %223 = arith.mulf %213, %222 : vector<16x32xf32>
    %224 = vector.broadcast %206 : vector<1x32xf32> to vector<16x32xf32>
    %225 = arith.mulf %223, %224 : vector<16x32xf32>
    %226 = vector.broadcast %207 : vector<1x32xf32> to vector<16x32xf32>
    %227 = arith.addf %225, %226 : vector<16x32xf32>
    %228 = arith.truncf %227 : vector<16x32xf32> to vector<16x32xbf16>
    %c1_89 = arith.constant 1 : index
    %c0_90 = arith.constant 0 : index
    %c0_91 = arith.constant 0 : index
    %229 = vector.load %arg5[%c1_89, %c0_90, %c0_91] : memref<2x32x96xbf16, #tpu.memory_space<vmem>>, vector<1x32x96xbf16>
    %230 = vector.shape_cast %229 : vector<1x32x96xbf16> to vector<32x96xbf16>
    %cst_92 = arith.constant dense<0.000000e+00> : vector<16x96xf32>
    %231 = tpu.matmul %228, %230, %cst_92 {dimension_numbers = #tpu.dot_dimension_numbers<[1], [0], [0], [1], [0, 0, 1, 1], [], []>} : vector<16x32xbf16>, vector<32x96xbf16>, vector<16x96xf32> -> vector<16x96xf32>
    %cst_93 = arith.constant 3.100000e+01 : f32
    %232 = vector.broadcast %cst_93 : f32 to vector<16x96xf32>
    %233 = arith.mulf %232, %231 : vector<16x96xf32>
    %cst_94 = arith.constant 4.000000e+00 : f32
    %234 = vector.broadcast %cst_94 : f32 to vector<16x96xf32>
    %235 = arith.addf %233, %234 : vector<16x96xf32>
    %cst_95 = arith.constant 1.250000e-01 : f32
    %236 = vector.broadcast %cst_95 : f32 to vector<16x96xf32>
    %237 = arith.mulf %235, %236 : vector<16x96xf32>
    %238 = math.ceil %237 : vector<16x96xf32>
    %cst_96 = arith.constant 1.000000e+00 : f32
    %239 = vector.broadcast %cst_96 : f32 to vector<16x96xf32>
    %240 = arith.subf %238, %239 : vector<16x96xf32>
    %cst_97 = arith.constant 0.000000e+00 : f32
    %cst_98 = arith.constant 3.100000e+01 : f32
    %241 = vector.broadcast %cst_97 : f32 to vector<16x96xf32>
    %242 = arith.maximumf %241, %240 : vector<16x96xf32>
    %243 = vector.broadcast %cst_98 : f32 to vector<16x96xf32>
    %244 = arith.minimumf %243, %242 : vector<16x96xf32>
    %cst_99 = arith.constant 8.000000e+00 : f32
    %245 = vector.broadcast %cst_99 : f32 to vector<16x96xf32>
    %246 = arith.mulf %245, %244 : vector<16x96xf32>
    %247 = vector.extract_strided_slice %246 {offsets = [0, 0], sizes = [16, 32], strides = [1, 1]} : vector<16x96xf32> to vector<16x32xf32>
    %248 = vector.shape_cast %247 : vector<16x32xf32> to vector<2x8x4x8xf32>
    %249 = tpu.transpose %248, [0, 2, 1, 3] : vector<2x8x4x8xf32> -> vector<2x4x8x8xf32>
    %250 = vector.shape_cast %249 : vector<2x4x8x8xf32> to vector<8x8x8xf32>
    %251 = vector.extract_strided_slice %246 {offsets = [0, 32], sizes = [16, 32], strides = [1, 1]} : vector<16x96xf32> to vector<16x32xf32>
    %252 = vector.shape_cast %251 : vector<16x32xf32> to vector<2x8x4x8xf32>
    %253 = tpu.transpose %252, [0, 2, 1, 3] : vector<2x8x4x8xf32> -> vector<2x4x8x8xf32>
    %254 = vector.shape_cast %253 : vector<2x4x8x8xf32> to vector<8x8x8xf32>
    %255 = vector.extract_strided_slice %246 {offsets = [0, 64], sizes = [16, 32], strides = [1, 1]} : vector<16x96xf32> to vector<16x32xf32>
    %256 = vector.shape_cast %255 : vector<16x32xf32> to vector<2x8x4x8xf32>
    %257 = tpu.transpose %256, [0, 2, 1, 3] : vector<2x8x4x8xf32> -> vector<2x4x8x8xf32>
    %258 = vector.shape_cast %257 : vector<2x4x8x8xf32> to vector<8x8x8xf32>
    %259 = arith.truncf %250 : vector<8x8x8xf32> to vector<8x8x8xbf16>
    %260 = arith.truncf %254 : vector<8x8x8xf32> to vector<8x8x8xbf16>
    "tpu.trace_start"() <{level = 10 : i32, message = "bqd,bkd->bqk"}> : () -> ()
    %cst_100 = arith.constant dense<0.000000e+00> : vector<8x8x8xf32>
    %261 = tpu.matmul %259, %260, %cst_100 {dimension_numbers = #tpu.dot_dimension_numbers<[2], [2], [1], [1], [0, 0, 0, 1, 1, 1], [0], [0]>} : vector<8x8x8xbf16>, vector<8x8x8xbf16>, vector<8x8x8xf32> -> vector<8x8x8xf32>
    "tpu.trace_stop"() : () -> ()
    %cst_101 = arith.constant 1.83950775E-4 : f32
    %262 = vector.broadcast %cst_101 : f32 to vector<8x8x8xf32>
    %263 = arith.mulf %261, %262 : vector<8x8x8xf32>
    %264 = vector.broadcast %32 : vector<1x8x8xf32> to vector<8x8x8xf32>
    %265 = arith.addf %263, %264 : vector<8x8x8xf32>
    %cst_102 = arith.constant dense<0xFF800000> : vector<8x8xf32>
    %266 = vector.multi_reduction <maximumf>, %265, %cst_102 [2] : vector<8x8x8xf32> to vector<8x8xf32>
    %267 = vector.shape_cast %266 : vector<8x8xf32> to vector<8x8x1xf32>
    %268 = vector.broadcast %267 : vector<8x8x1xf32> to vector<8x8x8xf32>
    %269 = arith.subf %265, %268 : vector<8x8x8xf32>
    %270 = math.exp %269 : vector<8x8x8xf32>
    %cst_103 = arith.constant dense<0.000000e+00> : vector<8x8xf32>
    %271 = vector.multi_reduction <add>, %270, %cst_103 [2] : vector<8x8x8xf32> to vector<8x8xf32>
    %272 = vector.shape_cast %271 : vector<8x8xf32> to vector<8x8x1xf32>
    %273 = vector.broadcast %272 : vector<8x8x1xf32> to vector<8x8x8xf32>
    %274 = arith.divf %270, %273 : vector<8x8x8xf32>
    %cst_104 = arith.constant 0.000000e+00 : f32
    %cst_105 = arith.constant 8.000000e+00 : f32
    %275 = vector.broadcast %cst_104 : f32 to vector<8x8x8xf32>
    %276 = arith.maximumf %275, %274 : vector<8x8x8xf32>
    %277 = vector.broadcast %cst_105 : f32 to vector<8x8x8xf32>
    %278 = arith.minimumf %277, %276 : vector<8x8x8xf32>
    %279 = arith.truncf %278 : vector<8x8x8xf32> to vector<8x8x8xbf16>
    %280 = arith.truncf %258 : vector<8x8x8xf32> to vector<8x8x8xbf16>
    "tpu.trace_start"() <{level = 10 : i32, message = "bqk,bkd->bqd"}> : () -> ()
    %cst_106 = arith.constant dense<0.000000e+00> : vector<8x8x8xf32>
    %281 = tpu.matmul %279, %280, %cst_106 {dimension_numbers = #tpu.dot_dimension_numbers<[2], [1], [1], [2], [0, 0, 0, 1, 1, 2], [0], [0]>} : vector<8x8x8xbf16>, vector<8x8x8xbf16>, vector<8x8x8xf32> -> vector<8x8x8xf32>
    "tpu.trace_stop"() : () -> ()
    %282 = vector.shape_cast %281 : vector<8x8x8xf32> to vector<2x4x8x8xf32>
    %283 = tpu.transpose %282, [0, 2, 1, 3] : vector<2x4x8x8xf32> -> vector<2x8x4x8xf32>
    %284 = vector.shape_cast %283 : vector<2x8x4x8xf32> to vector<16x32xf32>
    %cst_107 = arith.constant 4.000000e+00 : f32
    %285 = vector.broadcast %cst_107 : f32 to vector<16x32xf32>
    %286 = arith.addf %284, %285 : vector<16x32xf32>
    %cst_108 = arith.constant 1.250000e-01 : f32
    %287 = vector.broadcast %cst_108 : f32 to vector<16x32xf32>
    %288 = arith.mulf %286, %287 : vector<16x32xf32>
    %289 = math.ceil %288 : vector<16x32xf32>
    %cst_109 = arith.constant 1.000000e+00 : f32
    %290 = vector.broadcast %cst_109 : f32 to vector<16x32xf32>
    %291 = arith.subf %289, %290 : vector<16x32xf32>
    %cst_110 = arith.constant 0.000000e+00 : f32
    %cst_111 = arith.constant 3.100000e+01 : f32
    %292 = vector.broadcast %cst_110 : f32 to vector<16x32xf32>
    %293 = arith.maximumf %292, %291 : vector<16x32xf32>
    %294 = vector.broadcast %cst_111 : f32 to vector<16x32xf32>
    %295 = arith.minimumf %294, %293 : vector<16x32xf32>
    %cst_112 = arith.constant 8.000000e+00 : f32
    %296 = vector.broadcast %cst_112 : f32 to vector<16x32xf32>
    %297 = arith.mulf %296, %295 : vector<16x32xf32>
    %298 = arith.truncf %297 : vector<16x32xf32> to vector<16x32xbf16>
    %c1_113 = arith.constant 1 : index
    %c0_114 = arith.constant 0 : index
    %c0_115 = arith.constant 0 : index
    %299 = vector.load %arg6[%c1_113, %c0_114, %c0_115] : memref<2x32x32xbf16, #tpu.memory_space<vmem>>, vector<1x32x32xbf16>
    %300 = vector.shape_cast %299 : vector<1x32x32xbf16> to vector<32x32xbf16>
    %cst_116 = arith.constant dense<0.000000e+00> : vector<16x32xf32>
    %301 = tpu.matmul %298, %300, %cst_116 {dimension_numbers = #tpu.dot_dimension_numbers<[1], [0], [0], [1], [0, 0, 1, 1], [], []>} : vector<16x32xbf16>, vector<32x32xbf16>, vector<16x32xf32> -> vector<16x32xf32>
    %cst_117 = arith.constant 4.000000e+00 : f32
    %302 = vector.broadcast %cst_117 : f32 to vector<16x32xf32>
    %303 = arith.addf %301, %302 : vector<16x32xf32>
    %cst_118 = arith.constant 1.250000e-01 : f32
    %304 = vector.broadcast %cst_118 : f32 to vector<16x32xf32>
    %305 = arith.mulf %303, %304 : vector<16x32xf32>
    %306 = math.ceil %305 : vector<16x32xf32>
    %cst_119 = arith.constant 1.000000e+00 : f32
    %307 = vector.broadcast %cst_119 : f32 to vector<16x32xf32>
    %308 = arith.subf %306, %307 : vector<16x32xf32>
    %cst_120 = arith.constant 0.000000e+00 : f32
    %cst_121 = arith.constant 3.100000e+01 : f32
    %309 = vector.broadcast %cst_120 : f32 to vector<16x32xf32>
    %310 = arith.maximumf %309, %308 : vector<16x32xf32>
    %311 = vector.broadcast %cst_121 : f32 to vector<16x32xf32>
    %312 = arith.minimumf %311, %310 : vector<16x32xf32>
    %cst_122 = arith.constant 0.258064508 : f32
    %313 = vector.broadcast %cst_122 : f32 to vector<16x32xf32>
    %314 = arith.mulf %313, %312 : vector<16x32xf32>
    %315 = arith.addf %203, %314 : vector<16x32xf32>
    %316 = vector.extract_strided_slice %205 {offsets = [2, 0], sizes = [1, 32], strides = [1, 1]} : vector<4x32xf32> to vector<1x32xf32>
    %317 = vector.extract_strided_slice %205 {offsets = [3, 0], sizes = [1, 32], strides = [1, 1]} : vector<4x32xf32> to vector<1x32xf32>
    %cst_123 = arith.constant dense<0.000000e+00> : vector<16xf32>
    %318 = vector.multi_reduction <add>, %203, %cst_123 [1] : vector<16x32xf32> to vector<16xf32>
    %319 = vector.shape_cast %318 : vector<16xf32> to vector<16x1xf32>
    %cst_124 = arith.constant 3.200000e+01 : f32
    %320 = vector.broadcast %cst_124 : f32 to vector<16x1xf32>
    %321 = arith.divf %319, %320 : vector<16x1xf32>
    %322 = vector.broadcast %321 : vector<16x1xf32> to vector<16x32xf32>
    %323 = arith.subf %203, %322 : vector<16x32xf32>
    %324 = arith.mulf %323, %323 : vector<16x32xf32>
    %cst_125 = arith.constant dense<0.000000e+00> : vector<16xf32>
    %325 = vector.multi_reduction <add>, %324, %cst_125 [1] : vector<16x32xf32> to vector<16xf32>
    %326 = vector.shape_cast %325 : vector<16xf32> to vector<16x1xf32>
    %cst_126 = arith.constant 3.200000e+01 : f32
    %327 = vector.broadcast %cst_126 : f32 to vector<16x1xf32>
    %328 = arith.divf %326, %327 : vector<16x1xf32>
    %cst_127 = arith.constant 9.99999974E-6 : f32
    %329 = vector.broadcast %cst_127 : f32 to vector<16x1xf32>
    %330 = arith.addf %328, %329 : vector<16x1xf32>
    %331 = math.rsqrt %330 : vector<16x1xf32>
    %332 = vector.broadcast %331 : vector<16x1xf32> to vector<16x32xf32>
    %333 = arith.mulf %323, %332 : vector<16x32xf32>
    %334 = vector.broadcast %316 : vector<1x32xf32> to vector<16x32xf32>
    %335 = arith.mulf %333, %334 : vector<16x32xf32>
    %336 = vector.broadcast %317 : vector<1x32xf32> to vector<16x32xf32>
    %337 = arith.addf %335, %336 : vector<16x32xf32>
    %338 = arith.truncf %337 : vector<16x32xf32> to vector<16x32xbf16>
    %c1_128 = arith.constant 1 : index
    %c0_129 = arith.constant 0 : index
    %c0_130 = arith.constant 0 : index
    %339 = vector.load %arg7[%c1_128, %c0_129, %c0_130] : memref<2x32x64xbf16, #tpu.memory_space<vmem>>, vector<1x32x64xbf16>
    %340 = vector.shape_cast %339 : vector<1x32x64xbf16> to vector<32x64xbf16>
    %cst_131 = arith.constant dense<0.000000e+00> : vector<16x64xf32>
    %341 = tpu.matmul %338, %340, %cst_131 {dimension_numbers = #tpu.dot_dimension_numbers<[1], [0], [0], [1], [0, 0, 1, 1], [], []>} : vector<16x32xbf16>, vector<32x64xbf16>, vector<16x64xf32> -> vector<16x64xf32>
    %cst_132 = arith.constant 3.100000e+01 : f32
    %342 = vector.broadcast %cst_132 : f32 to vector<16x64xf32>
    %343 = arith.mulf %342, %341 : vector<16x64xf32>
    %cst_133 = arith.constant 4.000000e+00 : f32
    %344 = vector.broadcast %cst_133 : f32 to vector<16x64xf32>
    %345 = arith.addf %343, %344 : vector<16x64xf32>
    %cst_134 = arith.constant 1.250000e-01 : f32
    %346 = vector.broadcast %cst_134 : f32 to vector<16x64xf32>
    %347 = arith.mulf %345, %346 : vector<16x64xf32>
    %348 = math.ceil %347 : vector<16x64xf32>
    %cst_135 = arith.constant 1.000000e+00 : f32
    %349 = vector.broadcast %cst_135 : f32 to vector<16x64xf32>
    %350 = arith.subf %348, %349 : vector<16x64xf32>
    %cst_136 = arith.constant 0.000000e+00 : f32
    %cst_137 = arith.constant 3.100000e+01 : f32
    %351 = vector.broadcast %cst_136 : f32 to vector<16x64xf32>
    %352 = arith.maximumf %351, %350 : vector<16x64xf32>
    %353 = vector.broadcast %cst_137 : f32 to vector<16x64xf32>
    %354 = arith.minimumf %353, %352 : vector<16x64xf32>
    %cst_138 = arith.constant 8.000000e+00 : f32
    %355 = vector.broadcast %cst_138 : f32 to vector<16x64xf32>
    %356 = arith.mulf %355, %354 : vector<16x64xf32>
    %357 = arith.truncf %356 : vector<16x64xf32> to vector<16x64xbf16>
    %c1_139 = arith.constant 1 : index
    %c0_140 = arith.constant 0 : index
    %c0_141 = arith.constant 0 : index
    %358 = vector.load %arg8[%c1_139, %c0_140, %c0_141] : memref<2x64x32xbf16, #tpu.memory_space<vmem>>, vector<1x64x32xbf16>
    %359 = vector.shape_cast %358 : vector<1x64x32xbf16> to vector<64x32xbf16>
    %cst_142 = arith.constant dense<0.000000e+00> : vector<16x32xf32>
    %360 = tpu.matmul %357, %359, %cst_142 {dimension_numbers = #tpu.dot_dimension_numbers<[1], [0], [0], [1], [0, 0, 1, 1], [], []>} : vector<16x64xbf16>, vector<64x32xbf16>, vector<16x32xf32> -> vector<16x32xf32>
    %cst_143 = arith.constant 4.000000e+00 : f32
    %361 = vector.broadcast %cst_143 : f32 to vector<16x32xf32>
    %362 = arith.addf %360, %361 : vector<16x32xf32>
    %cst_144 = arith.constant 1.250000e-01 : f32
    %363 = vector.broadcast %cst_144 : f32 to vector<16x32xf32>
    %364 = arith.mulf %362, %363 : vector<16x32xf32>
    %365 = math.ceil %364 : vector<16x32xf32>
    %cst_145 = arith.constant 1.000000e+00 : f32
    %366 = vector.broadcast %cst_145 : f32 to vector<16x32xf32>
    %367 = arith.subf %365, %366 : vector<16x32xf32>
    %cst_146 = arith.constant 0.000000e+00 : f32
    %cst_147 = arith.constant 3.100000e+01 : f32
    %368 = vector.broadcast %cst_146 : f32 to vector<16x32xf32>
    %369 = arith.maximumf %368, %367 : vector<16x32xf32>
    %370 = vector.broadcast %cst_147 : f32 to vector<16x32xf32>
    %371 = arith.minimumf %370, %369 : vector<16x32xf32>
    %cst_148 = arith.constant 0.258064508 : f32
    %372 = vector.broadcast %cst_148 : f32 to vector<16x32xf32>
    %373 = arith.mulf %372, %371 : vector<16x32xf32>
    %374 = arith.addf %315, %373 : vector<16x32xf32>
    %375 = arith.truncf %374 : vector<16x32xf32> to vector<16x32xbf16>
    %c0_149 = arith.constant 0 : index
    %c0_150 = arith.constant 0 : index
    %376 = vector.load %arg9[%c0_149, %c0_150] : memref<32x64xbf16, #tpu.memory_space<vmem>>, vector<32x64xbf16>
    %cst_151 = arith.constant dense<0.000000e+00> : vector<16x64xf32>
    %377 = tpu.matmul %375, %376, %cst_151 {dimension_numbers = #tpu.dot_dimension_numbers<[1], [0], [0], [1], [0, 0, 1, 1], [], []>} : vector<16x32xbf16>, vector<32x64xbf16>, vector<16x64xf32> -> vector<16x64xf32>
    %c0_152 = arith.constant 0 : index
    %c0_153 = arith.constant 0 : index
    %378 = vector.load %arg10[%c0_152, %c0_153] : memref<16x64xf32, #tpu.memory_space<vmem>>, vector<16x64xf32>
    tpu.vector_store %arg10[%c0_152, %c0_153], %377 {strides = array<i32>} : memref<16x64xf32, #tpu.memory_space<vmem>>, vector<16x64xf32>,
    return
  }
  func.func @transform_0(%arg0: i32) -> (i32, i32) {
    %c0_i32 = arith.constant 0 : i32
    %c0_i32_0 = arith.constant 0 : i32
    %c0_i32_1 = arith.constant 0 : i32
    return %c0_i32, %c0_i32_0 : i32, i32
  }
  func.func @transform_1(%arg0: i32) -> (i32, i32) {
    %c0_i32 = arith.constant 0 : i32
    %c0_i32_0 = arith.constant 0 : i32
    %c0_i32_1 = arith.constant 0 : i32
    return %c0_i32, %c0_i32_0 : i32, i32
  }
  func.func @transform_2(%arg0: i32) -> (i32, i32) {
    %c0_i32 = arith.constant 0 : i32
    %c0_i32_0 = arith.constant 0 : i32
    %c0_i32_1 = arith.constant 0 : i32
    return %c0_i32, %c0_i32_0 : i32, i32
  }
  func.func @transform_3(%arg0: i32) -> (i32, i32, i32) {
    %c0_i32 = arith.constant 0 : i32
    %c0_i32_0 = arith.constant 0 : i32
    %c0_i32_1 = arith.constant 0 : i32
    %c0_i32_2 = arith.constant 0 : i32
    return %c0_i32, %c0_i32_0, %c0_i32_1 : i32, i32, i32
  }
  func.func @transform_4(%arg0: i32) -> (i32, i32, i32) {
    %c0_i32 = arith.constant 0 : i32
    %c0_i32_0 = arith.constant 0 : i32
    %c0_i32_1 = arith.constant 0 : i32
    %c0_i32_2 = arith.constant 0 : i32
    return %c0_i32, %c0_i32_0, %c0_i32_1 : i32, i32, i32
  }
  func.func @transform_5(%arg0: i32) -> (i32, i32, i32) {
    %c0_i32 = arith.constant 0 : i32
    %c0_i32_0 = arith.constant 0 : i32
    %c0_i32_1 = arith.constant 0 : i32
    %c0_i32_2 = arith.constant 0 : i32
    return %c0_i32, %c0_i32_0, %c0_i32_1 : i32, i32, i32
  }
  func.func @transform_6(%arg0: i32) -> (i32, i32, i32) {
    %c0_i32 = arith.constant 0 : i32
    %c0_i32_0 = arith.constant 0 : i32
    %c0_i32_1 = arith.constant 0 : i32
    %c0_i32_2 = arith.constant 0 : i32
    return %c0_i32, %c0_i32_0, %c0_i32_1 : i32, i32, i32
  }
  func.func @transform_7(%arg0: i32) -> (i32, i32, i32) {
    %c0_i32 = arith.constant 0 : i32
    %c0_i32_0 = arith.constant 0 : i32
    %c0_i32_1 = arith.constant 0 : i32
    %c0_i32_2 = arith.constant 0 : i32
    return %c0_i32, %c0_i32_0, %c0_i32_1 : i32, i32, i32
  }
  func.func @transform_8(%arg0: i32) -> (i32, i32) {
    %c0_i32 = arith.constant 0 : i32
    %c0_i32_0 = arith.constant 0 : i32
    %c0_i32_1 = arith.constant 0 : i32
    return %c0_i32, %c0_i32_0 : i32, i32
  }
  func.func @transform_9(%arg0: i32) -> (i32, i32) {
    %c0_i32 = arith.constant 0 : i32
    %c0_i32_0 = arith.constant 0 : i32
    %c0_i32_1 = arith.constant 0 : i32
    return %c0_i32, %c0_i32_0 : i32, i32
  }
}

</mosaic_0001>

<llo_original>
// kernel: tile.1
$region0: #{tile.1}
  #allocation0 [shape = 's32[1]{0}', space=sflag, size = 0x4, scoped, tag = 'scoped memory for tile.1']
  %s0 = inlined_call_operand.<no memory space> [shape: f32[], index: 0, kind: input, shape index: {}]
  %s1 = inlined_call_operand.vmem [shape: f32[16,32], index: 1, kind: output, shape index: {}]
  %v2 = vstv %s0
  %3 = vst [vmem:[%s1] sm:$0xff] %v2
  %s4 = scalar_lea.vmem %s1, 8
  %5 = vst [vmem:[%s4] sm:$0xff] %v2

// kernel: fwd.1
$region0: #{fwd.1}
  #allocation0 [shape = 'u32[]', space=smem, size = 0x4, offset = 0x4, fixed_abs, tag = 'smem constant byte address 0x4 - core index']
  #allocation1 [shape = 'u32[72,128]{1,0:T(1,128)}', space=vmem, size = 0x9000, scoped, tag = 'internal scratch']
  %s0 = inlined_call_operand.vmem [shape: s32[16,1], index: 0, kind: input, shape index: {}]
  %s1 = inlined_call_operand.hbm [shape: bf16[64,32], index: 1, kind: input, shape index: {}]
  %s2 = inlined_call_operand.vmem [shape: f32[16,32], index: 2, kind: input, shape index: {}]
  %s3 = inlined_call_operand.vmem [shape: f32[2,4,32], index: 3, kind: input, shape index: {}]
  %s4 = inlined_call_operand.hbm [shape: bf16[2,32,96], index: 4, kind: input, shape index: {}]
  %s5 = inlined_call_operand.hbm [shape: bf16[2,32,32], index: 5, kind: input, shape index: {}]
  %s6 = inlined_call_operand.vmem [shape: bf16[2,32,64], index: 6, kind: input, shape index: {}]
  %s7 = inlined_call_operand.hbm [shape: bf16[2,64,32], index: 7, kind: input, shape index: {}]
  %s8 = inlined_call_operand.hbm [shape: bf16[32,64], index: 8, kind: input, shape index: {}]
  %s9 = inlined_call_operand.vmem [shape: f32[16,64], index: 9, kind: output, shape index: {}]
  %s10 = sld [smem:[#allocation0]]
  $region66: #{fwd.1} parent=0
    _
  %s12 = ssub.s32 1, %s10
  %s13 = scalar_select 0, %s12, %s10
  $region1: #{fwd.1} parent=0
    #allocation2 [shape = 'u8[16384]{0}', space=vmem, size = 0x4000, scoped, tag = 'input window, operand 1, single buffered']
    #allocation3 [shape = 's32[1]{0}', space=sflag, size = 0x4, scoped, tag = 'scoped memory for fwd.1']
    #allocation4 [shape = 'u8[16384]{0}', space=vmem, size = 0x4000, scoped, tag = 'input window, operand 4, single buffered']
    #allocation5 [shape = 's32[1]{0}', space=sflag, size = 0x4, scoped, tag = 'scoped memory for fwd.1']
    #allocation6 [shape = 'u8[16384]{0}', space=vmem, size = 0x4000, scoped, tag = 'input window, operand 5, single buffered']
    #allocation7 [shape = 'u8[32768]{0}', space=vmem, size = 0x8000, scoped, tag = 'input window, operand 7, single buffered']
    #allocation8 [shape = 's32[1]{0}', space=sflag, size = 0x4, scoped, tag = 'scoped memory for fwd.1']
    #allocation9 [shape = 'u8[8192]{0}', space=vmem, size = 0x2000, scoped, tag = 'input window, operand 8, single buffered']
    %14 = vsyncpa [#allocation3], 0
    %15 = vsyncpa [#allocation5], 0
    %16 = vsyncpa [#allocation8], 0
    // Predicated region
    $region2: #{fwd.1} parent=1 // pred_check
      _
    $region3: #{fwd.1} parent=1 // pred_check_branch
      %18 = sbr.rel (0) target = $region5
    $region4: #{fwd.1} parent=1 // pred_region
      _
    $region5: #{fwd.1} parent=1 // pred_fallthru
      _
    // Predicated region
    $region6: #{fwd.1} parent=1 // pred_check
      _
    $region7: #{fwd.1} parent=1 // pred_check_branch
      %20 = sbr.rel (0) target = $region9
    $region8: #{fwd.1} parent=1 // pred_region
      %22 = vsyncadd [#allocation3], 0
      %s23 = sshll.u32 %s1, 4
      %s24 = int_to_ptr.hbm [resolvable:$true] %s23
      %s25 = sshll.u32 [#allocation2], 4
      %s26 = int_to_ptr.vmem [resolvable:$true] %s25
      %31 = dma.hbm_to_vmem [thread:$0]  %s24, 512, %s26, [#allocation3], 64, 64, 4
    $region9: #{fwd.1} parent=1 // pred_fallthru
      _
    // Predicated region
    $region10: #{fwd.1} parent=1 // pred_check
      _
    $region11: #{fwd.1} parent=1 // pred_check_branch
      %33 = sbr.rel (0) target = $region13
    $region12: #{fwd.1} parent=1 // pred_region
      _
    $region13: #{fwd.1} parent=1 // pred_fallthru
      _
    // Predicated region
    $region14: #{fwd.1} parent=1 // pred_check
      _
    $region15: #{fwd.1} parent=1 // pred_check_branch
      %35 = sbr.rel (0) target = $region17
    $region16: #{fwd.1} parent=1 // pred_region
      _
    $region17: #{fwd.1} parent=1 // pred_fallthru
      _
    // Predicated region
    $region18: #{fwd.1} parent=1 // pred_check
      _
    $region19: #{fwd.1} parent=1 // pred_check_branch
      %37 = sbr.rel (0) target = $region21
    $region20: #{fwd.1} parent=1 // pred_region
      %39 = vsyncadd [#allocation5], 0
      %s40 = sshll.u32 %s4, 4
      %s41 = int_to_ptr.hbm [resolvable:$true] %s40
      %s42 = sshll.u32 [#allocation4], 4
      %s43 = int_to_ptr.vmem [resolvable:$true] %s42
      %48 = dma.hbm_to_vmem [thread:$0]  %s41, 512, %s43, [#allocation5], 64, 64, 4
    $region21: #{fwd.1} parent=1 // pred_fallthru
      _
    // Predicated region
    $region22: #{fwd.1} parent=1 // pred_check
      _
    $region23: #{fwd.1} parent=1 // pred_check_branch
      %50 = sbr.rel (0) target = $region25
    $region24: #{fwd.1} parent=1 // pred_region
      %52 = vsyncadd [#allocation5], 0
      %s53 = sshll.u32 %s5, 4
      %s54 = int_to_ptr.hbm [resolvable:$true] %s53
      %s55 = sshll.u32 [#allocation6], 4
      %s56 = int_to_ptr.vmem [resolvable:$true] %s55
      %61 = dma.hbm_to_vmem [thread:$0]  %s54, 512, %s56, [#allocation5], 64, 64, 4
    $region25: #{fwd.1} parent=1 // pred_fallthru
      _
    // Predicated region
    $region26: #{fwd.1} parent=1 // pred_check
      _
    $region27: #{fwd.1} parent=1 // pred_check_branch
      %63 = sbr.rel (0) target = $region29
    $region28: #{fwd.1} parent=1 // pred_region
      _
    $region29: #{fwd.1} parent=1 // pred_fallthru
      _
    // Predicated region
    $region30: #{fwd.1} parent=1 // pred_check
      _
    $region31: #{fwd.1} parent=1 // pred_check_branch
      %65 = sbr.rel (0) target = $region33
    $region32: #{fwd.1} parent=1 // pred_region
      %67 = vsyncadd [#allocation8], 0
      %s68 = sshll.u32 %s7, 4
      %s69 = int_to_ptr.hbm [resolvable:$true] %s68
      %s70 = sshll.u32 [#allocation7], 4
      %s71 = int_to_ptr.vmem [resolvable:$true] %s70
      %76 = dma.hbm_to_vmem [thread:$0]  %s69, 1024, %s71, [#allocation8], 64, 64, 4
    $region33: #{fwd.1} parent=1 // pred_fallthru
      _
    // Predicated region
    $region34: #{fwd.1} parent=1 // pred_check
      _
    $region35: #{fwd.1} parent=1 // pred_check_branch
      %78 = sbr.rel (0) target = $region37
    $region36: #{fwd.1} parent=1 // pred_region
      %80 = vsyncadd [#allocation8], 0
      %s81 = sshll.u32 %s8, 4
      %s82 = int_to_ptr.hbm [resolvable:$true] %s81
      %s83 = sshll.u32 [#allocation9], 4
      %s84 = int_to_ptr.vmem [resolvable:$true] %s83
      %89 = dma.hbm_to_vmem [thread:$0]  %s82, 256, %s84, [#allocation8], 64, 64, 4
    $region37: #{fwd.1} parent=1 // pred_fallthru
      _
    // Predicated region
    $region38: #{fwd.1} parent=1 // pred_check
      _
    $region39: #{fwd.1} parent=1 // pred_check_branch
      %91 = sbr.rel (0) target = $region41
    $region40: #{fwd.1} parent=1 // pred_region
      %93 = dma.done [#allocation3], 512
    $region41: #{fwd.1} parent=1 // pred_fallthru
      _
    // Predicated region
    $region42: #{fwd.1} parent=1 // pred_check
      _
    $region43: #{fwd.1} parent=1 // pred_check_branch
      %95 = sbr.rel (0) target = $region45
    $region44: #{fwd.1} parent=1 // pred_region
      %97 = dma.done [#allocation5], 512
    $region45: #{fwd.1} parent=1 // pred_fallthru
      _
    // Predicated region
    $region46: #{fwd.1} parent=1 // pred_check
      _
    $region47: #{fwd.1} parent=1 // pred_check_branch
      %99 = sbr.rel (0) target = $region49
    $region48: #{fwd.1} parent=1 // pred_region
      %101 = dma.done [#allocation5], 512
    $region49: #{fwd.1} parent=1 // pred_fallthru
      _
    // Predicated region
    $region50: #{fwd.1} parent=1 // pred_check
      _
    $region51: #{fwd.1} parent=1 // pred_check_branch
      %103 = sbr.rel (0) target = $region53
    $region52: #{fwd.1} parent=1 // pred_region
      %105 = dma.done [#allocation8], 1024
    $region53: #{fwd.1} parent=1 // pred_fallthru
      _
    // Predicated region
    $region54: #{fwd.1} parent=1 // pred_check
      _
    $region55: #{fwd.1} parent=1 // pred_check_branch
      %107 = sbr.rel (0) target = $region57
    $region56: #{fwd.1} parent=1 // pred_region
      %109 = dma.done [#allocation8], 256
    $region57: #{fwd.1} parent=1 // pred_fallthru
      _
    %v111 = vld [vmem:[%s0] sm:$0xff]
    %v112 = vld [vmem:[%s0 + $0x8] sm:$0xff]
    %v113 = vlaneseq
    %v114 = vand.u32 %v113, 127
    %115 = vset.pattern.permute.xlu0 0
    %116 = vperm.xlu0 %115, %v111
    %v117 = vpop.permute.xlu0 %116
    %118 = vset.pattern.permute.xlu0 0
    %119 = vperm.xlu0 %118, %v112
    %v120 = vpop.permute.xlu0 %119
    %vm121 = vcmp.eq.s32.totalorder %v114, %v117
    %vm122 = vcmp.eq.s32.totalorder %v114, %v120
    %v123 = vsel %vm121, 1, 0
    %v124 = vsel %vm122, 1, 0
    %v125 = vcvt.s32.f32 %v123
    %v126 = vcvt.s32.f32 %v124
    %v127 = vpack.c.bf16 %v126, %v125
    %v128 = vld [vmem:[#allocation2] sm:$0xf]
    %v129 = vld [vmem:[#allocation2 + $0x4] sm:$0xf]
    %v130 = vld [vmem:[#allocation2 + $0x8] sm:$0xf]
    %v131 = vld [vmem:[#allocation2 + $0xc] sm:$0xf]
    %v132 = vld [vmem:[#allocation2 + $0x10] sm:$0xf]
    %v133 = vld [vmem:[#allocation2 + $0x14] sm:$0xf]
    %v134 = vld [vmem:[#allocation2 + $0x18] sm:$0xf]
    %v135 = vld [vmem:[#allocation2 + $0x1c] sm:$0xf]
    %v136 = vld [vmem:[%s2] sm:$0xff]
    %v137 = vld [vmem:[%s2 + $0x8] sm:$0xff]
    %v146 = vunpack.c.l.b16 %v128
    %v147 = vunpack.c.l.b16 %v129
    %v148 = vunpack.c.l.b16 %v130
    %v149 = vunpack.c.l.b16 %v131
    %v150 = vunpack.c.l.b16 %v132
    %v151 = vunpack.c.l.b16 %v133
    %v152 = vunpack.c.l.b16 %v134
    %v153 = vunpack.c.l.b16 %v135
    %v154 = vpack.c.b16 %v147, %v146
    %v155 = vpack.c.b16 %v149, %v148
    %v156 = vpack.c.b16 %v151, %v150
    %v157 = vpack.c.b16 %v153, %v152
    %vm162 = vcmask 523264
    %v164 = vsel %vm162, %v127, 0
    %166 = vmatpush.bf16.msra.mxu0 0
    %167 = vmatpush.bf16.msra.mxu0 0
    %168 = vmatpush.bf16.msra.mxu0 0
    %169 = vmatpush.bf16.msra.mxu0 0
    %170 = vmatpush.bf16.msra.mxu0 %v157
    %171 = vmatpush.bf16.msra.mxu0 %v156
    %172 = vmatpush.bf16.msra.mxu0 %v155
    %173 = vmatpush.bf16.msra.mxu0 %v154
    %174 = vmatmul.bf16.gmra.mxu0 %v164
    %v175 = vpop.f32.mrf.mxu0
    %v176 = vadd.f32 %v136, %v175
    %v177 = vpop.f32.mrf.mxu0
    %v178 = vadd.f32 %v137, %v177
    %179 = vdwg.mxu0
    %v180 = vmul.f32 %v176, 31.0
    %v181 = vmul.f32 %v178, 31.0
    %v182 = vadd.f32 %v180, 4.0
    %v183 = vadd.f32 %v181, 4.0
    %v184 = vmul.f32 %v182, 0.125
    %v185 = vmul.f32 %v183, 0.125
    %v186 = vceil.f32 %v184
    %v187 = vceil.f32 %v185
    %v188 = vsub.f32 %v186, 1.0
    %v189 = vsub.f32 %v187, 1.0
    %v190 = vmax.f32 %v188, 0.0
    %v191 = vmax.f32 %v189, 0.0
    %v192 = vmin.f32 %v190, 31.0
    %v193 = vmin.f32 %v191, 31.0
    %v194 = vmul.f32 %v192, 0.2580645
    %v195 = vmul.f32 %v193, 0.2580645
    %v196 = vlaneseq
    %v197 = vshrl.u32 %v196, 7
    %vm198 = vcmp.gt.s32.totalorder %v114, %v197
    %v199 = vsel %vm198, -1e+30, 0.0
    %v200 = vld [vmem:[%s3] sm:$0xf]
    %vm201 = vcmask 261120
    %v202 = vsel %vm201, %v194, 0.0
    %203 = vadd.xlane.f32.xlu0 %v202
    %v204 = vpop.xlane.xlu0 %203
    %v205 = vsel %vm201, %v195, 0.0
    %206 = vadd.xlane.f32.xlu0 %v205
    %v207 = vpop.xlane.xlu0 %206
    %v208 = vrcp.pop 32.0
    %v209 = vmul.f32 32.0, %v208
    %v210 = vsub.f32 1.0, %v209
    %v211 = vmul.f32 %v208, %v210
    %v212 = vadd.f32 %v208, %v211
    %vm213 = vweird.f32 %v208
    %v214 = vsel %vm213, %v208, %v212
    %v215 = vmul.f32 %v204, %v214
    %v216 = vmul.f32 %v207, %v214
    %v217 = vsub.f32 %v194, %v215
    %v218 = vsub.f32 %v195, %v216
    %v219 = vmul.f32 %v217, %v217
    %v220 = vmul.f32 %v218, %v218
    %v221 = vsel %vm201, %v219, 0.0
    %222 = vadd.xlane.f32.xlu0 %v221
    %v223 = vpop.xlane.xlu0 %222
    %v224 = vsel %vm201, %v220, 0.0
    %225 = vadd.xlane.f32.xlu0 %v224
    %v226 = vpop.xlane.xlu0 %225
    %v227 = vmul.f32 %v223, %v214
    %v228 = vmul.f32 %v226, %v214
    %v229 = vadd.f32 %v227, 1e-05
    %v230 = vadd.f32 %v228, 1e-05
    %v231 = vrsqrt.pop %v229
    %v232 = vmul.f32 %v231, %v229
    %v233 = vmul.f32 %v232, %v231
    %v234 = vmul.f32 0.5, %v233
    %v235 = vsub.f32 1.5, %v234
    %v236 = vmul.f32 %v231, %v235
    %vm237 = vweird.f32 %v229
    %vm238 = vweird.f32 %v231
    %vm239 = vmor %vm237, %vm238
    %v240 = vsel %vm239, %v231, %v236
    %v241 = vrsqrt.pop %v230
    %v242 = vmul.f32 %v241, %v230
    %v243 = vmul.f32 %v242, %v241
    %v244 = vmul.f32 0.5, %v243
    %v245 = vsub.f32 1.5, %v244
    %v246 = vmul.f32 %v241, %v245
    %vm247 = vweird.f32 %v230
    %vm248 = vweird.f32 %v241
    %vm249 = vmor %vm247, %vm248
    %v250 = vsel %vm249, %v241, %v246
    %v251 = vmul.f32 %v217, %v240
    %v252 = vmul.f32 %v218, %v250
    %v253 = vperm.slane %v200, 0
    %v254 = vmul.f32 %v251, %v253
    %v255 = vmul.f32 %v252, %v253
    %v256 = vperm.slane %v200, 1
    %v257 = vadd.f32 %v254, %v256
    %v258 = vadd.f32 %v255, %v256
    %v259 = vpack.c.bf16 %v258, %v257
    %v260 = vld [vmem:[#allocation4] sm:$0xf]
    %v261 = vld [vmem:[#allocation4 + $0x4] sm:$0xf]
    %v262 = vld [vmem:[#allocation4 + $0x8] sm:$0xf]
    %v263 = vld [vmem:[#allocation4 + $0xc] sm:$0xf]
    %v268 = vunpack.c.l.b16 %v260
    %v269 = vunpack.c.l.b16 %v261
    %v270 = vunpack.c.l.b16 %v262
    %v271 = vunpack.c.l.b16 %v263
    %v272 = vpack.c.b16 %v269, %v268
    %v273 = vpack.c.b16 %v271, %v270
    %v277 = vsel %vm201, %v259, 0
    %279 = vmatpush.bf16.msra.mxu0 0
    %280 = vmatpush.bf16.msra.mxu0 0
    %281 = vmatpush.bf16.msra.mxu0 0
    %282 = vmatpush.bf16.msra.mxu0 0
    %283 = vmatpush.bf16.msra.mxu0 0
    %284 = vmatpush.bf16.msra.mxu0 0
    %285 = vmatpush.bf16.msra.mxu0 %v273
    %286 = vmatpush.bf16.msra.mxu0 %v272
    %287 = vmatmul.bf16.gmra.mxu0 %v277
    %v288 = vpop.f32.mrf.mxu0
    %v289 = vadd.f32 0.0, %v288
    %v290 = vpop.f32.mrf.mxu0
    %v291 = vadd.f32 0.0, %v290
    %292 = vdwg.mxu0
    %v293 = vmul.f32 %v289, 31.0
    %v294 = vmul.f32 %v291, 31.0
    %v295 = vadd.f32 %v293, 4.0
    %v296 = vadd.f32 %v294, 4.0
    %v297 = vmul.f32 %v295, 0.125
    %v298 = vmul.f32 %v296, 0.125
    %v299 = vceil.f32 %v297
    %v300 = vceil.f32 %v298
    %v301 = vsub.f32 %v299, 1.0
    %v302 = vsub.f32 %v300, 1.0
    %v303 = vmax.f32 %v301, 0.0
    %v304 = vmax.f32 %v302, 0.0
    %v305 = vmin.f32 %v303, 31.0
    %v306 = vmin.f32 %v304, 31.0
    %v307 = vmul.f32 %v305, 8.0
    %v308 = vmul.f32 %v306, 8.0
    %311 = vrot.lane.b32.xlu0 %v307, 120
    %v312 = vpop.permute.xlu0 %311
    %313 = vrot.lane.b32.xlu0 %v308, 120
    %v314 = vpop.permute.xlu0 %313
    %317 = vrot.lane.b32.xlu0 %v307, 112
    %v318 = vpop.permute.xlu0 %317
    %319 = vrot.lane.b32.xlu0 %v308, 112
    %v320 = vpop.permute.xlu0 %319
    %323 = vrot.lane.b32.xlu0 %v307, 104
    %v324 = vpop.permute.xlu0 %323
    %325 = vrot.lane.b32.xlu0 %v308, 104
    %v326 = vpop.permute.xlu0 %325
    %v329 = vrot.slane %v318, 4
    %vm330 = vcmask 1047556
    %v331 = vsel %vm330, %v329, %v307
    %v332 = vrot.slane %v307, 4
    %v333 = vsel %vm330, %v318, %v332
    %v335 = vunpack.c.l.s4 1983009808
    %v336 = vunpack.c.0.s8 %v335
    %v337 = vperm.slane %v331, %v336
    %v339 = vunpack.c.l.s4 1983009808
    %v340 = vunpack.c.0.s8 %v339
    %v341 = vperm.slane %v333, %v340
    %v342 = vrot.slane %v324, 4
    %v343 = vsel %vm330, %v342, %v312
    %v344 = vrot.slane %v312, 4
    %v345 = vsel %vm330, %v324, %v344
    %v347 = vunpack.c.l.s4 1983009808
    %v348 = vunpack.c.0.s8 %v347
    %v349 = vperm.slane %v343, %v348
    %v351 = vunpack.c.l.s4 1983009808
    %v352 = vunpack.c.0.s8 %v351
    %v353 = vperm.slane %v345, %v352
    %v354 = vrot.slane %v349, 4
    %v355 = vsel %vm330, %v354, %v337
    %v356 = vrot.slane %v337, 4
    %v357 = vsel %vm330, %v349, %v356
    %v359 = vunpack.c.l.s4 1934713408
    %v360 = vunpack.c.0.s8 %v359
    %v361 = vperm.slane %v355, %v360
    %v363 = vunpack.c.l.s4 1934713408
    %v364 = vunpack.c.0.s8 %v363
    %v365 = vperm.slane %v357, %v364
    %v366 = vrot.slane %v353, 4
    %v367 = vsel %vm330, %v366, %v341
    %v368 = vrot.slane %v341, 4
    %v369 = vsel %vm330, %v353, %v368
    %v371 = vunpack.c.l.s4 1934713408
    %v372 = vunpack.c.0.s8 %v371
    %v373 = vperm.slane %v367, %v372
    %v375 = vunpack.c.l.s4 1934713408
    %v376 = vunpack.c.0.s8 %v375
    %v377 = vperm.slane %v369, %v376
    %v378 = vrot.slane %v361, 4
    %v379 = vsel %vm330, 0.0, %v378
    %v380 = vrot.slane %v365, 4
    %v381 = vsel %vm330, 0.0, %v380
    %v382 = vrot.slane %v373, 4
    %v383 = vsel %vm330, 0.0, %v382
    %v384 = vrot.slane %v377, 4
    %v385 = vsel %vm330, 0.0, %v384
    %v386 = vrot.slane %v320, 4
    %v387 = vsel %vm330, %v386, %v308
    %v388 = vrot.slane %v308, 4
    %v389 = vsel %vm330, %v320, %v388
    %v391 = vunpack.c.l.s4 1983009808
    %v392 = vunpack.c.0.s8 %v391
    %v393 = vperm.slane %v387, %v392
    %v395 = vunpack.c.l.s4 1983009808
    %v396 = vunpack.c.0.s8 %v395
    %v397 = vperm.slane %v389, %v396
    %v398 = vrot.slane %v326, 4
    %v399 = vsel %vm330, %v398, %v314
    %v400 = vrot.slane %v314, 4
    %v401 = vsel %vm330, %v326, %v400
    %v403 = vunpack.c.l.s4 1983009808
    %v404 = vunpack.c.0.s8 %v403
    %v405 = vperm.slane %v399, %v404
    %v407 = vunpack.c.l.s4 1983009808
    %v408 = vunpack.c.0.s8 %v407
    %v409 = vperm.slane %v401, %v408
    %v410 = vrot.slane %v405, 4
    %v411 = vsel %vm330, %v410, %v393
    %v412 = vrot.slane %v393, 4
    %v413 = vsel %vm330, %v405, %v412
    %v415 = vunpack.c.l.s4 1934713408
    %v416 = vunpack.c.0.s8 %v415
    %v417 = vperm.slane %v411, %v416
    %v419 = vunpack.c.l.s4 1934713408
    %v420 = vunpack.c.0.s8 %v419
    %v421 = vperm.slane %v413, %v420
    %v422 = vrot.slane %v409, 4
    %v423 = vsel %vm330, %v422, %v397
    %v424 = vrot.slane %v397, 4
    %v425 = vsel %vm330, %v409, %v424
    %v427 = vunpack.c.l.s4 1934713408
    %v428 = vunpack.c.0.s8 %v427
    %v429 = vperm.slane %v423, %v428
    %v431 = vunpack.c.l.s4 1934713408
    %v432 = vunpack.c.0.s8 %v431
    %v433 = vperm.slane %v425, %v432
    %v434 = vrot.slane %v417, 4
    %v435 = vsel %vm330, 0.0, %v434
    %v436 = vrot.slane %v421, 4
    %v437 = vsel %vm330, 0.0, %v436
    %v438 = vrot.slane %v429, 4
    %v439 = vsel %vm330, 0.0, %v438
    %v440 = vrot.slane %v433, 4
    %v441 = vsel %vm330, 0.0, %v440
    %v442 = vsel %vm330, %v380, %v361
    %v444 = vunpack.c.l.s4 1983009808
    %v445 = vunpack.c.0.s8 %v444
    %v446 = vperm.slane %v442, %v445
    %v447 = vrot.slane %v381, 4
    %v448 = vsel %vm330, %v447, %v379
    %v450 = vunpack.c.l.s4 1983009808
    %v451 = vunpack.c.0.s8 %v450
    %v452 = vperm.slane %v448, %v451
    %v453 = vsel %vm330, %v384, %v373
    %v455 = vunpack.c.l.s4 1983009808
    %v456 = vunpack.c.0.s8 %v455
    %v457 = vperm.slane %v453, %v456
    %v458 = vrot.slane %v385, 4
    %v459 = vsel %vm330, %v458, %v383
    %v461 = vunpack.c.l.s4 1983009808
    %v462 = vunpack.c.0.s8 %v461
    %v463 = vperm.slane %v459, %v462
    %v464 = vrot.slane %v452, 4
    %v465 = vsel %vm330, %v464, %v446
    %v466 = vrot.slane %v446, 4
    %v467 = vsel %vm330, %v452, %v466
    %v469 = vunpack.c.l.s4 1934713408
    %v470 = vunpack.c.0.s8 %v469
    %v471 = vperm.slane %v465, %v470
    %v473 = vunpack.c.l.s4 1934713408
    %v474 = vunpack.c.0.s8 %v473
    %v475 = vperm.slane %v467, %v474
    %v476 = vrot.slane %v463, 4
    %v477 = vsel %vm330, %v476, %v457
    %v478 = vrot.slane %v457, 4
    %v479 = vsel %vm330, %v463, %v478
    %v481 = vunpack.c.l.s4 1934713408
    %v482 = vunpack.c.0.s8 %v481
    %v483 = vperm.slane %v477, %v482
    %v485 = vunpack.c.l.s4 1934713408
    %v486 = vunpack.c.0.s8 %v485
    %v487 = vperm.slane %v479, %v486
    %v488 = vrot.slane %v483, 4
    %v489 = vsel %vm330, %v488, %v471
    %v490 = vrot.slane %v471, 4
    %v491 = vsel %vm330, %v483, %v490
    %v492 = vrot.slane %v487, 4
    %v493 = vsel %vm330, %v492, %v475
    %v494 = vrot.slane %v475, 4
    %v495 = vsel %vm330, %v487, %v494
    %v496 = vsel %vm330, %v436, %v417
    %v498 = vunpack.c.l.s4 1983009808
    %v499 = vunpack.c.0.s8 %v498
    %v500 = vperm.slane %v496, %v499
    %v501 = vrot.slane %v437, 4
    %v502 = vsel %vm330, %v501, %v435
    %v504 = vunpack.c.l.s4 1983009808
    %v505 = vunpack.c.0.s8 %v504
    %v506 = vperm.slane %v502, %v505
    %v507 = vsel %vm330, %v440, %v429
    %v509 = vunpack.c.l.s4 1983009808
    %v510 = vunpack.c.0.s8 %v509
    %v511 = vperm.slane %v507, %v510
    %v512 = vrot.slane %v441, 4
    %v513 = vsel %vm330, %v512, %v439
    %v515 = vunpack.c.l.s4 1983009808
    %v516 = vunpack.c.0.s8 %v515
    %v517 = vperm.slane %v513, %v516
    %v518 = vrot.slane %v506, 4
    %v519 = vsel %vm330, %v518, %v500
    %v520 = vrot.slane %v500, 4
    %v521 = vsel %vm330, %v506, %v520
    %v523 = vunpack.c.l.s4 1934713408
    %v524 = vunpack.c.0.s8 %v523
    %v525 = vperm.slane %v519, %v524
    %v527 = vunpack.c.l.s4 1934713408
    %v528 = vunpack.c.0.s8 %v527
    %v529 = vperm.slane %v521, %v528
    %v530 = vrot.slane %v517, 4
    %v531 = vsel %vm330, %v530, %v511
    %v532 = vrot.slane %v511, 4
    %v533 = vsel %vm330, %v517, %v532
    %v535 = vunpack.c.l.s4 1934713408
    %v536 = vunpack.c.0.s8 %v535
    %v537 = vperm.slane %v531, %v536
    %v539 = vunpack.c.l.s4 1934713408
    %v540 = vunpack.c.0.s8 %v539
    %v541 = vperm.slane %v533, %v540
    %v542 = vrot.slane %v537, 4
    %v543 = vsel %vm330, %v542, %v525
    %v544 = vrot.slane %v525, 4
    %v545 = vsel %vm330, %v537, %v544
    %v546 = vrot.slane %v541, 4
    %v547 = vsel %vm330, %v546, %v529
    %v548 = vrot.slane %v529, 4
    %v549 = vsel %vm330, %v541, %v548
    %550 = vrot.lane.b32.xlu0 %v307, 96
    %v551 = vpop.permute.xlu0 %550
    %552 = vrot.lane.b32.xlu0 %v308, 96
    %v553 = vpop.permute.xlu0 %552
    %554 = vrot.lane.b32.xlu0 %v312, 96
    %v555 = vpop.permute.xlu0 %554
    %556 = vrot.lane.b32.xlu0 %v314, 96
    %v557 = vpop.permute.xlu0 %556
    %558 = vrot.lane.b32.xlu0 %v318, 96
    %v559 = vpop.permute.xlu0 %558
    %560 = vrot.lane.b32.xlu0 %v320, 96
    %v561 = vpop.permute.xlu0 %560
    %562 = vrot.lane.b32.xlu0 %v324, 96
    %v563 = vpop.permute.xlu0 %562
    %564 = vrot.lane.b32.xlu0 %v326, 96
    %v565 = vpop.permute.xlu0 %564
    %v574 = vrot.slane %v559, 4
    %v575 = vsel %vm330, %v574, %v551
    %v576 = vrot.slane %v551, 4
    %v577 = vsel %vm330, %v559, %v576
    %v579 = vunpack.c.l.s4 1983009808
    %v580 = vunpack.c.0.s8 %v579
    %v581 = vperm.slane %v575, %v580
    %v583 = vunpack.c.l.s4 1983009808
    %v584 = vunpack.c.0.s8 %v583
    %v585 = vperm.slane %v577, %v584
    %v586 = vrot.slane %v563, 4
    %v587 = vsel %vm330, %v586, %v555
    %v588 = vrot.slane %v555, 4
    %v589 = vsel %vm330, %v563, %v588
    %v591 = vunpack.c.l.s4 1983009808
    %v592 = vunpack.c.0.s8 %v591
    %v593 = vperm.slane %v587, %v592
    %v595 = vunpack.c.l.s4 1983009808
    %v596 = vunpack.c.0.s8 %v595
    %v597 = vperm.slane %v589, %v596
    %v598 = vrot.slane %v593, 4
    %v599 = vsel %vm330, %v598, %v581
    %v600 = vrot.slane %v581, 4
    %v601 = vsel %vm330, %v593, %v600
    %v603 = vunpack.c.l.s4 1934713408
    %v604 = vunpack.c.0.s8 %v603
    %v605 = vperm.slane %v599, %v604
    %v607 = vunpack.c.l.s4 1934713408
    %v608 = vunpack.c.0.s8 %v607
    %v609 = vperm.slane %v601, %v608
    %v610 = vrot.slane %v597, 4
    %v611 = vsel %vm330, %v610, %v585
    %v612 = vrot.slane %v585, 4
    %v613 = vsel %vm330, %v597, %v612
    %v615 = vunpack.c.l.s4 1934713408
    %v616 = vunpack.c.0.s8 %v615
    %v617 = vperm.slane %v611, %v616
    %v619 = vunpack.c.l.s4 1934713408
    %v620 = vunpack.c.0.s8 %v619
    %v621 = vperm.slane %v613, %v620
    %v622 = vrot.slane %v605, 4
    %v623 = vsel %vm330, 0.0, %v622
    %v624 = vrot.slane %v609, 4
    %v625 = vsel %vm330, 0.0, %v624
    %v626 = vrot.slane %v617, 4
    %v627 = vsel %vm330, 0.0, %v626
    %v628 = vrot.slane %v621, 4
    %v629 = vsel %vm330, 0.0, %v628
    %v630 = vrot.slane %v561, 4
    %v631 = vsel %vm330, %v630, %v553
    %v632 = vrot.slane %v553, 4
    %v633 = vsel %vm330, %v561, %v632
    %v635 = vunpack.c.l.s4 1983009808
    %v636 = vunpack.c.0.s8 %v635
    %v637 = vperm.slane %v631, %v636
    %v639 = vunpack.c.l.s4 1983009808
    %v640 = vunpack.c.0.s8 %v639
    %v641 = vperm.slane %v633, %v640
    %v642 = vrot.slane %v565, 4
    %v643 = vsel %vm330, %v642, %v557
    %v644 = vrot.slane %v557, 4
    %v645 = vsel %vm330, %v565, %v644
    %v647 = vunpack.c.l.s4 1983009808
    %v648 = vunpack.c.0.s8 %v647
    %v649 = vperm.slane %v643, %v648
    %v651 = vunpack.c.l.s4 1983009808
    %v652 = vunpack.c.0.s8 %v651
    %v653 = vperm.slane %v645, %v652
    %v654 = vrot.slane %v649, 4
    %v655 = vsel %vm330, %v654, %v637
    %v656 = vrot.slane %v637, 4
    %v657 = vsel %vm330, %v649, %v656
    %v659 = vunpack.c.l.s4 1934713408
    %v660 = vunpack.c.0.s8 %v659
    %v661 = vperm.slane %v655, %v660
    %v663 = vunpack.c.l.s4 1934713408
    %v664 = vunpack.c.0.s8 %v663
    %v665 = vperm.slane %v657, %v664
    %v666 = vrot.slane %v653, 4
    %v667 = vsel %vm330, %v666, %v641
    %v668 = vrot.slane %v641, 4
    %v669 = vsel %vm330, %v653, %v668
    %v671 = vunpack.c.l.s4 1934713408
    %v672 = vunpack.c.0.s8 %v671
    %v673 = vperm.slane %v667, %v672
    %v675 = vunpack.c.l.s4 1934713408
    %v676 = vunpack.c.0.s8 %v675
    %v677 = vperm.slane %v669, %v676
    %v678 = vrot.slane %v661, 4
    %v679 = vsel %vm330, 0.0, %v678
    %v680 = vrot.slane %v665, 4
    %v681 = vsel %vm330, 0.0, %v680
    %v682 = vrot.slane %v673, 4
    %v683 = vsel %vm330, 0.0, %v682
    %v684 = vrot.slane %v677, 4
    %v685 = vsel %vm330, 0.0, %v684
    %v686 = vsel %vm330, %v624, %v605
    %v688 = vunpack.c.l.s4 1983009808
    %v689 = vunpack.c.0.s8 %v688
    %v690 = vperm.slane %v686, %v689
    %v691 = vrot.slane %v625, 4
    %v692 = vsel %vm330, %v691, %v623
    %v694 = vunpack.c.l.s4 1983009808
    %v695 = vunpack.c.0.s8 %v694
    %v696 = vperm.slane %v692, %v695
    %v697 = vsel %vm330, %v628, %v617
    %v699 = vunpack.c.l.s4 1983009808
    %v700 = vunpack.c.0.s8 %v699
    %v701 = vperm.slane %v697, %v700
    %v702 = vrot.slane %v629, 4
    %v703 = vsel %vm330, %v702, %v627
    %v705 = vunpack.c.l.s4 1983009808
    %v706 = vunpack.c.0.s8 %v705
    %v707 = vperm.slane %v703, %v706
    %v708 = vrot.slane %v696, 4
    %v709 = vsel %vm330, %v708, %v690
    %v710 = vrot.slane %v690, 4
    %v711 = vsel %vm330, %v696, %v710
    %v713 = vunpack.c.l.s4 1934713408
    %v714 = vunpack.c.0.s8 %v713
    %v715 = vperm.slane %v709, %v714
    %v717 = vunpack.c.l.s4 1934713408
    %v718 = vunpack.c.0.s8 %v717
    %v719 = vperm.slane %v711, %v718
    %v720 = vrot.slane %v707, 4
    %v721 = vsel %vm330, %v720, %v701
    %v722 = vrot.slane %v701, 4
    %v723 = vsel %vm330, %v707, %v722
    %v725 = vunpack.c.l.s4 1934713408
    %v726 = vunpack.c.0.s8 %v725
    %v727 = vperm.slane %v721, %v726
    %v729 = vunpack.c.l.s4 1934713408
    %v730 = vunpack.c.0.s8 %v729
    %v731 = vperm.slane %v723, %v730
    %v732 = vrot.slane %v727, 4
    %v733 = vsel %vm330, %v732, %v715
    %v734 = vrot.slane %v715, 4
    %v735 = vsel %vm330, %v727, %v734
    %v736 = vrot.slane %v731, 4
    %v737 = vsel %vm330, %v736, %v719
    %v738 = vrot.slane %v719, 4
    %v739 = vsel %vm330, %v731, %v738
    %v740 = vsel %vm330, %v680, %v661
    %v742 = vunpack.c.l.s4 1983009808
    %v743 = vunpack.c.0.s8 %v742
    %v744 = vperm.slane %v740, %v743
    %v745 = vrot.slane %v681, 4
    %v746 = vsel %vm330, %v745, %v679
    %v748 = vunpack.c.l.s4 1983009808
    %v749 = vunpack.c.0.s8 %v748
    %v750 = vperm.slane %v746, %v749
    %v751 = vsel %vm330, %v684, %v673
    %v753 = vunpack.c.l.s4 1983009808
    %v754 = vunpack.c.0.s8 %v753
    %v755 = vperm.slane %v751, %v754
    %v756 = vrot.slane %v685, 4
    %v757 = vsel %vm330, %v756, %v683
    %v759 = vunpack.c.l.s4 1983009808
    %v760 = vunpack.c.0.s8 %v759
    %v761 = vperm.slane %v757, %v760
    %v762 = vrot.slane %v750, 4
    %v763 = vsel %vm330, %v762, %v744
    %v764 = vrot.slane %v744, 4
    %v765 = vsel %vm330, %v750, %v764
    %v767 = vunpack.c.l.s4 1934713408
    %v768 = vunpack.c.0.s8 %v767
    %v769 = vperm.slane %v763, %v768
    %v771 = vunpack.c.l.s4 1934713408
    %v772 = vunpack.c.0.s8 %v771
    %v773 = vperm.slane %v765, %v772
    %v774 = vrot.slane %v761, 4
    %v775 = vsel %vm330, %v774, %v755
    %v776 = vrot.slane %v755, 4
    %v777 = vsel %vm330, %v761, %v776
    %v779 = vunpack.c.l.s4 1934713408
    %v780 = vunpack.c.0.s8 %v779
    %v781 = vperm.slane %v775, %v780
    %v783 = vunpack.c.l.s4 1934713408
    %v784 = vunpack.c.0.s8 %v783
    %v785 = vperm.slane %v777, %v784
    %v786 = vrot.slane %v781, 4
    %v787 = vsel %vm330, %v786, %v769
    %v788 = vrot.slane %v769, 4
    %v789 = vsel %vm330, %v781, %v788
    %v790 = vrot.slane %v785, 4
    %v791 = vsel %vm330, %v790, %v773
    %v792 = vrot.slane %v773, 4
    %v793 = vsel %vm330, %v785, %v792
    %794 = vrot.lane.b32.xlu0 %v307, 64
    %v795 = vpop.permute.xlu0 %794
    %796 = vrot.lane.b32.xlu0 %v308, 64
    %v797 = vpop.permute.xlu0 %796
    %798 = vrot.lane.b32.xlu0 %v312, 64
    %v799 = vpop.permute.xlu0 %798
    %800 = vrot.lane.b32.xlu0 %v314, 64
    %v801 = vpop.permute.xlu0 %800
    %802 = vrot.lane.b32.xlu0 %v318, 64
    %v803 = vpop.permute.xlu0 %802
    %804 = vrot.lane.b32.xlu0 %v320, 64
    %v805 = vpop.permute.xlu0 %804
    %806 = vrot.lane.b32.xlu0 %v324, 64
    %v807 = vpop.permute.xlu0 %806
    %808 = vrot.lane.b32.xlu0 %v326, 64
    %v809 = vpop.permute.xlu0 %808
    %v818 = vrot.slane %v803, 4
    %v819 = vsel %vm330, %v818, %v795
    %v820 = vrot.slane %v795, 4
    %v821 = vsel %vm330, %v803, %v820
    %v823 = vunpack.c.l.s4 1983009808
    %v824 = vunpack.c.0.s8 %v823
    %v825 = vperm.slane %v819, %v824
    %v827 = vunpack.c.l.s4 1983009808
    %v828 = vunpack.c.0.s8 %v827
    %v829 = vperm.slane %v821, %v828
    %v830 = vrot.slane %v807, 4
    %v831 = vsel %vm330, %v830, %v799
    %v832 = vrot.slane %v799, 4
    %v833 = vsel %vm330, %v807, %v832
    %v835 = vunpack.c.l.s4 1983009808
    %v836 = vunpack.c.0.s8 %v835
    %v837 = vperm.slane %v831, %v836
    %v839 = vunpack.c.l.s4 1983009808
    %v840 = vunpack.c.0.s8 %v839
    %v841 = vperm.slane %v833, %v840
    %v842 = vrot.slane %v837, 4
    %v843 = vsel %vm330, %v842, %v825
    %v844 = vrot.slane %v825, 4
    %v845 = vsel %vm330, %v837, %v844
    %v847 = vunpack.c.l.s4 1934713408
    %v848 = vunpack.c.0.s8 %v847
    %v849 = vperm.slane %v843, %v848
    %v851 = vunpack.c.l.s4 1934713408
    %v852 = vunpack.c.0.s8 %v851
    %v853 = vperm.slane %v845, %v852
    %v854 = vrot.slane %v841, 4
    %v855 = vsel %vm330, %v854, %v829
    %v856 = vrot.slane %v829, 4
    %v857 = vsel %vm330, %v841, %v856
    %v859 = vunpack.c.l.s4 1934713408
    %v860 = vunpack.c.0.s8 %v859
    %v861 = vperm.slane %v855, %v860
    %v863 = vunpack.c.l.s4 1934713408
    %v864 = vunpack.c.0.s8 %v863
    %v865 = vperm.slane %v857, %v864
    %v866 = vrot.slane %v849, 4
    %v867 = vsel %vm330, 0.0, %v866
    %v868 = vrot.slane %v853, 4
    %v869 = vsel %vm330, 0.0, %v868
    %v870 = vrot.slane %v861, 4
    %v871 = vsel %vm330, 0.0, %v870
    %v872 = vrot.slane %v865, 4
    %v873 = vsel %vm330, 0.0, %v872
    %v874 = vrot.slane %v805, 4
    %v875 = vsel %vm330, %v874, %v797
    %v876 = vrot.slane %v797, 4
    %v877 = vsel %vm330, %v805, %v876
    %v879 = vunpack.c.l.s4 1983009808
    %v880 = vunpack.c.0.s8 %v879
    %v881 = vperm.slane %v875, %v880
    %v883 = vunpack.c.l.s4 1983009808
    %v884 = vunpack.c.0.s8 %v883
    %v885 = vperm.slane %v877, %v884
    %v886 = vrot.slane %v809, 4
    %v887 = vsel %vm330, %v886, %v801
    %v888 = vrot.slane %v801, 4
    %v889 = vsel %vm330, %v809, %v888
    %v891 = vunpack.c.l.s4 1983009808
    %v892 = vunpack.c.0.s8 %v891
    %v893 = vperm.slane %v887, %v892
    %v895 = vunpack.c.l.s4 1983009808
    %v896 = vunpack.c.0.s8 %v895
    %v897 = vperm.slane %v889, %v896
    %v898 = vrot.slane %v893, 4
    %v899 = vsel %vm330, %v898, %v881
    %v900 = vrot.slane %v881, 4
    %v901 = vsel %vm330, %v893, %v900
    %v903 = vunpack.c.l.s4 1934713408
    %v904 = vunpack.c.0.s8 %v903
    %v905 = vperm.slane %v899, %v904
    %v907 = vunpack.c.l.s4 1934713408
    %v908 = vunpack.c.0.s8 %v907
    %v909 = vperm.slane %v901, %v908
    %v910 = vrot.slane %v897, 4
    %v911 = vsel %vm330, %v910, %v885
    %v912 = vrot.slane %v885, 4
    %v913 = vsel %vm330, %v897, %v912
    %v915 = vunpack.c.l.s4 1934713408
    %v916 = vunpack.c.0.s8 %v915
    %v917 = vperm.slane %v911, %v916
    %v919 = vunpack.c.l.s4 1934713408
    %v920 = vunpack.c.0.s8 %v919
    %v921 = vperm.slane %v913, %v920
    %v922 = vrot.slane %v905, 4
    %v923 = vsel %vm330, 0.0, %v922
    %v924 = vrot.slane %v909, 4
    %v925 = vsel %vm330, 0.0, %v924
    %v926 = vrot.slane %v917, 4
    %v927 = vsel %vm330, 0.0, %v926
    %v928 = vrot.slane %v921, 4
    %v929 = vsel %vm330, 0.0, %v928
    %v930 = vsel %vm330, %v868, %v849
    %v932 = vunpack.c.l.s4 1983009808
    %v933 = vunpack.c.0.s8 %v932
    %v934 = vperm.slane %v930, %v933
    %v935 = vrot.slane %v869, 4
    %v936 = vsel %vm330, %v935, %v867
    %v938 = vunpack.c.l.s4 1983009808
    %v939 = vunpack.c.0.s8 %v938
    %v940 = vperm.slane %v936, %v939
    %v941 = vsel %vm330, %v872, %v861
    %v943 = vunpack.c.l.s4 1983009808
    %v944 = vunpack.c.0.s8 %v943
    %v945 = vperm.slane %v941, %v944
    %v946 = vrot.slane %v873, 4
    %v947 = vsel %vm330, %v946, %v871
    %v949 = vunpack.c.l.s4 1983009808
    %v950 = vunpack.c.0.s8 %v949
    %v951 = vperm.slane %v947, %v950
    %v952 = vrot.slane %v940, 4
    %v953 = vsel %vm330, %v952, %v934
    %v954 = vrot.slane %v934, 4
    %v955 = vsel %vm330, %v940, %v954
    %v957 = vunpack.c.l.s4 1934713408
    %v958 = vunpack.c.0.s8 %v957
    %v959 = vperm.slane %v953, %v958
    %v961 = vunpack.c.l.s4 1934713408
    %v962 = vunpack.c.0.s8 %v961
    %v963 = vperm.slane %v955, %v962
    %v964 = vrot.slane %v951, 4
    %v965 = vsel %vm330, %v964, %v945
    %v966 = vrot.slane %v945, 4
    %v967 = vsel %vm330, %v951, %v966
    %v969 = vunpack.c.l.s4 1934713408
    %v970 = vunpack.c.0.s8 %v969
    %v971 = vperm.slane %v965, %v970
    %v973 = vunpack.c.l.s4 1934713408
    %v974 = vunpack.c.0.s8 %v973
    %v975 = vperm.slane %v967, %v974
    %v976 = vrot.slane %v971, 4
    %v977 = vsel %vm330, %v976, %v959
    %v978 = vrot.slane %v959, 4
    %v979 = vsel %vm330, %v971, %v978
    %v980 = vrot.slane %v975, 4
    %v981 = vsel %vm330, %v980, %v963
    %v982 = vrot.slane %v963, 4
    %v983 = vsel %vm330, %v975, %v982
    %v984 = vsel %vm330, %v924, %v905
    %v986 = vunpack.c.l.s4 1983009808
    %v987 = vunpack.c.0.s8 %v986
    %v988 = vperm.slane %v984, %v987
    %v989 = vrot.slane %v925, 4
    %v990 = vsel %vm330, %v989, %v923
    %v992 = vunpack.c.l.s4 1983009808
    %v993 = vunpack.c.0.s8 %v992
    %v994 = vperm.slane %v990, %v993
    %v995 = vsel %vm330, %v928, %v917
    %v997 = vunpack.c.l.s4 1983009808
    %v998 = vunpack.c.0.s8 %v997
    %v999 = vperm.slane %v995, %v998
    %v1000 = vrot.slane %v929, 4
    %v1001 = vsel %vm330, %v1000, %v927
    %v1003 = vunpack.c.l.s4 1983009808
    %v1004 = vunpack.c.0.s8 %v1003
    %v1005 = vperm.slane %v1001, %v1004
    %v1006 = vrot.slane %v994, 4
    %v1007 = vsel %vm330, %v1006, %v988
    %v1008 = vrot.slane %v988, 4
    %v1009 = vsel %vm330, %v994, %v1008
    %v1011 = vunpack.c.l.s4 1934713408
    %v1012 = vunpack.c.0.s8 %v1011
    %v1013 = vperm.slane %v1007, %v1012
    %v1015 = vunpack.c.l.s4 1934713408
    %v1016 = vunpack.c.0.s8 %v1015
    %v1017 = vperm.slane %v1009, %v1016
    %v1018 = vrot.slane %v1005, 4
    %v1019 = vsel %vm330, %v1018, %v999
    %v1020 = vrot.slane %v999, 4
    %v1021 = vsel %vm330, %v1005, %v1020
    %v1023 = vunpack.c.l.s4 1934713408
    %v1024 = vunpack.c.0.s8 %v1023
    %v1025 = vperm.slane %v1019, %v1024
    %v1027 = vunpack.c.l.s4 1934713408
    %v1028 = vunpack.c.0.s8 %v1027
    %v1029 = vperm.slane %v1021, %v1028
    %v1030 = vrot.slane %v1025, 4
    %v1031 = vsel %vm330, %v1030, %v1013
    %v1032 = vrot.slane %v1013, 4
    %v1033 = vsel %vm330, %v1025, %v1032
    %v1034 = vrot.slane %v1029, 4
    %v1035 = vsel %vm330, %v1034, %v1017
    %v1036 = vrot.slane %v1017, 4
    %v1037 = vsel %vm330, %v1029, %v1036
    %v1038 = vpack.c.bf16 %v489, %v489
    %v1039 = vpack.c.bf16 %v491, %v491
    %v1040 = vpack.c.bf16 %v493, %v493
    %v1041 = vpack.c.bf16 %v495, %v495
    %v1042 = vpack.c.bf16 %v543, %v543
    %v1043 = vpack.c.bf16 %v545, %v545
    %v1044 = vpack.c.bf16 %v547, %v547
    %v1045 = vpack.c.bf16 %v549, %v549
    %v1046 = vpack.c.bf16 %v733, %v733
    %v1047 = vpack.c.bf16 %v735, %v735
    %v1048 = vpack.c.bf16 %v737, %v737
    %v1049 = vpack.c.bf16 %v739, %v739
    %v1050 = vpack.c.bf16 %v787, %v787
    %v1051 = vpack.c.bf16 %v789, %v789
    %v1052 = vpack.c.bf16 %v791, %v791
    %v1053 = vpack.c.bf16 %v793, %v793
    %vm1054 = vcmask 64512
    %v1056 = vsel %vm1054, %v1038, 0
    %v1059 = vsel %vm1054, %v1046, 0
    %1061 = vmatpush.bf16.xpose.msra.mxu0 0
    %1062 = vmatpush.bf16.xpose.msra.mxu0 0
    %1063 = vmatpush.bf16.xpose.msra.mxu0 0
    %1064 = vmatpush.bf16.xpose.msra.mxu0 0
    %1065 = vmatpush.bf16.xpose.msra.mxu0 0
    %1066 = vmatpush.bf16.xpose.msra.mxu0 0
    %1067 = vmatpush.bf16.xpose.msra.mxu0 0
    %1068 = vmatpush.bf16.xpose.msra.mxu0 %v1059
    %1069 = vmatmul.bf16.gmra.mxu0 %v1056
    %v1070 = vpop.f32.mrf.mxu0
    %v1071 = vadd.f32 0.0, %v1070
    %v1072 = vpop.f32.mrf.mxu0
    %1073 = vdwg.mxu0
    %v1075 = vsel %vm1054, %v1039, 0
    %v1078 = vsel %vm1054, %v1047, 0
    %1080 = vmatpush.bf16.xpose.msra.mxu0 0
    %1081 = vmatpush.bf16.xpose.msra.mxu0 0
    %1082 = vmatpush.bf16.xpose.msra.mxu0 0
    %1083 = vmatpush.bf16.xpose.msra.mxu0 0
    %1084 = vmatpush.bf16.xpose.msra.mxu0 0
    %1085 = vmatpush.bf16.xpose.msra.mxu0 0
    %1086 = vmatpush.bf16.xpose.msra.mxu0 0
    %1087 = vmatpush.bf16.xpose.msra.mxu0 %v1078
    %1088 = vmatmul.bf16.gmra.mxu0 %v1075
    %v1089 = vpop.f32.mrf.mxu0
    %v1090 = vadd.f32 0.0, %v1089
    %v1091 = vpop.f32.mrf.mxu0
    %1092 = vdwg.mxu0
    %v1094 = vsel %vm1054, %v1040, 0
    %v1097 = vsel %vm1054, %v1048, 0
    %1099 = vmatpush.bf16.xpose.msra.mxu0 0
    %1100 = vmatpush.bf16.xpose.msra.mxu0 0
    %1101 = vmatpush.bf16.xpose.msra.mxu0 0
    %1102 = vmatpush.bf16.xpose.msra.mxu0 0
    %1103 = vmatpush.bf16.xpose.msra.mxu0 0
    %1104 = vmatpush.bf16.xpose.msra.mxu0 0
    %1105 = vmatpush.bf16.xpose.msra.mxu0 0
    %1106 = vmatpush.bf16.xpose.msra.mxu0 %v1097
    %1107 = vmatmul.bf16.gmra.mxu0 %v1094
    %v1108 = vpop.f32.mrf.mxu0
    %v1109 = vadd.f32 0.0, %v1108
    %v1110 = vpop.f32.mrf.mxu0
    %1111 = vdwg.mxu0
    %v1113 = vsel %vm1054, %v1041, 0
    %v1116 = vsel %vm1054, %v1049, 0
    %1118 = vmatpush.bf16.xpose.msra.mxu0 0
    %1119 = vmatpush.bf16.xpose.msra.mxu0 0
    %1120 = vmatpush.bf16.xpose.msra.mxu0 0
    %1121 = vmatpush.bf16.xpose.msra.mxu0 0
    %1122 = vmatpush.bf16.xpose.msra.mxu0 0
    %1123 = vmatpush.bf16.xpose.msra.mxu0 0
    %1124 = vmatpush.bf16.xpose.msra.mxu0 0
    %1125 = vmatpush.bf16.xpose.msra.mxu0 %v1116
    %1126 = vmatmul.bf16.gmra.mxu0 %v1113
    %v1127 = vpop.f32.mrf.mxu0
    %v1128 = vadd.f32 0.0, %v1127
    %v1129 = vpop.f32.mrf.mxu0
    %1130 = vdwg.mxu0
    %v1132 = vsel %vm1054, %v1042, 0
    %v1135 = vsel %vm1054, %v1050, 0
    %1137 = vmatpush.bf16.xpose.msra.mxu0 0
    %1138 = vmatpush.bf16.xpose.msra.mxu0 0
    %1139 = vmatpush.bf16.xpose.msra.mxu0 0
    %1140 = vmatpush.bf16.xpose.msra.mxu0 0
    %1141 = vmatpush.bf16.xpose.msra.mxu0 0
    %1142 = vmatpush.bf16.xpose.msra.mxu0 0
    %1143 = vmatpush.bf16.xpose.msra.mxu0 0
    %1144 = vmatpush.bf16.xpose.msra.mxu0 %v1135
    %1145 = vmatmul.bf16.gmra.mxu0 %v1132
    %v1146 = vpop.f32.mrf.mxu0
    %v1147 = vadd.f32 0.0, %v1146
    %v1148 = vpop.f32.mrf.mxu0
    %1149 = vdwg.mxu0
    %v1151 = vsel %vm1054, %v1043, 0
    %v1154 = vsel %vm1054, %v1051, 0
    %1156 = vmatpush.bf16.xpose.msra.mxu0 0
    %1157 = vmatpush.bf16.xpose.msra.mxu0 0
    %1158 = vmatpush.bf16.xpose.msra.mxu0 0
    %1159 = vmatpush.bf16.xpose.msra.mxu0 0
    %1160 = vmatpush.bf16.xpose.msra.mxu0 0
    %1161 = vmatpush.bf16.xpose.msra.mxu0 0
    %1162 = vmatpush.bf16.xpose.msra.mxu0 0
    %1163 = vmatpush.bf16.xpose.msra.mxu0 %v1154
    %1164 = vmatmul.bf16.gmra.mxu0 %v1151
    %v1165 = vpop.f32.mrf.mxu0
    %v1166 = vadd.f32 0.0, %v1165
    %v1167 = vpop.f32.mrf.mxu0
    %1168 = vdwg.mxu0
    %v1170 = vsel %vm1054, %v1044, 0
    %v1173 = vsel %vm1054, %v1052, 0
    %1175 = vmatpush.bf16.xpose.msra.mxu0 0
    %1176 = vmatpush.bf16.xpose.msra.mxu0 0
    %1177 = vmatpush.bf16.xpose.msra.mxu0 0
    %1178 = vmatpush.bf16.xpose.msra.mxu0 0
    %1179 = vmatpush.bf16.xpose.msra.mxu0 0
    %1180 = vmatpush.bf16.xpose.msra.mxu0 0
    %1181 = vmatpush.bf16.xpose.msra.mxu0 0
    %1182 = vmatpush.bf16.xpose.msra.mxu0 %v1173
    %1183 = vmatmul.bf16.gmra.mxu0 %v1170
    %v1184 = vpop.f32.mrf.mxu0
    %v1185 = vadd.f32 0.0, %v1184
    %v1186 = vpop.f32.mrf.mxu0
    %1187 = vdwg.mxu0
    %v1189 = vsel %vm1054, %v1045, 0
    %v1192 = vsel %vm1054, %v1053, 0
    %1194 = vmatpush.bf16.xpose.msra.mxu0 0
    %1195 = vmatpush.bf16.xpose.msra.mxu0 0
    %1196 = vmatpush.bf16.xpose.msra.mxu0 0
    %1197 = vmatpush.bf16.xpose.msra.mxu0 0
    %1198 = vmatpush.bf16.xpose.msra.mxu0 0
    %1199 = vmatpush.bf16.xpose.msra.mxu0 0
    %1200 = vmatpush.bf16.xpose.msra.mxu0 0
    %1201 = vmatpush.bf16.xpose.msra.mxu0 %v1192
    %1202 = vmatmul.bf16.gmra.mxu0 %v1189
    %v1203 = vpop.f32.mrf.mxu0
    %v1204 = vadd.f32 0.0, %v1203
    %v1205 = vpop.f32.mrf.mxu0
    %1206 = vdwg.mxu0
    %v1207 = vmul.f32 %v1071, 0.00018395077
    %v1208 = vmul.f32 %v1090, 0.00018395077
    %v1209 = vmul.f32 %v1109, 0.00018395077
    %v1210 = vmul.f32 %v1128, 0.00018395077
    %v1211 = vmul.f32 %v1147, 0.00018395077
    %v1212 = vmul.f32 %v1166, 0.00018395077
    %v1213 = vmul.f32 %v1185, 0.00018395077
    %v1214 = vmul.f32 %v1204, 0.00018395077
    %v1215 = vadd.f32 %v1207, %v199
    %v1216 = vadd.f32 %v1208, %v199
    %v1217 = vadd.f32 %v1209, %v199
    %v1218 = vadd.f32 %v1210, %v199
    %v1219 = vadd.f32 %v1211, %v199
    %v1220 = vadd.f32 %v1212, %v199
    %v1221 = vadd.f32 %v1213, %v199
    %v1222 = vadd.f32 %v1214, %v199
    %v1223 = vsel %vm1054, %v1215, -inf
    %1224 = vmax.xlane.f32.xlu0 %v1223
    %v1225 = vpop.xlane.xlu0 %1224
    %v1226 = vsel %vm1054, %v1216, -inf
    %1227 = vmax.xlane.f32.xlu0 %v1226
    %v1228 = vpop.xlane.xlu0 %1227
    %v1229 = vsel %vm1054, %v1217, -inf
    %1230 = vmax.xlane.f32.xlu0 %v1229
    %v1231 = vpop.xlane.xlu0 %1230
    %v1232 = vsel %vm1054, %v1218, -inf
    %1233 = vmax.xlane.f32.xlu0 %v1232
    %v1234 = vpop.xlane.xlu0 %1233
    %v1235 = vsel %vm1054, %v1219, -inf
    %1236 = vmax.xlane.f32.xlu0 %v1235
    %v1237 = vpop.xlane.xlu0 %1236
    %v1238 = vsel %vm1054, %v1220, -inf
    %1239 = vmax.xlane.f32.xlu0 %v1238
    %v1240 = vpop.xlane.xlu0 %1239
    %v1241 = vsel %vm1054, %v1221, -inf
    %1242 = vmax.xlane.f32.xlu0 %v1241
    %v1243 = vpop.xlane.xlu0 %1242
    %v1244 = vsel %vm1054, %v1222, -inf
    %1245 = vmax.xlane.f32.xlu0 %v1244
    %v1246 = vpop.xlane.xlu0 %1245
    %v1247 = vsub.f32 %v1215, %v1225
    %v1248 = vsub.f32 %v1216, %v1228
    %v1249 = vsub.f32 %v1217, %v1231
    %v1250 = vsub.f32 %v1218, %v1234
    %v1251 = vsub.f32 %v1219, %v1237
    %v1252 = vsub.f32 %v1220, %v1240
    %v1253 = vsub.f32 %v1221, %v1243
    %v1254 = vsub.f32 %v1222, %v1246
    %v1255 = vmul.f32 %v1247, 1.442695
    %v1256 = vpow.pop %v1255
    %v1257 = vmul.f32 %v1248, 1.442695
    %v1258 = vpow.pop %v1257
    %v1259 = vmul.f32 %v1249, 1.442695
    %v1260 = vpow.pop %v1259
    %v1261 = vmul.f32 %v1250, 1.442695
    %v1262 = vpow.pop %v1261
    %v1263 = vmul.f32 %v1251, 1.442695
    %v1264 = vpow.pop %v1263
    %v1265 = vmul.f32 %v1252, 1.442695
    %v1266 = vpow.pop %v1265
    %v1267 = vmul.f32 %v1253, 1.442695
    %v1268 = vpow.pop %v1267
    %v1269 = vmul.f32 %v1254, 1.442695
    %v1270 = vpow.pop %v1269
    %v1271 = vsel %vm1054, %v1256, 0.0
    %1272 = vadd.xlane.f32.xlu0 %v1271
    %v1273 = vpop.xlane.xlu0 %1272
    %v1274 = vsel %vm1054, %v1258, 0.0
    %1275 = vadd.xlane.f32.xlu0 %v1274
    %v1276 = vpop.xlane.xlu0 %1275
    %v1277 = vsel %vm1054, %v1260, 0.0
    %1278 = vadd.xlane.f32.xlu0 %v1277
    %v1279 = vpop.xlane.xlu0 %1278
    %v1280 = vsel %vm1054, %v1262, 0.0
    %1281 = vadd.xlane.f32.xlu0 %v1280
    %v1282 = vpop.xlane.xlu0 %1281
    %v1283 = vsel %vm1054, %v1264, 0.0
    %1284 = vadd.xlane.f32.xlu0 %v1283
    %v1285 = vpop.xlane.xlu0 %1284
    %v1286 = vsel %vm1054, %v1266, 0.0
    %1287 = vadd.xlane.f32.xlu0 %v1286
    %v1288 = vpop.xlane.xlu0 %1287
    %v1289 = vsel %vm1054, %v1268, 0.0
    %1290 = vadd.xlane.f32.xlu0 %v1289
    %v1291 = vpop.xlane.xlu0 %1290
    %v1292 = vsel %vm1054, %v1270, 0.0
    %1293 = vadd.xlane.f32.xlu0 %v1292
    %v1294 = vpop.xlane.xlu0 %1293
    %v1295 = vrcp.pop %v1273
    %v1296 = vmul.f32 %v1273, %v1295
    %v1297 = vsub.f32 1.0, %v1296
    %v1298 = vmul.f32 %v1295, %v1297
    %v1299 = vadd.f32 %v1295, %v1298
    %vm1300 = vweird.f32 %v1273
    %vm1301 = vweird.f32 %v1295
    %vm1302 = vmor %vm1300, %vm1301
    %v1303 = vsel %vm1302, %v1295, %v1299
    %v1304 = vand.u32 2147483647, %v1273
    %vm1305 = vcmp.eq.f32.partialorder %v1304, 8.507059e+37
    %v1306 = vand.u32 %v1273, 2147483648
    %v1307 = vor.u32 1.1754944e-38, %v1306
    %v1308 = vsel %vm1305, %v1307, %v1303
    %v1309 = vmul.f32 %v1256, %v1308
    %v1310 = vrcp.pop %v1276
    %v1311 = vmul.f32 %v1276, %v1310
    %v1312 = vsub.f32 1.0, %v1311
    %v1313 = vmul.f32 %v1310, %v1312
    %v1314 = vadd.f32 %v1310, %v1313
    %vm1315 = vweird.f32 %v1276
    %vm1316 = vweird.f32 %v1310
    %vm1317 = vmor %vm1315, %vm1316
    %v1318 = vsel %vm1317, %v1310, %v1314
    %v1319 = vand.u32 2147483647, %v1276
    %vm1320 = vcmp.eq.f32.partialorder %v1319, 8.507059e+37
    %v1321 = vand.u32 %v1276, 2147483648
    %v1322 = vor.u32 1.1754944e-38, %v1321
    %v1323 = vsel %vm1320, %v1322, %v1318
    %v1324 = vmul.f32 %v1258, %v1323
    %v1325 = vrcp.pop %v1279
    %v1326 = vmul.f32 %v1279, %v1325
    %v1327 = vsub.f32 1.0, %v1326
    %v1328 = vmul.f32 %v1325, %v1327
    %v1329 = vadd.f32 %v1325, %v1328
    %vm1330 = vweird.f32 %v1279
    %vm1331 = vweird.f32 %v1325
    %vm1332 = vmor %vm1330, %vm1331
    %v1333 = vsel %vm1332, %v1325, %v1329
    %v1334 = vand.u32 2147483647, %v1279
    %vm1335 = vcmp.eq.f32.partialorder %v1334, 8.507059e+37
    %v1336 = vand.u32 %v1279, 2147483648
    %v1337 = vor.u32 1.1754944e-38, %v1336
    %v1338 = vsel %vm1335, %v1337, %v1333
    %v1339 = vmul.f32 %v1260, %v1338
    %v1340 = vrcp.pop %v1282
    %v1341 = vmul.f32 %v1282, %v1340
    %v1342 = vsub.f32 1.0, %v1341
    %v1343 = vmul.f32 %v1340, %v1342
    %v1344 = vadd.f32 %v1340, %v1343
    %vm1345 = vweird.f32 %v1282
    %vm1346 = vweird.f32 %v1340
    %vm1347 = vmor %vm1345, %vm1346
    %v1348 = vsel %vm1347, %v1340, %v1344
    %v1349 = vand.u32 2147483647, %v1282
    %vm1350 = vcmp.eq.f32.partialorder %v1349, 8.507059e+37
    %v1351 = vand.u32 %v1282, 2147483648
    %v1352 = vor.u32 1.1754944e-38, %v1351
    %v1353 = vsel %vm1350, %v1352, %v1348
    %v1354 = vmul.f32 %v1262, %v1353
    %v1355 = vrcp.pop %v1285
    %v1356 = vmul.f32 %v1285, %v1355
    %v1357 = vsub.f32 1.0, %v1356
    %v1358 = vmul.f32 %v1355, %v1357
    %v1359 = vadd.f32 %v1355, %v1358
    %vm1360 = vweird.f32 %v1285
    %vm1361 = vweird.f32 %v1355
    %vm1362 = vmor %vm1360, %vm1361
    %v1363 = vsel %vm1362, %v1355, %v1359
    %v1364 = vand.u32 2147483647, %v1285
    %vm1365 = vcmp.eq.f32.partialorder %v1364, 8.507059e+37
    %v1366 = vand.u32 %v1285, 2147483648
    %v1367 = vor.u32 1.1754944e-38, %v1366
    %v1368 = vsel %vm1365, %v1367, %v1363
    %v1369 = vmul.f32 %v1264, %v1368
    %v1370 = vrcp.pop %v1288
    %v1371 = vmul.f32 %v1288, %v1370
    %v1372 = vsub.f32 1.0, %v1371
    %v1373 = vmul.f32 %v1370, %v1372
    %v1374 = vadd.f32 %v1370, %v1373
    %vm1375 = vweird.f32 %v1288
    %vm1376 = vweird.f32 %v1370
    %vm1377 = vmor %vm1375, %vm1376
    %v1378 = vsel %vm1377, %v1370, %v1374
    %v1379 = vand.u32 2147483647, %v1288
    %vm1380 = vcmp.eq.f32.partialorder %v1379, 8.507059e+37
    %v1381 = vand.u32 %v1288, 2147483648
    %v1382 = vor.u32 1.1754944e-38, %v1381
    %v1383 = vsel %vm1380, %v1382, %v1378
    %v1384 = vmul.f32 %v1266, %v1383
    %v1385 = vrcp.pop %v1291
    %v1386 = vmul.f32 %v1291, %v1385
    %v1387 = vsub.f32 1.0, %v1386
    %v1388 = vmul.f32 %v1385, %v1387
    %v1389 = vadd.f32 %v1385, %v1388
    %vm1390 = vweird.f32 %v1291
    %vm1391 = vweird.f32 %v1385
    %vm1392 = vmor %vm1390, %vm1391
    %v1393 = vsel %vm1392, %v1385, %v1389
    %v1394 = vand.u32 2147483647, %v1291
    %vm1395 = vcmp.eq.f32.partialorder %v1394, 8.507059e+37
    %v1396 = vand.u32 %v1291, 2147483648
    %v1397 = vor.u32 1.1754944e-38, %v1396
    %v1398 = vsel %vm1395, %v1397, %v1393
    %v1399 = vmul.f32 %v1268, %v1398
    %v1400 = vrcp.pop %v1294
    %v1401 = vmul.f32 %v1294, %v1400
    %v1402 = vsub.f32 1.0, %v1401
    %v1403 = vmul.f32 %v1400, %v1402
    %v1404 = vadd.f32 %v1400, %v1403
    %vm1405 = vweird.f32 %v1294
    %vm1406 = vweird.f32 %v1400
    %vm1407 = vmor %vm1405, %vm1406
    %v1408 = vsel %vm1407, %v1400, %v1404
    %v1409 = vand.u32 2147483647, %v1294
    %vm1410 = vcmp.eq.f32.partialorder %v1409, 8.507059e+37
    %v1411 = vand.u32 %v1294, 2147483648
    %v1412 = vor.u32 1.1754944e-38, %v1411
    %v1413 = vsel %vm1410, %v1412, %v1408
    %v1414 = vmul.f32 %v1270, %v1413
    %v1415 = vmax.f32 %v1309, 0.0
    %v1416 = vmax.f32 %v1324, 0.0
    %v1417 = vmax.f32 %v1339, 0.0
    %v1418 = vmax.f32 %v1354, 0.0
    %v1419 = vmax.f32 %v1369, 0.0
    %v1420 = vmax.f32 %v1384, 0.0
    %v1421 = vmax.f32 %v1399, 0.0
    %v1422 = vmax.f32 %v1414, 0.0
    %v1423 = vmin.f32 %v1415, 8.0
    %v1424 = vmin.f32 %v1416, 8.0
    %v1425 = vmin.f32 %v1417, 8.0
    %v1426 = vmin.f32 %v1418, 8.0
    %v1427 = vmin.f32 %v1419, 8.0
    %v1428 = vmin.f32 %v1420, 8.0
    %v1429 = vmin.f32 %v1421, 8.0
    %v1430 = vmin.f32 %v1422, 8.0
    %v1431 = vpack.c.bf16 %v1423, %v1423
    %v1432 = vpack.c.bf16 %v1424, %v1424
    %v1433 = vpack.c.bf16 %v1425, %v1425
    %v1434 = vpack.c.bf16 %v1426, %v1426
    %v1435 = vpack.c.bf16 %v1427, %v1427
    %v1436 = vpack.c.bf16 %v1428, %v1428
    %v1437 = vpack.c.bf16 %v1429, %v1429
    %v1438 = vpack.c.bf16 %v1430, %v1430
    %v1439 = vpack.c.bf16 %v977, %v977
    %v1440 = vpack.c.bf16 %v979, %v979
    %v1441 = vpack.c.bf16 %v981, %v981
    %v1442 = vpack.c.bf16 %v983, %v983
    %v1443 = vpack.c.bf16 %v1031, %v1031
    %v1444 = vpack.c.bf16 %v1033, %v1033
    %v1445 = vpack.c.bf16 %v1035, %v1035
    %v1446 = vpack.c.bf16 %v1037, %v1037
    %v1448 = vsel %vm1054, %v1431, 0
    %vm1450 = vcmask 1043456
    %v1452 = vsel %vm1450, %v1439, 0
    %1454 = vmatpush.bf16.msra.mxu0 0
    %1455 = vmatpush.bf16.msra.mxu0 0
    %1456 = vmatpush.bf16.msra.mxu0 0
    %1457 = vmatpush.bf16.msra.mxu0 0
    %1458 = vmatpush.bf16.msra.mxu0 0
    %1459 = vmatpush.bf16.msra.mxu0 0
    %1460 = vmatpush.bf16.msra.mxu0 0
    %1461 = vmatpush.bf16.msra.mxu0 %v1452
    %1462 = vmatmul.bf16.gmra.mxu0 %v1448
    %v1463 = vpop.f32.mrf.mxu0
    %v1464 = vadd.f32 0.0, %v1463
    %v1465 = vpop.f32.mrf.mxu0
    %1466 = vdwg.mxu0
    %v1468 = vsel %vm1054, %v1432, 0
    %v1471 = vsel %vm1450, %v1440, 0
    %1473 = vmatpush.bf16.msra.mxu0 0
    %1474 = vmatpush.bf16.msra.mxu0 0
    %1475 = vmatpush.bf16.msra.mxu0 0
    %1476 = vmatpush.bf16.msra.mxu0 0
    %1477 = vmatpush.bf16.msra.mxu0 0
    %1478 = vmatpush.bf16.msra.mxu0 0
    %1479 = vmatpush.bf16.msra.mxu0 0
    %1480 = vmatpush.bf16.msra.mxu0 %v1471
    %1481 = vmatmul.bf16.gmra.mxu0 %v1468
    %v1482 = vpop.f32.mrf.mxu0
    %v1483 = vadd.f32 0.0, %v1482
    %v1484 = vpop.f32.mrf.mxu0
    %1485 = vdwg.mxu0
    %v1487 = vsel %vm1054, %v1433, 0
    %v1490 = vsel %vm1450, %v1441, 0
    %1492 = vmatpush.bf16.msra.mxu0 0
    %1493 = vmatpush.bf16.msra.mxu0 0
    %1494 = vmatpush.bf16.msra.mxu0 0
    %1495 = vmatpush.bf16.msra.mxu0 0
    %1496 = vmatpush.bf16.msra.mxu0 0
    %1497 = vmatpush.bf16.msra.mxu0 0
    %1498 = vmatpush.bf16.msra.mxu0 0
    %1499 = vmatpush.bf16.msra.mxu0 %v1490
    %1500 = vmatmul.bf16.gmra.mxu0 %v1487
    %v1501 = vpop.f32.mrf.mxu0
    %v1502 = vadd.f32 0.0, %v1501
    %v1503 = vpop.f32.mrf.mxu0
    %1504 = vdwg.mxu0
    %v1506 = vsel %vm1054, %v1434, 0
    %v1509 = vsel %vm1450, %v1442, 0
    %1511 = vmatpush.bf16.msra.mxu0 0
    %1512 = vmatpush.bf16.msra.mxu0 0
    %1513 = vmatpush.bf16.msra.mxu0 0
    %1514 = vmatpush.bf16.msra.mxu0 0
    %1515 = vmatpush.bf16.msra.mxu0 0
    %1516 = vmatpush.bf16.msra.mxu0 0
    %1517 = vmatpush.bf16.msra.mxu0 0
    %1518 = vmatpush.bf16.msra.mxu0 %v1509
    %1519 = vmatmul.bf16.gmra.mxu0 %v1506
    %v1520 = vpop.f32.mrf.mxu0
    %v1521 = vadd.f32 0.0, %v1520
    %v1522 = vpop.f32.mrf.mxu0
    %1523 = vdwg.mxu0
    %v1525 = vsel %vm1054, %v1435, 0
    %v1528 = vsel %vm1450, %v1443, 0
    %1530 = vmatpush.bf16.msra.mxu0 0
    %1531 = vmatpush.bf16.msra.mxu0 0
    %1532 = vmatpush.bf16.msra.mxu0 0
    %1533 = vmatpush.bf16.msra.mxu0 0
    %1534 = vmatpush.bf16.msra.mxu0 0
    %1535 = vmatpush.bf16.msra.mxu0 0
    %1536 = vmatpush.bf16.msra.mxu0 0
    %1537 = vmatpush.bf16.msra.mxu0 %v1528
    %1538 = vmatmul.bf16.gmra.mxu0 %v1525
    %v1539 = vpop.f32.mrf.mxu0
    %v1540 = vadd.f32 0.0, %v1539
    %v1541 = vpop.f32.mrf.mxu0
    %1542 = vdwg.mxu0
    %v1544 = vsel %vm1054, %v1436, 0
    %v1547 = vsel %vm1450, %v1444, 0
    %1549 = vmatpush.bf16.msra.mxu0 0
    %1550 = vmatpush.bf16.msra.mxu0 0
    %1551 = vmatpush.bf16.msra.mxu0 0
    %1552 = vmatpush.bf16.msra.mxu0 0
    %1553 = vmatpush.bf16.msra.mxu0 0
    %1554 = vmatpush.bf16.msra.mxu0 0
    %1555 = vmatpush.bf16.msra.mxu0 0
    %1556 = vmatpush.bf16.msra.mxu0 %v1547
    %1557 = vmatmul.bf16.gmra.mxu0 %v1544
    %v1558 = vpop.f32.mrf.mxu0
    %v1559 = vadd.f32 0.0, %v1558
    %v1560 = vpop.f32.mrf.mxu0
    %1561 = vdwg.mxu0
    %v1563 = vsel %vm1054, %v1437, 0
    %v1566 = vsel %vm1450, %v1445, 0
    %1568 = vmatpush.bf16.msra.mxu0 0
    %1569 = vmatpush.bf16.msra.mxu0 0
    %1570 = vmatpush.bf16.msra.mxu0 0
    %1571 = vmatpush.bf16.msra.mxu0 0
    %1572 = vmatpush.bf16.msra.mxu0 0
    %1573 = vmatpush.bf16.msra.mxu0 0
    %1574 = vmatpush.bf16.msra.mxu0 0
    %1575 = vmatpush.bf16.msra.mxu0 %v1566
    %1576 = vmatmul.bf16.gmra.mxu0 %v1563
    %v1577 = vpop.f32.mrf.mxu0
    %v1578 = vadd.f32 0.0, %v1577
    %v1579 = vpop.f32.mrf.mxu0
    %1580 = vdwg.mxu0
    %v1582 = vsel %vm1054, %v1438, 0
    %v1585 = vsel %vm1450, %v1446, 0
    %1587 = vmatpush.bf16.msra.mxu0 0
    %1588 = vmatpush.bf16.msra.mxu0 0
    %1589 = vmatpush.bf16.msra.mxu0 0
    %1590 = vmatpush.bf16.msra.mxu0 0
    %1591 = vmatpush.bf16.msra.mxu0 0
    %1592 = vmatpush.bf16.msra.mxu0 0
    %1593 = vmatpush.bf16.msra.mxu0 0
    %1594 = vmatpush.bf16.msra.mxu0 %v1585
    %1595 = vmatmul.bf16.gmra.mxu0 %v1582
    %v1596 = vpop.f32.mrf.mxu0
    %v1597 = vadd.f32 0.0, %v1596
    %v1598 = vpop.f32.mrf.mxu0
    %1599 = vdwg.mxu0
    %v1600 = vrot.slane %v1502, 4
    %v1601 = vsel %vm330, %v1600, %v1464
    %v1602 = vrot.slane %v1464, 4
    %v1603 = vsel %vm330, %v1502, %v1602
    %v1605 = vunpack.c.l.s4 1983009808
    %v1606 = vunpack.c.0.s8 %v1605
    %v1607 = vperm.slane %v1601, %v1606
    %v1609 = vunpack.c.l.s4 1983009808
    %v1610 = vunpack.c.0.s8 %v1609
    %v1611 = vperm.slane %v1603, %v1610
    %v1612 = vrot.slane %v1521, 4
    %v1613 = vsel %vm330, %v1612, %v1483
    %v1614 = vrot.slane %v1483, 4
    %v1615 = vsel %vm330, %v1521, %v1614
    %v1617 = vunpack.c.l.s4 1983009808
    %v1618 = vunpack.c.0.s8 %v1617
    %v1619 = vperm.slane %v1613, %v1618
    %v1621 = vunpack.c.l.s4 1983009808
    %v1622 = vunpack.c.0.s8 %v1621
    %v1623 = vperm.slane %v1615, %v1622
    %v1624 = vrot.slane %v1619, 4
    %v1625 = vsel %vm330, %v1624, %v1607
    %v1626 = vrot.slane %v1607, 4
    %v1627 = vsel %vm330, %v1619, %v1626
    %v1629 = vunpack.c.l.s4 1934713408
    %v1630 = vunpack.c.0.s8 %v1629
    %v1631 = vperm.slane %v1625, %v1630
    %v1633 = vunpack.c.l.s4 1934713408
    %v1634 = vunpack.c.0.s8 %v1633
    %v1635 = vperm.slane %v1627, %v1634
    %v1636 = vrot.slane %v1623, 4
    %v1637 = vsel %vm330, %v1636, %v1611
    %v1638 = vrot.slane %v1611, 4
    %v1639 = vsel %vm330, %v1623, %v1638
    %v1641 = vunpack.c.l.s4 1934713408
    %v1642 = vunpack.c.0.s8 %v1641
    %v1643 = vperm.slane %v1637, %v1642
    %v1645 = vunpack.c.l.s4 1934713408
    %v1646 = vunpack.c.0.s8 %v1645
    %v1647 = vperm.slane %v1639, %v1646
    %v1648 = vrot.slane %v1631, 4
    %v1649 = vsel %vm330, 0.0, %v1648
    %v1650 = vrot.slane %v1635, 4
    %v1651 = vsel %vm330, 0.0, %v1650
    %v1652 = vrot.slane %v1643, 4
    %v1653 = vsel %vm330, 0.0, %v1652
    %v1654 = vrot.slane %v1647, 4
    %v1655 = vsel %vm330, 0.0, %v1654
    %v1656 = vrot.slane %v1578, 4
    %v1657 = vsel %vm330, %v1656, %v1540
    %v1658 = vrot.slane %v1540, 4
    %v1659 = vsel %vm330, %v1578, %v1658
    %v1661 = vunpack.c.l.s4 1983009808
    %v1662 = vunpack.c.0.s8 %v1661
    %v1663 = vperm.slane %v1657, %v1662
    %v1665 = vunpack.c.l.s4 1983009808
    %v1666 = vunpack.c.0.s8 %v1665
    %v1667 = vperm.slane %v1659, %v1666
    %v1668 = vrot.slane %v1597, 4
    %v1669 = vsel %vm330, %v1668, %v1559
    %v1670 = vrot.slane %v1559, 4
    %v1671 = vsel %vm330, %v1597, %v1670
    %v1673 = vunpack.c.l.s4 1983009808
    %v1674 = vunpack.c.0.s8 %v1673
    %v1675 = vperm.slane %v1669, %v1674
    %v1677 = vunpack.c.l.s4 1983009808
    %v1678 = vunpack.c.0.s8 %v1677
    %v1679 = vperm.slane %v1671, %v1678
    %v1680 = vrot.slane %v1675, 4
    %v1681 = vsel %vm330, %v1680, %v1663
    %v1682 = vrot.slane %v1663, 4
    %v1683 = vsel %vm330, %v1675, %v1682
    %v1685 = vunpack.c.l.s4 1934713408
    %v1686 = vunpack.c.0.s8 %v1685
    %v1687 = vperm.slane %v1681, %v1686
    %v1689 = vunpack.c.l.s4 1934713408
    %v1690 = vunpack.c.0.s8 %v1689
    %v1691 = vperm.slane %v1683, %v1690
    %v1692 = vrot.slane %v1679, 4
    %v1693 = vsel %vm330, %v1692, %v1667
    %v1694 = vrot.slane %v1667, 4
    %v1695 = vsel %vm330, %v1679, %v1694
    %v1697 = vunpack.c.l.s4 1934713408
    %v1698 = vunpack.c.0.s8 %v1697
    %v1699 = vperm.slane %v1693, %v1698
    %v1701 = vunpack.c.l.s4 1934713408
    %v1702 = vunpack.c.0.s8 %v1701
    %v1703 = vperm.slane %v1695, %v1702
    %v1704 = vrot.slane %v1687, 4
    %v1705 = vsel %vm330, 0.0, %v1704
    %v1706 = vrot.slane %v1691, 4
    %v1707 = vsel %vm330, 0.0, %v1706
    %v1708 = vrot.slane %v1699, 4
    %v1709 = vsel %vm330, 0.0, %v1708
    %v1710 = vrot.slane %v1703, 4
    %v1711 = vsel %vm330, 0.0, %v1710
    %v1712 = vsel %vm330, %v1650, %v1631
    %v1714 = vunpack.c.l.s4 1983009808
    %v1715 = vunpack.c.0.s8 %v1714
    %v1716 = vperm.slane %v1712, %v1715
    %v1717 = vrot.slane %v1651, 4
    %v1718 = vsel %vm330, %v1717, %v1649
    %v1720 = vunpack.c.l.s4 1983009808
    %v1721 = vunpack.c.0.s8 %v1720
    %v1722 = vperm.slane %v1718, %v1721
    %v1723 = vsel %vm330, %v1654, %v1643
    %v1725 = vunpack.c.l.s4 1983009808
    %v1726 = vunpack.c.0.s8 %v1725
    %v1727 = vperm.slane %v1723, %v1726
    %v1728 = vrot.slane %v1655, 4
    %v1729 = vsel %vm330, %v1728, %v1653
    %v1731 = vunpack.c.l.s4 1983009808
    %v1732 = vunpack.c.0.s8 %v1731
    %v1733 = vperm.slane %v1729, %v1732
    %v1734 = vrot.slane %v1722, 4
    %v1735 = vsel %vm330, %v1734, %v1716
    %v1736 = vrot.slane %v1716, 4
    %v1737 = vsel %vm330, %v1722, %v1736
    %v1739 = vunpack.c.l.s4 1934713408
    %v1740 = vunpack.c.0.s8 %v1739
    %v1741 = vperm.slane %v1735, %v1740
    %v1743 = vunpack.c.l.s4 1934713408
    %v1744 = vunpack.c.0.s8 %v1743
    %v1745 = vperm.slane %v1737, %v1744
    %v1746 = vrot.slane %v1733, 4
    %v1747 = vsel %vm330, %v1746, %v1727
    %v1748 = vrot.slane %v1727, 4
    %v1749 = vsel %vm330, %v1733, %v1748
    %v1751 = vunpack.c.l.s4 1934713408
    %v1752 = vunpack.c.0.s8 %v1751
    %v1753 = vperm.slane %v1747, %v1752
    %v1755 = vunpack.c.l.s4 1934713408
    %v1756 = vunpack.c.0.s8 %v1755
    %v1757 = vperm.slane %v1749, %v1756
    %v1758 = vrot.slane %v1753, 4
    %v1759 = vsel %vm330, %v1758, %v1741
    %v1760 = vrot.slane %v1741, 4
    %v1761 = vsel %vm330, %v1753, %v1760
    %v1762 = vrot.slane %v1757, 4
    %v1763 = vsel %vm330, %v1762, %v1745
    %v1764 = vrot.slane %v1745, 4
    %v1765 = vsel %vm330, %v1757, %v1764
    %v1766 = vsel %vm330, %v1706, %v1687
    %v1768 = vunpack.c.l.s4 1983009808
    %v1769 = vunpack.c.0.s8 %v1768
    %v1770 = vperm.slane %v1766, %v1769
    %v1771 = vrot.slane %v1707, 4
    %v1772 = vsel %vm330, %v1771, %v1705
    %v1774 = vunpack.c.l.s4 1983009808
    %v1775 = vunpack.c.0.s8 %v1774
    %v1776 = vperm.slane %v1772, %v1775
    %v1777 = vsel %vm330, %v1710, %v1699
    %v1779 = vunpack.c.l.s4 1983009808
    %v1780 = vunpack.c.0.s8 %v1779
    %v1781 = vperm.slane %v1777, %v1780
    %v1782 = vrot.slane %v1711, 4
    %v1783 = vsel %vm330, %v1782, %v1709
    %v1785 = vunpack.c.l.s4 1983009808
    %v1786 = vunpack.c.0.s8 %v1785
    %v1787 = vperm.slane %v1783, %v1786
    %v1788 = vrot.slane %v1776, 4
    %v1789 = vsel %vm330, %v1788, %v1770
    %v1790 = vrot.slane %v1770, 4
    %v1791 = vsel %vm330, %v1776, %v1790
    %v1793 = vunpack.c.l.s4 1934713408
    %v1794 = vunpack.c.0.s8 %v1793
    %v1795 = vperm.slane %v1789, %v1794
    %v1797 = vunpack.c.l.s4 1934713408
    %v1798 = vunpack.c.0.s8 %v1797
    %v1799 = vperm.slane %v1791, %v1798
    %v1800 = vrot.slane %v1787, 4
    %v1801 = vsel %vm330, %v1800, %v1781
    %v1802 = vrot.slane %v1781, 4
    %v1803 = vsel %vm330, %v1787, %v1802
    %v1805 = vunpack.c.l.s4 1934713408
    %v1806 = vunpack.c.0.s8 %v1805
    %v1807 = vperm.slane %v1801, %v1806
    %v1809 = vunpack.c.l.s4 1934713408
    %v1810 = vunpack.c.0.s8 %v1809
    %v1811 = vperm.slane %v1803, %v1810
    %v1812 = vrot.slane %v1807, 4
    %v1813 = vsel %vm330, %v1812, %v1795
    %v1814 = vrot.slane %v1795, 4
    %v1815 = vsel %vm330, %v1807, %v1814
    %v1816 = vrot.slane %v1811, 4
    %v1817 = vsel %vm330, %v1816, %v1799
    %v1818 = vrot.slane %v1799, 4
    %v1819 = vsel %vm330, %v1811, %v1818
    %1822 = vrot.lane.b32.xlu0 %v1761, 8
    %v1823 = vpop.permute.xlu0 %1822
    %1824 = vrot.lane.b32.xlu0 %v1815, 8
    %v1825 = vpop.permute.xlu0 %1824
    %1830 = vrot.lane.b32.xlu0 %v1763, 16
    %v1831 = vpop.permute.xlu0 %1830
    %1832 = vrot.lane.b32.xlu0 %v1817, 16
    %v1833 = vpop.permute.xlu0 %1832
    %1838 = vrot.lane.b32.xlu0 %v1765, 24
    %v1839 = vpop.permute.xlu0 %1838
    %1840 = vrot.lane.b32.xlu0 %v1819, 24
    %v1841 = vpop.permute.xlu0 %1840
    %v1844 = vsel %vm1054, %v1759, %v1823
    %v1845 = vsel %vm1054, %v1813, %v1825
    %vm1846 = vcmask 130048
    %v1847 = vsel %vm1846, %v1844, %v1831
    %v1848 = vsel %vm1846, %v1845, %v1833
    %vm1849 = vcmask 195584
    %v1850 = vsel %vm1849, %v1847, %v1839
    %v1851 = vsel %vm1849, %v1848, %v1841
    %v1852 = vadd.f32 %v1850, 4.0
    %v1853 = vadd.f32 %v1851, 4.0
    %v1854 = vmul.f32 %v1852, 0.125
    %v1855 = vmul.f32 %v1853, 0.125
    %v1856 = vceil.f32 %v1854
    %v1857 = vceil.f32 %v1855
    %v1858 = vsub.f32 %v1856, 1.0
    %v1859 = vsub.f32 %v1857, 1.0
    %v1860 = vmax.f32 %v1858, 0.0
    %v1861 = vmax.f32 %v1859, 0.0
    %v1862 = vmin.f32 %v1860, 31.0
    %v1863 = vmin.f32 %v1861, 31.0
    %v1864 = vmul.f32 %v1862, 8.0
    %v1865 = vmul.f32 %v1863, 8.0
    %v1866 = vpack.c.bf16 %v1865, %v1864
    %v1867 = vld [vmem:[#allocation6] sm:$0xf]
    %v1868 = vld [vmem:[#allocation6 + $0x4] sm:$0xf]
    %v1869 = vld [vmem:[#allocation6 + $0x8] sm:$0xf]
    %v1870 = vld [vmem:[#allocation6 + $0xc] sm:$0xf]
    %v1875 = vunpack.c.l.b16 %v1867
    %v1876 = vunpack.c.l.b16 %v1868
    %v1877 = vunpack.c.l.b16 %v1869
    %v1878 = vunpack.c.l.b16 %v1870
    %v1879 = vpack.c.b16 %v1876, %v1875
    %v1880 = vpack.c.b16 %v1878, %v1877
    %v1884 = vsel %vm201, %v1866, 0
    %1886 = vmatpush.bf16.msra.mxu0 0
    %1887 = vmatpush.bf16.msra.mxu0 0
    %1888 = vmatpush.bf16.msra.mxu0 0
    %1889 = vmatpush.bf16.msra.mxu0 0
    %1890 = vmatpush.bf16.msra.mxu0 0
    %1891 = vmatpush.bf16.msra.mxu0 0
    %1892 = vmatpush.bf16.msra.mxu0 %v1880
    %1893 = vmatpush.bf16.msra.mxu0 %v1879
    %1894 = vmatmul.bf16.gmra.mxu0 %v1884
    %v1895 = vpop.f32.mrf.mxu0
    %v1896 = vadd.f32 4.0, %v1895
    %v1897 = vpop.f32.mrf.mxu0
    %v1898 = vadd.f32 4.0, %v1897
    %1899 = vdwg.mxu0
    %v1900 = vmul.f32 %v1896, 0.125
    %v1901 = vmul.f32 %v1898, 0.125
    %v1902 = vceil.f32 %v1900
    %v1903 = vceil.f32 %v1901
    %v1904 = vsub.f32 %v1902, 1.0
    %v1905 = vsub.f32 %v1903, 1.0
    %v1906 = vmax.f32 %v1904, 0.0
    %v1907 = vmax.f32 %v1905, 0.0
    %v1908 = vmin.f32 %v1906, 31.0
    %v1909 = vmin.f32 %v1907, 31.0
    %v1910 = vmul.f32 %v1908, 0.2580645
    %v1911 = vmul.f32 %v1909, 0.2580645
    %v1912 = vadd.f32 %v194, %v1910
    %v1913 = vadd.f32 %v195, %v1911
    %v1914 = vperm.slane %v200, 2
    %v1915 = vmul.f32 %v251, %v1914
    %v1916 = vmul.f32 %v252, %v1914
    %v1917 = vperm.slane %v200, 3
    %v1918 = vadd.f32 %v1915, %v1917
    %v1919 = vadd.f32 %v1916, %v1917
    %v1920 = vpack.c.bf16 %v1919, %v1918
    %v1921 = vld [vmem:[%s6] sm:$0xf]
    %v1922 = vld [vmem:[%s6 + $0x4] sm:$0xf]
    %v1923 = vld [vmem:[%s6 + $0x8] sm:$0xf]
    %v1924 = vld [vmem:[%s6 + $0xc] sm:$0xf]
    %v1929 = vunpack.c.l.b16 %v1921
    %v1930 = vunpack.c.l.b16 %v1922
    %v1931 = vunpack.c.l.b16 %v1923
    %v1932 = vunpack.c.l.b16 %v1924
    %v1933 = vpack.c.b16 %v1930, %v1929
    %v1934 = vpack.c.b16 %v1932, %v1931
    %v1938 = vsel %vm201, %v1920, 0
    %1940 = vmatpush.bf16.msra.mxu0 0
    %1941 = vmatpush.bf16.msra.mxu0 0
    %1942 = vmatpush.bf16.msra.mxu0 0
    %1943 = vmatpush.bf16.msra.mxu0 0
    %1944 = vmatpush.bf16.msra.mxu0 0
    %1945 = vmatpush.bf16.msra.mxu0 0
    %1946 = vmatpush.bf16.msra.mxu0 %v1934
    %1947 = vmatpush.bf16.msra.mxu0 %v1933
    %1948 = vmatmul.bf16.gmra.mxu0 %v1938
    %v1949 = vpop.f32.mrf.mxu0
    %v1950 = vadd.f32 0.0, %v1949
    %v1951 = vpop.f32.mrf.mxu0
    %v1952 = vadd.f32 0.0, %v1951
    %1953 = vdwg.mxu0
    %v1954 = vmul.f32 %v1950, 31.0
    %v1955 = vmul.f32 %v1952, 31.0
    %v1956 = vadd.f32 %v1954, 4.0
    %v1957 = vadd.f32 %v1955, 4.0
    %v1958 = vmul.f32 %v1956, 0.125
    %v1959 = vmul.f32 %v1957, 0.125
    %v1960 = vceil.f32 %v1958
    %v1961 = vceil.f32 %v1959
    %v1962 = vsub.f32 %v1960, 1.0
    %v1963 = vsub.f32 %v1961, 1.0
    %v1964 = vmax.f32 %v1962, 0.0
    %v1965 = vmax.f32 %v1963, 0.0
    %v1966 = vmin.f32 %v1964, 31.0
    %v1967 = vmin.f32 %v1965, 31.0
    %v1968 = vmul.f32 %v1966, 8.0
    %v1969 = vmul.f32 %v1967, 8.0
    %v1970 = vpack.c.bf16 %v1969, %v1968
    %v1971 = vld [vmem:[#allocation7] sm:$0xf]
    %v1972 = vld [vmem:[#allocation7 + $0x4] sm:$0xf]
    %v1973 = vld [vmem:[#allocation7 + $0x8] sm:$0xf]
    %v1974 = vld [vmem:[#allocation7 + $0xc] sm:$0xf]
    %v1975 = vld [vmem:[#allocation7 + $0x10] sm:$0xf]
    %v1976 = vld [vmem:[#allocation7 + $0x14] sm:$0xf]
    %v1977 = vld [vmem:[#allocation7 + $0x18] sm:$0xf]
    %v1978 = vld [vmem:[#allocation7 + $0x1c] sm:$0xf]
    %v1987 = vunpack.c.l.b16 %v1971
    %v1988 = vunpack.c.l.b16 %v1972
    %v1989 = vunpack.c.l.b16 %v1973
    %v1990 = vunpack.c.l.b16 %v1974
    %v1991 = vunpack.c.l.b16 %v1975
    %v1992 = vunpack.c.l.b16 %v1976
    %v1993 = vunpack.c.l.b16 %v1977
    %v1994 = vunpack.c.l.b16 %v1978
    %v1995 = vpack.c.b16 %v1988, %v1987
    %v1996 = vpack.c.b16 %v1990, %v1989
    %v1997 = vpack.c.b16 %v1992, %v1991
    %v1998 = vpack.c.b16 %v1994, %v1993
    %v2004 = vsel %vm162, %v1970, 0
    %2006 = vmatpush.bf16.msra.mxu0 0
    %2007 = vmatpush.bf16.msra.mxu0 0
    %2008 = vmatpush.bf16.msra.mxu0 0
    %2009 = vmatpush.bf16.msra.mxu0 0
    %2010 = vmatpush.bf16.msra.mxu0 %v1998
    %2011 = vmatpush.bf16.msra.mxu0 %v1997
    %2012 = vmatpush.bf16.msra.mxu0 %v1996
    %2013 = vmatpush.bf16.msra.mxu0 %v1995
    %2014 = vmatmul.bf16.gmra.mxu0 %v2004
    %v2015 = vpop.f32.mrf.mxu0
    %v2016 = vadd.f32 4.0, %v2015
    %v2017 = vpop.f32.mrf.mxu0
    %v2018 = vadd.f32 4.0, %v2017
    %2019 = vdwg.mxu0
    %v2020 = vmul.f32 %v2016, 0.125
    %v2021 = vmul.f32 %v2018, 0.125
    %v2022 = vceil.f32 %v2020
    %v2023 = vceil.f32 %v2021
    %v2024 = vsub.f32 %v2022, 1.0
    %v2025 = vsub.f32 %v2023, 1.0
    %v2026 = vmax.f32 %v2024, 0.0
    %v2027 = vmax.f32 %v2025, 0.0
    %v2028 = vmin.f32 %v2026, 31.0
    %v2029 = vmin.f32 %v2027, 31.0
    %v2030 = vmul.f32 %v2028, 0.2580645
    %v2031 = vmul.f32 %v2029, 0.2580645
    %v2032 = vadd.f32 %v1912, %v2030
    %v2033 = vadd.f32 %v1913, %v2031
    %s2034 = scalar_lea.vmem %s3, 4
    %v2035 = vld [vmem:[%s2034] sm:$0xf]
    %v2036 = vsel %vm201, %v2032, 0.0
    %2037 = vadd.xlane.f32.xlu0 %v2036
    %v2038 = vpop.xlane.xlu0 %2037
    %v2039 = vsel %vm201, %v2033, 0.0
    %2040 = vadd.xlane.f32.xlu0 %v2039
    %v2041 = vpop.xlane.xlu0 %2040
    %v2042 = vmul.f32 %v2038, %v214
    %v2043 = vmul.f32 %v2041, %v214
    %v2044 = vsub.f32 %v2032, %v2042
    %v2045 = vsub.f32 %v2033, %v2043
    %v2046 = vmul.f32 %v2044, %v2044
    %v2047 = vmul.f32 %v2045, %v2045
    %v2048 = vsel %vm201, %v2046, 0.0
    %2049 = vadd.xlane.f32.xlu0 %v2048
    %v2050 = vpop.xlane.xlu0 %2049
    %v2051 = vsel %vm201, %v2047, 0.0
    %2052 = vadd.xlane.f32.xlu0 %v2051
    %v2053 = vpop.xlane.xlu0 %2052
    %v2054 = vmul.f32 %v2050, %v214
    %v2055 = vmul.f32 %v2053, %v214
    %v2056 = vadd.f32 %v2054, 1e-05
    %v2057 = vadd.f32 %v2055, 1e-05
    %v2058 = vrsqrt.pop %v2056
    %v2059 = vmul.f32 %v2058, %v2056
    %v2060 = vmul.f32 %v2059, %v2058
    %v2061 = vmul.f32 0.5, %v2060
    %v2062 = vsub.f32 1.5, %v2061
    %v2063 = vmul.f32 %v2058, %v2062
    %vm2064 = vweird.f32 %v2056
    %vm2065 = vweird.f32 %v2058
    %vm2066 = vmor %vm2064, %vm2065
    %v2067 = vsel %vm2066, %v2058, %v2063
    %v2068 = vrsqrt.pop %v2057
    %v2069 = vmul.f32 %v2068, %v2057
    %v2070 = vmul.f32 %v2069, %v2068
    %v2071 = vmul.f32 0.5, %v2070
    %v2072 = vsub.f32 1.5, %v2071
    %v2073 = vmul.f32 %v2068, %v2072
    %vm2074 = vweird.f32 %v2057
    %vm2075 = vweird.f32 %v2068
    %vm2076 = vmor %vm2074, %vm2075
    %v2077 = vsel %vm2076, %v2068, %v2073
    %v2078 = vmul.f32 %v2044, %v2067
    %v2079 = vmul.f32 %v2045, %v2077
    %v2080 = vperm.slane %v2035, 0
    %v2081 = vmul.f32 %v2078, %v2080
    %v2082 = vmul.f32 %v2079, %v2080
    %v2083 = vperm.slane %v2035, 1
    %v2084 = vadd.f32 %v2081, %v2083
    %v2085 = vadd.f32 %v2082, %v2083
    %v2086 = vpack.c.bf16 %v2085, %v2084
    %s2087 = scalar_lea.vmem [#allocation4], 16
    %v2088 = vld [vmem:[%s2087] sm:$0xf]
    %v2089 = vld [vmem:[%s2087 + $0x4] sm:$0xf]
    %v2090 = vld [vmem:[%s2087 + $0x8] sm:$0xf]
    %v2091 = vld [vmem:[%s2087 + $0xc] sm:$0xf]
    %v2096 = vunpack.c.l.b16 %v2088
    %v2097 = vunpack.c.l.b16 %v2089
    %v2098 = vunpack.c.l.b16 %v2090
    %v2099 = vunpack.c.l.b16 %v2091
    %v2100 = vpack.c.b16 %v2097, %v2096
    %v2101 = vpack.c.b16 %v2099, %v2098
    %v2105 = vsel %vm201, %v2086, 0
    %2107 = vmatpush.bf16.msra.mxu0 0
    %2108 = vmatpush.bf16.msra.mxu0 0
    %2109 = vmatpush.bf16.msra.mxu0 0
    %2110 = vmatpush.bf16.msra.mxu0 0
    %2111 = vmatpush.bf16.msra.mxu0 0
    %2112 = vmatpush.bf16.msra.mxu0 0
    %2113 = vmatpush.bf16.msra.mxu0 %v2101
    %2114 = vmatpush.bf16.msra.mxu0 %v2100
    %2115 = vmatmul.bf16.gmra.mxu0 %v2105
    %v2116 = vpop.f32.mrf.mxu0
    %v2117 = vadd.f32 0.0, %v2116
    %v2118 = vpop.f32.mrf.mxu0
    %v2119 = vadd.f32 0.0, %v2118
    %2120 = vdwg.mxu0
    %v2121 = vmul.f32 %v2117, 31.0
    %v2122 = vmul.f32 %v2119, 31.0
    %v2123 = vadd.f32 %v2121, 4.0
    %v2124 = vadd.f32 %v2122, 4.0
    %v2125 = vmul.f32 %v2123, 0.125
    %v2126 = vmul.f32 %v2124, 0.125
    %v2127 = vceil.f32 %v2125
    %v2128 = vceil.f32 %v2126
    %v2129 = vsub.f32 %v2127, 1.0
    %v2130 = vsub.f32 %v2128, 1.0
    %v2131 = vmax.f32 %v2129, 0.0
    %v2132 = vmax.f32 %v2130, 0.0
    %v2133 = vmin.f32 %v2131, 31.0
    %v2134 = vmin.f32 %v2132, 31.0
    %v2135 = vmul.f32 %v2133, 8.0
    %v2136 = vmul.f32 %v2134, 8.0
    %2139 = vrot.lane.b32.xlu0 %v2135, 120
    %v2140 = vpop.permute.xlu0 %2139
    %2141 = vrot.lane.b32.xlu0 %v2136, 120
    %v2142 = vpop.permute.xlu0 %2141
    %2145 = vrot.lane.b32.xlu0 %v2135, 112
    %v2146 = vpop.permute.xlu0 %2145
    %2147 = vrot.lane.b32.xlu0 %v2136, 112
    %v2148 = vpop.permute.xlu0 %2147
    %2151 = vrot.lane.b32.xlu0 %v2135, 104
    %v2152 = vpop.permute.xlu0 %2151
    %2153 = vrot.lane.b32.xlu0 %v2136, 104
    %v2154 = vpop.permute.xlu0 %2153
    %v2157 = vrot.slane %v2146, 4
    %v2158 = vsel %vm330, %v2157, %v2135
    %v2159 = vrot.slane %v2135, 4
    %v2160 = vsel %vm330, %v2146, %v2159
    %v2162 = vunpack.c.l.s4 1983009808
    %v2163 = vunpack.c.0.s8 %v2162
    %v2164 = vperm.slane %v2158, %v2163
    %v2166 = vunpack.c.l.s4 1983009808
    %v2167 = vunpack.c.0.s8 %v2166
    %v2168 = vperm.slane %v2160, %v2167
    %v2169 = vrot.slane %v2152, 4
    %v2170 = vsel %vm330, %v2169, %v2140
    %v2171 = vrot.slane %v2140, 4
    %v2172 = vsel %vm330, %v2152, %v2171
    %v2174 = vunpack.c.l.s4 1983009808
    %v2175 = vunpack.c.0.s8 %v2174
    %v2176 = vperm.slane %v2170, %v2175
    %v2178 = vunpack.c.l.s4 1983009808
    %v2179 = vunpack.c.0.s8 %v2178
    %v2180 = vperm.slane %v2172, %v2179
    %v2181 = vrot.slane %v2176, 4
    %v2182 = vsel %vm330, %v2181, %v2164
    %v2183 = vrot.slane %v2164, 4
    %v2184 = vsel %vm330, %v2176, %v2183
    %v2186 = vunpack.c.l.s4 1934713408
    %v2187 = vunpack.c.0.s8 %v2186
    %v2188 = vperm.slane %v2182, %v2187
    %v2190 = vunpack.c.l.s4 1934713408
    %v2191 = vunpack.c.0.s8 %v2190
    %v2192 = vperm.slane %v2184, %v2191
    %v2193 = vrot.slane %v2180, 4
    %v2194 = vsel %vm330, %v2193, %v2168
    %v2195 = vrot.slane %v2168, 4
    %v2196 = vsel %vm330, %v2180, %v2195
    %v2198 = vunpack.c.l.s4 1934713408
    %v2199 = vunpack.c.0.s8 %v2198
    %v2200 = vperm.slane %v2194, %v2199
    %v2202 = vunpack.c.l.s4 1934713408
    %v2203 = vunpack.c.0.s8 %v2202
    %v2204 = vperm.slane %v2196, %v2203
    %v2205 = vrot.slane %v2188, 4
    %v2206 = vsel %vm330, 0.0, %v2205
    %v2207 = vrot.slane %v2192, 4
    %v2208 = vsel %vm330, 0.0, %v2207
    %v2209 = vrot.slane %v2200, 4
    %v2210 = vsel %vm330, 0.0, %v2209
    %v2211 = vrot.slane %v2204, 4
    %v2212 = vsel %vm330, 0.0, %v2211
    %v2213 = vrot.slane %v2148, 4
    %v2214 = vsel %vm330, %v2213, %v2136
    %v2215 = vrot.slane %v2136, 4
    %v2216 = vsel %vm330, %v2148, %v2215
    %v2218 = vunpack.c.l.s4 1983009808
    %v2219 = vunpack.c.0.s8 %v2218
    %v2220 = vperm.slane %v2214, %v2219
    %v2222 = vunpack.c.l.s4 1983009808
    %v2223 = vunpack.c.0.s8 %v2222
    %v2224 = vperm.slane %v2216, %v2223
    %v2225 = vrot.slane %v2154, 4
    %v2226 = vsel %vm330, %v2225, %v2142
    %v2227 = vrot.slane %v2142, 4
    %v2228 = vsel %vm330, %v2154, %v2227
    %v2230 = vunpack.c.l.s4 1983009808
    %v2231 = vunpack.c.0.s8 %v2230
    %v2232 = vperm.slane %v2226, %v2231
    %v2234 = vunpack.c.l.s4 1983009808
    %v2235 = vunpack.c.0.s8 %v2234
    %v2236 = vperm.slane %v2228, %v2235
    %v2237 = vrot.slane %v2232, 4
    %v2238 = vsel %vm330, %v2237, %v2220
    %v2239 = vrot.slane %v2220, 4
    %v2240 = vsel %vm330, %v2232, %v2239
    %v2242 = vunpack.c.l.s4 1934713408
    %v2243 = vunpack.c.0.s8 %v2242
    %v2244 = vperm.slane %v2238, %v2243
    %v2246 = vunpack.c.l.s4 1934713408
    %v2247 = vunpack.c.0.s8 %v2246
    %v2248 = vperm.slane %v2240, %v2247
    %v2249 = vrot.slane %v2236, 4
    %v2250 = vsel %vm330, %v2249, %v2224
    %v2251 = vrot.slane %v2224, 4
    %v2252 = vsel %vm330, %v2236, %v2251
    %v2254 = vunpack.c.l.s4 1934713408
    %v2255 = vunpack.c.0.s8 %v2254
    %v2256 = vperm.slane %v2250, %v2255
    %v2258 = vunpack.c.l.s4 1934713408
    %v2259 = vunpack.c.0.s8 %v2258
    %v2260 = vperm.slane %v2252, %v2259
    %v2261 = vrot.slane %v2244, 4
    %v2262 = vsel %vm330, 0.0, %v2261
    %v2263 = vrot.slane %v2248, 4
    %v2264 = vsel %vm330, 0.0, %v2263
    %v2265 = vrot.slane %v2256, 4
    %v2266 = vsel %vm330, 0.0, %v2265
    %v2267 = vrot.slane %v2260, 4
    %v2268 = vsel %vm330, 0.0, %v2267
    %v2269 = vsel %vm330, %v2207, %v2188
    %v2271 = vunpack.c.l.s4 1983009808
    %v2272 = vunpack.c.0.s8 %v2271
    %v2273 = vperm.slane %v2269, %v2272
    %v2274 = vrot.slane %v2208, 4
    %v2275 = vsel %vm330, %v2274, %v2206
    %v2277 = vunpack.c.l.s4 1983009808
    %v2278 = vunpack.c.0.s8 %v2277
    %v2279 = vperm.slane %v2275, %v2278
    %v2280 = vsel %vm330, %v2211, %v2200
    %v2282 = vunpack.c.l.s4 1983009808
    %v2283 = vunpack.c.0.s8 %v2282
    %v2284 = vperm.slane %v2280, %v2283
    %v2285 = vrot.slane %v2212, 4
    %v2286 = vsel %vm330, %v2285, %v2210
    %v2288 = vunpack.c.l.s4 1983009808
    %v2289 = vunpack.c.0.s8 %v2288
    %v2290 = vperm.slane %v2286, %v2289
    %v2291 = vrot.slane %v2279, 4
    %v2292 = vsel %vm330, %v2291, %v2273
    %v2293 = vrot.slane %v2273, 4
    %v2294 = vsel %vm330, %v2279, %v2293
    %v2296 = vunpack.c.l.s4 1934713408
    %v2297 = vunpack.c.0.s8 %v2296
    %v2298 = vperm.slane %v2292, %v2297
    %v2300 = vunpack.c.l.s4 1934713408
    %v2301 = vunpack.c.0.s8 %v2300
    %v2302 = vperm.slane %v2294, %v2301
    %v2303 = vrot.slane %v2290, 4
    %v2304 = vsel %vm330, %v2303, %v2284
    %v2305 = vrot.slane %v2284, 4
    %v2306 = vsel %vm330, %v2290, %v2305
    %v2308 = vunpack.c.l.s4 1934713408
    %v2309 = vunpack.c.0.s8 %v2308
    %v2310 = vperm.slane %v2304, %v2309
    %v2312 = vunpack.c.l.s4 1934713408
    %v2313 = vunpack.c.0.s8 %v2312
    %v2314 = vperm.slane %v2306, %v2313
    %v2315 = vrot.slane %v2310, 4
    %v2316 = vsel %vm330, %v2315, %v2298
    %v2317 = vrot.slane %v2298, 4
    %v2318 = vsel %vm330, %v2310, %v2317
    %v2319 = vrot.slane %v2314, 4
    %v2320 = vsel %vm330, %v2319, %v2302
    %v2321 = vrot.slane %v2302, 4
    %v2322 = vsel %vm330, %v2314, %v2321
    %v2323 = vsel %vm330, %v2263, %v2244
    %v2325 = vunpack.c.l.s4 1983009808
    %v2326 = vunpack.c.0.s8 %v2325
    %v2327 = vperm.slane %v2323, %v2326
    %v2328 = vrot.slane %v2264, 4
    %v2329 = vsel %vm330, %v2328, %v2262
    %v2331 = vunpack.c.l.s4 1983009808
    %v2332 = vunpack.c.0.s8 %v2331
    %v2333 = vperm.slane %v2329, %v2332
    %v2334 = vsel %vm330, %v2267, %v2256
    %v2336 = vunpack.c.l.s4 1983009808
    %v2337 = vunpack.c.0.s8 %v2336
    %v2338 = vperm.slane %v2334, %v2337
    %v2339 = vrot.slane %v2268, 4
    %v2340 = vsel %vm330, %v2339, %v2266
    %v2342 = vunpack.c.l.s4 1983009808
    %v2343 = vunpack.c.0.s8 %v2342
    %v2344 = vperm.slane %v2340, %v2343
    %v2345 = vrot.slane %v2333, 4
    %v2346 = vsel %vm330, %v2345, %v2327
    %v2347 = vrot.slane %v2327, 4
    %v2348 = vsel %vm330, %v2333, %v2347
    %v2350 = vunpack.c.l.s4 1934713408
    %v2351 = vunpack.c.0.s8 %v2350
    %v2352 = vperm.slane %v2346, %v2351
    %v2354 = vunpack.c.l.s4 1934713408
    %v2355 = vunpack.c.0.s8 %v2354
    %v2356 = vperm.slane %v2348, %v2355
    %v2357 = vrot.slane %v2344, 4
    %v2358 = vsel %vm330, %v2357, %v2338
    %v2359 = vrot.slane %v2338, 4
    %v2360 = vsel %vm330, %v2344, %v2359
    %v2362 = vunpack.c.l.s4 1934713408
    %v2363 = vunpack.c.0.s8 %v2362
    %v2364 = vperm.slane %v2358, %v2363
    %v2366 = vunpack.c.l.s4 1934713408
    %v2367 = vunpack.c.0.s8 %v2366
    %v2368 = vperm.slane %v2360, %v2367
    %v2369 = vrot.slane %v2364, 4
    %v2370 = vsel %vm330, %v2369, %v2352
    %v2371 = vrot.slane %v2352, 4
    %v2372 = vsel %vm330, %v2364, %v2371
    %v2373 = vrot.slane %v2368, 4
    %v2374 = vsel %vm330, %v2373, %v2356
    %v2375 = vrot.slane %v2356, 4
    %v2376 = vsel %vm330, %v2368, %v2375
    %2377 = vrot.lane.b32.xlu0 %v2135, 96
    %v2378 = vpop.permute.xlu0 %2377
    %2379 = vrot.lane.b32.xlu0 %v2136, 96
    %v2380 = vpop.permute.xlu0 %2379
    %2381 = vrot.lane.b32.xlu0 %v2140, 96
    %v2382 = vpop.permute.xlu0 %2381
    %2383 = vrot.lane.b32.xlu0 %v2142, 96
    %v2384 = vpop.permute.xlu0 %2383
    %2385 = vrot.lane.b32.xlu0 %v2146, 96
    %v2386 = vpop.permute.xlu0 %2385
    %2387 = vrot.lane.b32.xlu0 %v2148, 96
    %v2388 = vpop.permute.xlu0 %2387
    %2389 = vrot.lane.b32.xlu0 %v2152, 96
    %v2390 = vpop.permute.xlu0 %2389
    %2391 = vrot.lane.b32.xlu0 %v2154, 96
    %v2392 = vpop.permute.xlu0 %2391
    %v2401 = vrot.slane %v2386, 4
    %v2402 = vsel %vm330, %v2401, %v2378
    %v2403 = vrot.slane %v2378, 4
    %v2404 = vsel %vm330, %v2386, %v2403
    %v2406 = vunpack.c.l.s4 1983009808
    %v2407 = vunpack.c.0.s8 %v2406
    %v2408 = vperm.slane %v2402, %v2407
    %v2410 = vunpack.c.l.s4 1983009808
    %v2411 = vunpack.c.0.s8 %v2410
    %v2412 = vperm.slane %v2404, %v2411
    %v2413 = vrot.slane %v2390, 4
    %v2414 = vsel %vm330, %v2413, %v2382
    %v2415 = vrot.slane %v2382, 4
    %v2416 = vsel %vm330, %v2390, %v2415
    %v2418 = vunpack.c.l.s4 1983009808
    %v2419 = vunpack.c.0.s8 %v2418
    %v2420 = vperm.slane %v2414, %v2419
    %v2422 = vunpack.c.l.s4 1983009808
    %v2423 = vunpack.c.0.s8 %v2422
    %v2424 = vperm.slane %v2416, %v2423
    %v2425 = vrot.slane %v2420, 4
    %v2426 = vsel %vm330, %v2425, %v2408
    %v2427 = vrot.slane %v2408, 4
    %v2428 = vsel %vm330, %v2420, %v2427
    %v2430 = vunpack.c.l.s4 1934713408
    %v2431 = vunpack.c.0.s8 %v2430
    %v2432 = vperm.slane %v2426, %v2431
    %v2434 = vunpack.c.l.s4 1934713408
    %v2435 = vunpack.c.0.s8 %v2434
    %v2436 = vperm.slane %v2428, %v2435
    %v2437 = vrot.slane %v2424, 4
    %v2438 = vsel %vm330, %v2437, %v2412
    %v2439 = vrot.slane %v2412, 4
    %v2440 = vsel %vm330, %v2424, %v2439
    %v2442 = vunpack.c.l.s4 1934713408
    %v2443 = vunpack.c.0.s8 %v2442
    %v2444 = vperm.slane %v2438, %v2443
    %v2446 = vunpack.c.l.s4 1934713408
    %v2447 = vunpack.c.0.s8 %v2446
    %v2448 = vperm.slane %v2440, %v2447
    %v2449 = vrot.slane %v2432, 4
    %v2450 = vsel %vm330, 0.0, %v2449
    %v2451 = vrot.slane %v2436, 4
    %v2452 = vsel %vm330, 0.0, %v2451
    %v2453 = vrot.slane %v2444, 4
    %v2454 = vsel %vm330, 0.0, %v2453
    %v2455 = vrot.slane %v2448, 4
    %v2456 = vsel %vm330, 0.0, %v2455
    %v2457 = vrot.slane %v2388, 4
    %v2458 = vsel %vm330, %v2457, %v2380
    %v2459 = vrot.slane %v2380, 4
    %v2460 = vsel %vm330, %v2388, %v2459
    %v2462 = vunpack.c.l.s4 1983009808
    %v2463 = vunpack.c.0.s8 %v2462
    %v2464 = vperm.slane %v2458, %v2463
    %v2466 = vunpack.c.l.s4 1983009808
    %v2467 = vunpack.c.0.s8 %v2466
    %v2468 = vperm.slane %v2460, %v2467
    %v2469 = vrot.slane %v2392, 4
    %v2470 = vsel %vm330, %v2469, %v2384
    %v2471 = vrot.slane %v2384, 4
    %v2472 = vsel %vm330, %v2392, %v2471
    %v2474 = vunpack.c.l.s4 1983009808
    %v2475 = vunpack.c.0.s8 %v2474
    %v2476 = vperm.slane %v2470, %v2475
    %v2478 = vunpack.c.l.s4 1983009808
    %v2479 = vunpack.c.0.s8 %v2478
    %v2480 = vperm.slane %v2472, %v2479
    %v2481 = vrot.slane %v2476, 4
    %v2482 = vsel %vm330, %v2481, %v2464
    %v2483 = vrot.slane %v2464, 4
    %v2484 = vsel %vm330, %v2476, %v2483
    %v2486 = vunpack.c.l.s4 1934713408
    %v2487 = vunpack.c.0.s8 %v2486
    %v2488 = vperm.slane %v2482, %v2487
    %v2490 = vunpack.c.l.s4 1934713408
    %v2491 = vunpack.c.0.s8 %v2490
    %v2492 = vperm.slane %v2484, %v2491
    %v2493 = vrot.slane %v2480, 4
    %v2494 = vsel %vm330, %v2493, %v2468
    %v2495 = vrot.slane %v2468, 4
    %v2496 = vsel %vm330, %v2480, %v2495
    %v2498 = vunpack.c.l.s4 1934713408
    %v2499 = vunpack.c.0.s8 %v2498
    %v2500 = vperm.slane %v2494, %v2499
    %v2502 = vunpack.c.l.s4 1934713408
    %v2503 = vunpack.c.0.s8 %v2502
    %v2504 = vperm.slane %v2496, %v2503
    %v2505 = vrot.slane %v2488, 4
    %v2506 = vsel %vm330, 0.0, %v2505
    %v2507 = vrot.slane %v2492, 4
    %v2508 = vsel %vm330, 0.0, %v2507
    %v2509 = vrot.slane %v2500, 4
    %v2510 = vsel %vm330, 0.0, %v2509
    %v2511 = vrot.slane %v2504, 4
    %v2512 = vsel %vm330, 0.0, %v2511
    %v2513 = vsel %vm330, %v2451, %v2432
    %v2515 = vunpack.c.l.s4 1983009808
    %v2516 = vunpack.c.0.s8 %v2515
    %v2517 = vperm.slane %v2513, %v2516
    %v2518 = vrot.slane %v2452, 4
    %v2519 = vsel %vm330, %v2518, %v2450
    %v2521 = vunpack.c.l.s4 1983009808
    %v2522 = vunpack.c.0.s8 %v2521
    %v2523 = vperm.slane %v2519, %v2522
    %v2524 = vsel %vm330, %v2455, %v2444
    %v2526 = vunpack.c.l.s4 1983009808
    %v2527 = vunpack.c.0.s8 %v2526
    %v2528 = vperm.slane %v2524, %v2527
    %v2529 = vrot.slane %v2456, 4
    %v2530 = vsel %vm330, %v2529, %v2454
    %v2532 = vunpack.c.l.s4 1983009808
    %v2533 = vunpack.c.0.s8 %v2532
    %v2534 = vperm.slane %v2530, %v2533
    %v2535 = vrot.slane %v2523, 4
    %v2536 = vsel %vm330, %v2535, %v2517
    %v2537 = vrot.slane %v2517, 4
    %v2538 = vsel %vm330, %v2523, %v2537
    %v2540 = vunpack.c.l.s4 1934713408
    %v2541 = vunpack.c.0.s8 %v2540
    %v2542 = vperm.slane %v2536, %v2541
    %v2544 = vunpack.c.l.s4 1934713408
    %v2545 = vunpack.c.0.s8 %v2544
    %v2546 = vperm.slane %v2538, %v2545
    %v2547 = vrot.slane %v2534, 4
    %v2548 = vsel %vm330, %v2547, %v2528
    %v2549 = vrot.slane %v2528, 4
    %v2550 = vsel %vm330, %v2534, %v2549
    %v2552 = vunpack.c.l.s4 1934713408
    %v2553 = vunpack.c.0.s8 %v2552
    %v2554 = vperm.slane %v2548, %v2553
    %v2556 = vunpack.c.l.s4 1934713408
    %v2557 = vunpack.c.0.s8 %v2556
    %v2558 = vperm.slane %v2550, %v2557
    %v2559 = vrot.slane %v2554, 4
    %v2560 = vsel %vm330, %v2559, %v2542
    %v2561 = vrot.slane %v2542, 4
    %v2562 = vsel %vm330, %v2554, %v2561
    %v2563 = vrot.slane %v2558, 4
    %v2564 = vsel %vm330, %v2563, %v2546
    %v2565 = vrot.slane %v2546, 4
    %v2566 = vsel %vm330, %v2558, %v2565
    %v2567 = vsel %vm330, %v2507, %v2488
    %v2569 = vunpack.c.l.s4 1983009808
    %v2570 = vunpack.c.0.s8 %v2569
    %v2571 = vperm.slane %v2567, %v2570
    %v2572 = vrot.slane %v2508, 4
    %v2573 = vsel %vm330, %v2572, %v2506
    %v2575 = vunpack.c.l.s4 1983009808
    %v2576 = vunpack.c.0.s8 %v2575
    %v2577 = vperm.slane %v2573, %v2576
    %v2578 = vsel %vm330, %v2511, %v2500
    %v2580 = vunpack.c.l.s4 1983009808
    %v2581 = vunpack.c.0.s8 %v2580
    %v2582 = vperm.slane %v2578, %v2581
    %v2583 = vrot.slane %v2512, 4
    %v2584 = vsel %vm330, %v2583, %v2510
    %v2586 = vunpack.c.l.s4 1983009808
    %v2587 = vunpack.c.0.s8 %v2586
    %v2588 = vperm.slane %v2584, %v2587
    %v2589 = vrot.slane %v2577, 4
    %v2590 = vsel %vm330, %v2589, %v2571
    %v2591 = vrot.slane %v2571, 4
    %v2592 = vsel %vm330, %v2577, %v2591
    %v2594 = vunpack.c.l.s4 1934713408
    %v2595 = vunpack.c.0.s8 %v2594
    %v2596 = vperm.slane %v2590, %v2595
    %v2598 = vunpack.c.l.s4 1934713408
    %v2599 = vunpack.c.0.s8 %v2598
    %v2600 = vperm.slane %v2592, %v2599
    %v2601 = vrot.slane %v2588, 4
    %v2602 = vsel %vm330, %v2601, %v2582
    %v2603 = vrot.slane %v2582, 4
    %v2604 = vsel %vm330, %v2588, %v2603
    %v2606 = vunpack.c.l.s4 1934713408
    %v2607 = vunpack.c.0.s8 %v2606
    %v2608 = vperm.slane %v2602, %v2607
    %v2610 = vunpack.c.l.s4 1934713408
    %v2611 = vunpack.c.0.s8 %v2610
    %v2612 = vperm.slane %v2604, %v2611
    %v2613 = vrot.slane %v2608, 4
    %v2614 = vsel %vm330, %v2613, %v2596
    %v2615 = vrot.slane %v2596, 4
    %v2616 = vsel %vm330, %v2608, %v2615
    %v2617 = vrot.slane %v2612, 4
    %v2618 = vsel %vm330, %v2617, %v2600
    %v2619 = vrot.slane %v2600, 4
    %v2620 = vsel %vm330, %v2612, %v2619
    %2621 = vrot.lane.b32.xlu0 %v2135, 64
    %v2622 = vpop.permute.xlu0 %2621
    %2623 = vrot.lane.b32.xlu0 %v2136, 64
    %v2624 = vpop.permute.xlu0 %2623
    %2625 = vrot.lane.b32.xlu0 %v2140, 64
    %v2626 = vpop.permute.xlu0 %2625
    %2627 = vrot.lane.b32.xlu0 %v2142, 64
    %v2628 = vpop.permute.xlu0 %2627
    %2629 = vrot.lane.b32.xlu0 %v2146, 64
    %v2630 = vpop.permute.xlu0 %2629
    %2631 = vrot.lane.b32.xlu0 %v2148, 64
    %v2632 = vpop.permute.xlu0 %2631
    %2633 = vrot.lane.b32.xlu0 %v2152, 64
    %v2634 = vpop.permute.xlu0 %2633
    %2635 = vrot.lane.b32.xlu0 %v2154, 64
    %v2636 = vpop.permute.xlu0 %2635
    %v2645 = vrot.slane %v2630, 4
    %v2646 = vsel %vm330, %v2645, %v2622
    %v2647 = vrot.slane %v2622, 4
    %v2648 = vsel %vm330, %v2630, %v2647
    %v2650 = vunpack.c.l.s4 1983009808
    %v2651 = vunpack.c.0.s8 %v2650
    %v2652 = vperm.slane %v2646, %v2651
    %v2654 = vunpack.c.l.s4 1983009808
    %v2655 = vunpack.c.0.s8 %v2654
    %v2656 = vperm.slane %v2648, %v2655
    %v2657 = vrot.slane %v2634, 4
    %v2658 = vsel %vm330, %v2657, %v2626
    %v2659 = vrot.slane %v2626, 4
    %v2660 = vsel %vm330, %v2634, %v2659
    %v2662 = vunpack.c.l.s4 1983009808
    %v2663 = vunpack.c.0.s8 %v2662
    %v2664 = vperm.slane %v2658, %v2663
    %v2666 = vunpack.c.l.s4 1983009808
    %v2667 = vunpack.c.0.s8 %v2666
    %v2668 = vperm.slane %v2660, %v2667
    %v2669 = vrot.slane %v2664, 4
    %v2670 = vsel %vm330, %v2669, %v2652
    %v2671 = vrot.slane %v2652, 4
    %v2672 = vsel %vm330, %v2664, %v2671
    %v2674 = vunpack.c.l.s4 1934713408
    %v2675 = vunpack.c.0.s8 %v2674
    %v2676 = vperm.slane %v2670, %v2675
    %v2678 = vunpack.c.l.s4 1934713408
    %v2679 = vunpack.c.0.s8 %v2678
    %v2680 = vperm.slane %v2672, %v2679
    %v2681 = vrot.slane %v2668, 4
    %v2682 = vsel %vm330, %v2681, %v2656
    %v2683 = vrot.slane %v2656, 4
    %v2684 = vsel %vm330, %v2668, %v2683
    %v2686 = vunpack.c.l.s4 1934713408
    %v2687 = vunpack.c.0.s8 %v2686
    %v2688 = vperm.slane %v2682, %v2687
    %v2690 = vunpack.c.l.s4 1934713408
    %v2691 = vunpack.c.0.s8 %v2690
    %v2692 = vperm.slane %v2684, %v2691
    %v2693 = vrot.slane %v2676, 4
    %v2694 = vsel %vm330, 0.0, %v2693
    %v2695 = vrot.slane %v2680, 4
    %v2696 = vsel %vm330, 0.0, %v2695
    %v2697 = vrot.slane %v2688, 4
    %v2698 = vsel %vm330, 0.0, %v2697
    %v2699 = vrot.slane %v2692, 4
    %v2700 = vsel %vm330, 0.0, %v2699
    %v2701 = vrot.slane %v2632, 4
    %v2702 = vsel %vm330, %v2701, %v2624
    %v2703 = vrot.slane %v2624, 4
    %v2704 = vsel %vm330, %v2632, %v2703
    %v2706 = vunpack.c.l.s4 1983009808
    %v2707 = vunpack.c.0.s8 %v2706
    %v2708 = vperm.slane %v2702, %v2707
    %v2710 = vunpack.c.l.s4 1983009808
    %v2711 = vunpack.c.0.s8 %v2710
    %v2712 = vperm.slane %v2704, %v2711
    %v2713 = vrot.slane %v2636, 4
    %v2714 = vsel %vm330, %v2713, %v2628
    %v2715 = vrot.slane %v2628, 4
    %v2716 = vsel %vm330, %v2636, %v2715
    %v2718 = vunpack.c.l.s4 1983009808
    %v2719 = vunpack.c.0.s8 %v2718
    %v2720 = vperm.slane %v2714, %v2719
    %v2722 = vunpack.c.l.s4 1983009808
    %v2723 = vunpack.c.0.s8 %v2722
    %v2724 = vperm.slane %v2716, %v2723
    %v2725 = vrot.slane %v2720, 4
    %v2726 = vsel %vm330, %v2725, %v2708
    %v2727 = vrot.slane %v2708, 4
    %v2728 = vsel %vm330, %v2720, %v2727
    %v2730 = vunpack.c.l.s4 1934713408
    %v2731 = vunpack.c.0.s8 %v2730
    %v2732 = vperm.slane %v2726, %v2731
    %v2734 = vunpack.c.l.s4 1934713408
    %v2735 = vunpack.c.0.s8 %v2734
    %v2736 = vperm.slane %v2728, %v2735
    %v2737 = vrot.slane %v2724, 4
    %v2738 = vsel %vm330, %v2737, %v2712
    %v2739 = vrot.slane %v2712, 4
    %v2740 = vsel %vm330, %v2724, %v2739
    %v2742 = vunpack.c.l.s4 1934713408
    %v2743 = vunpack.c.0.s8 %v2742
    %v2744 = vperm.slane %v2738, %v2743
    %v2746 = vunpack.c.l.s4 1934713408
    %v2747 = vunpack.c.0.s8 %v2746
    %v2748 = vperm.slane %v2740, %v2747
    %v2749 = vrot.slane %v2732, 4
    %v2750 = vsel %vm330, 0.0, %v2749
    %v2751 = vrot.slane %v2736, 4
    %v2752 = vsel %vm330, 0.0, %v2751
    %v2753 = vrot.slane %v2744, 4
    %v2754 = vsel %vm330, 0.0, %v2753
    %v2755 = vrot.slane %v2748, 4
    %v2756 = vsel %vm330, 0.0, %v2755
    %v2757 = vsel %vm330, %v2695, %v2676
    %v2759 = vunpack.c.l.s4 1983009808
    %v2760 = vunpack.c.0.s8 %v2759
    %v2761 = vperm.slane %v2757, %v2760
    %v2762 = vrot.slane %v2696, 4
    %v2763 = vsel %vm330, %v2762, %v2694
    %v2765 = vunpack.c.l.s4 1983009808
    %v2766 = vunpack.c.0.s8 %v2765
    %v2767 = vperm.slane %v2763, %v2766
    %v2768 = vsel %vm330, %v2699, %v2688
    %v2770 = vunpack.c.l.s4 1983009808
    %v2771 = vunpack.c.0.s8 %v2770
    %v2772 = vperm.slane %v2768, %v2771
    %v2773 = vrot.slane %v2700, 4
    %v2774 = vsel %vm330, %v2773, %v2698
    %v2776 = vunpack.c.l.s4 1983009808
    %v2777 = vunpack.c.0.s8 %v2776
    %v2778 = vperm.slane %v2774, %v2777
    %v2779 = vrot.slane %v2767, 4
    %v2780 = vsel %vm330, %v2779, %v2761
    %v2781 = vrot.slane %v2761, 4
    %v2782 = vsel %vm330, %v2767, %v2781
    %v2784 = vunpack.c.l.s4 1934713408
    %v2785 = vunpack.c.0.s8 %v2784
    %v2786 = vperm.slane %v2780, %v2785
    %v2788 = vunpack.c.l.s4 1934713408
    %v2789 = vunpack.c.0.s8 %v2788
    %v2790 = vperm.slane %v2782, %v2789
    %v2791 = vrot.slane %v2778, 4
    %v2792 = vsel %vm330, %v2791, %v2772
    %v2793 = vrot.slane %v2772, 4
    %v2794 = vsel %vm330, %v2778, %v2793
    %v2796 = vunpack.c.l.s4 1934713408
    %v2797 = vunpack.c.0.s8 %v2796
    %v2798 = vperm.slane %v2792, %v2797
    %v2800 = vunpack.c.l.s4 1934713408
    %v2801 = vunpack.c.0.s8 %v2800
    %v2802 = vperm.slane %v2794, %v2801
    %v2803 = vrot.slane %v2798, 4
    %v2804 = vsel %vm330, %v2803, %v2786
    %v2805 = vrot.slane %v2786, 4
    %v2806 = vsel %vm330, %v2798, %v2805
    %v2807 = vrot.slane %v2802, 4
    %v2808 = vsel %vm330, %v2807, %v2790
    %v2809 = vrot.slane %v2790, 4
    %v2810 = vsel %vm330, %v2802, %v2809
    %v2811 = vsel %vm330, %v2751, %v2732
    %v2813 = vunpack.c.l.s4 1983009808
    %v2814 = vunpack.c.0.s8 %v2813
    %v2815 = vperm.slane %v2811, %v2814
    %v2816 = vrot.slane %v2752, 4
    %v2817 = vsel %vm330, %v2816, %v2750
    %v2819 = vunpack.c.l.s4 1983009808
    %v2820 = vunpack.c.0.s8 %v2819
    %v2821 = vperm.slane %v2817, %v2820
    %v2822 = vsel %vm330, %v2755, %v2744
    %v2824 = vunpack.c.l.s4 1983009808
    %v2825 = vunpack.c.0.s8 %v2824
    %v2826 = vperm.slane %v2822, %v2825
    %v2827 = vrot.slane %v2756, 4
    %v2828 = vsel %vm330, %v2827, %v2754
    %v2830 = vunpack.c.l.s4 1983009808
    %v2831 = vunpack.c.0.s8 %v2830
    %v2832 = vperm.slane %v2828, %v2831
    %v2833 = vrot.slane %v2821, 4
    %v2834 = vsel %vm330, %v2833, %v2815
    %v2835 = vrot.slane %v2815, 4
    %v2836 = vsel %vm330, %v2821, %v2835
    %v2838 = vunpack.c.l.s4 1934713408
    %v2839 = vunpack.c.0.s8 %v2838
    %v2840 = vperm.slane %v2834, %v2839
    %v2842 = vunpack.c.l.s4 1934713408
    %v2843 = vunpack.c.0.s8 %v2842
    %v2844 = vperm.slane %v2836, %v2843
    %v2845 = vrot.slane %v2832, 4
    %v2846 = vsel %vm330, %v2845, %v2826
    %v2847 = vrot.slane %v2826, 4
    %v2848 = vsel %vm330, %v2832, %v2847
    %v2850 = vunpack.c.l.s4 1934713408
    %v2851 = vunpack.c.0.s8 %v2850
    %v2852 = vperm.slane %v2846, %v2851
    %v2854 = vunpack.c.l.s4 1934713408
    %v2855 = vunpack.c.0.s8 %v2854
    %v2856 = vperm.slane %v2848, %v2855
    %v2857 = vrot.slane %v2852, 4
    %v2858 = vsel %vm330, %v2857, %v2840
    %v2859 = vrot.slane %v2840, 4
    %v2860 = vsel %vm330, %v2852, %v2859
    %v2861 = vrot.slane %v2856, 4
    %v2862 = vsel %vm330, %v2861, %v2844
    %v2863 = vrot.slane %v2844, 4
    %v2864 = vsel %vm330, %v2856, %v2863
    %v2865 = vpack.c.bf16 %v2316, %v2316
    %v2866 = vpack.c.bf16 %v2318, %v2318
    %v2867 = vpack.c.bf16 %v2320, %v2320
    %v2868 = vpack.c.bf16 %v2322, %v2322
    %v2869 = vpack.c.bf16 %v2370, %v2370
    %v2870 = vpack.c.bf16 %v2372, %v2372
    %v2871 = vpack.c.bf16 %v2374, %v2374
    %v2872 = vpack.c.bf16 %v2376, %v2376
    %v2873 = vpack.c.bf16 %v2560, %v2560
    %v2874 = vpack.c.bf16 %v2562, %v2562
    %v2875 = vpack.c.bf16 %v2564, %v2564
    %v2876 = vpack.c.bf16 %v2566, %v2566
    %v2877 = vpack.c.bf16 %v2614, %v2614
    %v2878 = vpack.c.bf16 %v2616, %v2616
    %v2879 = vpack.c.bf16 %v2618, %v2618
    %v2880 = vpack.c.bf16 %v2620, %v2620
    %v2882 = vsel %vm1054, %v2865, 0
    %v2885 = vsel %vm1054, %v2873, 0
    %2887 = vmatpush.bf16.xpose.msra.mxu0 0
    %2888 = vmatpush.bf16.xpose.msra.mxu0 0
    %2889 = vmatpush.bf16.xpose.msra.mxu0 0
    %2890 = vmatpush.bf16.xpose.msra.mxu0 0
    %2891 = vmatpush.bf16.xpose.msra.mxu0 0
    %2892 = vmatpush.bf16.xpose.msra.mxu0 0
    %2893 = vmatpush.bf16.xpose.msra.mxu0 0
    %2894 = vmatpush.bf16.xpose.msra.mxu0 %v2885
    %2895 = vmatmul.bf16.gmra.mxu0 %v2882
    %v2896 = vpop.f32.mrf.mxu0
    %v2897 = vadd.f32 0.0, %v2896
    %v2898 = vpop.f32.mrf.mxu0
    %2899 = vdwg.mxu0
    %v2901 = vsel %vm1054, %v2866, 0
    %v2904 = vsel %vm1054, %v2874, 0
    %2906 = vmatpush.bf16.xpose.msra.mxu0 0
    %2907 = vmatpush.bf16.xpose.msra.mxu0 0
    %2908 = vmatpush.bf16.xpose.msra.mxu0 0
    %2909 = vmatpush.bf16.xpose.msra.mxu0 0
    %2910 = vmatpush.bf16.xpose.msra.mxu0 0
    %2911 = vmatpush.bf16.xpose.msra.mxu0 0
    %2912 = vmatpush.bf16.xpose.msra.mxu0 0
    %2913 = vmatpush.bf16.xpose.msra.mxu0 %v2904
    %2914 = vmatmul.bf16.gmra.mxu0 %v2901
    %v2915 = vpop.f32.mrf.mxu0
    %v2916 = vadd.f32 0.0, %v2915
    %v2917 = vpop.f32.mrf.mxu0
    %2918 = vdwg.mxu0
    %v2920 = vsel %vm1054, %v2867, 0
    %v2923 = vsel %vm1054, %v2875, 0
    %2925 = vmatpush.bf16.xpose.msra.mxu0 0
    %2926 = vmatpush.bf16.xpose.msra.mxu0 0
    %2927 = vmatpush.bf16.xpose.msra.mxu0 0
    %2928 = vmatpush.bf16.xpose.msra.mxu0 0
    %2929 = vmatpush.bf16.xpose.msra.mxu0 0
    %2930 = vmatpush.bf16.xpose.msra.mxu0 0
    %2931 = vmatpush.bf16.xpose.msra.mxu0 0
    %2932 = vmatpush.bf16.xpose.msra.mxu0 %v2923
    %2933 = vmatmul.bf16.gmra.mxu0 %v2920
    %v2934 = vpop.f32.mrf.mxu0
    %v2935 = vadd.f32 0.0, %v2934
    %v2936 = vpop.f32.mrf.mxu0
    %2937 = vdwg.mxu0
    %v2939 = vsel %vm1054, %v2868, 0
    %v2942 = vsel %vm1054, %v2876, 0
    %2944 = vmatpush.bf16.xpose.msra.mxu0 0
    %2945 = vmatpush.bf16.xpose.msra.mxu0 0
    %2946 = vmatpush.bf16.xpose.msra.mxu0 0
    %2947 = vmatpush.bf16.xpose.msra.mxu0 0
    %2948 = vmatpush.bf16.xpose.msra.mxu0 0
    %2949 = vmatpush.bf16.xpose.msra.mxu0 0
    %2950 = vmatpush.bf16.xpose.msra.mxu0 0
    %2951 = vmatpush.bf16.xpose.msra.mxu0 %v2942
    %2952 = vmatmul.bf16.gmra.mxu0 %v2939
    %v2953 = vpop.f32.mrf.mxu0
    %v2954 = vadd.f32 0.0, %v2953
    %v2955 = vpop.f32.mrf.mxu0
    %2956 = vdwg.mxu0
    %v2958 = vsel %vm1054, %v2869, 0
    %v2961 = vsel %vm1054, %v2877, 0
    %2963 = vmatpush.bf16.xpose.msra.mxu0 0
    %2964 = vmatpush.bf16.xpose.msra.mxu0 0
    %2965 = vmatpush.bf16.xpose.msra.mxu0 0
    %2966 = vmatpush.bf16.xpose.msra.mxu0 0
    %2967 = vmatpush.bf16.xpose.msra.mxu0 0
    %2968 = vmatpush.bf16.xpose.msra.mxu0 0
    %2969 = vmatpush.bf16.xpose.msra.mxu0 0
    %2970 = vmatpush.bf16.xpose.msra.mxu0 %v2961
    %2971 = vmatmul.bf16.gmra.mxu0 %v2958
    %v2972 = vpop.f32.mrf.mxu0
    %v2973 = vadd.f32 0.0, %v2972
    %v2974 = vpop.f32.mrf.mxu0
    %2975 = vdwg.mxu0
    %v2977 = vsel %vm1054, %v2870, 0
    %v2980 = vsel %vm1054, %v2878, 0
    %2982 = vmatpush.bf16.xpose.msra.mxu0 0
    %2983 = vmatpush.bf16.xpose.msra.mxu0 0
    %2984 = vmatpush.bf16.xpose.msra.mxu0 0
    %2985 = vmatpush.bf16.xpose.msra.mxu0 0
    %2986 = vmatpush.bf16.xpose.msra.mxu0 0
    %2987 = vmatpush.bf16.xpose.msra.mxu0 0
    %2988 = vmatpush.bf16.xpose.msra.mxu0 0
    %2989 = vmatpush.bf16.xpose.msra.mxu0 %v2980
    %2990 = vmatmul.bf16.gmra.mxu0 %v2977
    %v2991 = vpop.f32.mrf.mxu0
    %v2992 = vadd.f32 0.0, %v2991
    %v2993 = vpop.f32.mrf.mxu0
    %2994 = vdwg.mxu0
    %v2996 = vsel %vm1054, %v2871, 0
    %v2999 = vsel %vm1054, %v2879, 0
    %3001 = vmatpush.bf16.xpose.msra.mxu0 0
    %3002 = vmatpush.bf16.xpose.msra.mxu0 0
    %3003 = vmatpush.bf16.xpose.msra.mxu0 0
    %3004 = vmatpush.bf16.xpose.msra.mxu0 0
    %3005 = vmatpush.bf16.xpose.msra.mxu0 0
    %3006 = vmatpush.bf16.xpose.msra.mxu0 0
    %3007 = vmatpush.bf16.xpose.msra.mxu0 0
    %3008 = vmatpush.bf16.xpose.msra.mxu0 %v2999
    %3009 = vmatmul.bf16.gmra.mxu0 %v2996
    %v3010 = vpop.f32.mrf.mxu0
    %v3011 = vadd.f32 0.0, %v3010
    %v3012 = vpop.f32.mrf.mxu0
    %3013 = vdwg.mxu0
    %v3015 = vsel %vm1054, %v2872, 0
    %v3018 = vsel %vm1054, %v2880, 0
    %3020 = vmatpush.bf16.xpose.msra.mxu0 0
    %3021 = vmatpush.bf16.xpose.msra.mxu0 0
    %3022 = vmatpush.bf16.xpose.msra.mxu0 0
    %3023 = vmatpush.bf16.xpose.msra.mxu0 0
    %3024 = vmatpush.bf16.xpose.msra.mxu0 0
    %3025 = vmatpush.bf16.xpose.msra.mxu0 0
    %3026 = vmatpush.bf16.xpose.msra.mxu0 0
    %3027 = vmatpush.bf16.xpose.msra.mxu0 %v3018
    %3028 = vmatmul.bf16.gmra.mxu0 %v3015
    %v3029 = vpop.f32.mrf.mxu0
    %v3030 = vadd.f32 0.0, %v3029
    %v3031 = vpop.f32.mrf.mxu0
    %3032 = vdwg.mxu0
    %v3033 = vmul.f32 %v2897, 0.00018395077
    %v3034 = vmul.f32 %v2916, 0.00018395077
    %v3035 = vmul.f32 %v2935, 0.00018395077
    %v3036 = vmul.f32 %v2954, 0.00018395077
    %v3037 = vmul.f32 %v2973, 0.00018395077
    %v3038 = vmul.f32 %v2992, 0.00018395077
    %v3039 = vmul.f32 %v3011, 0.00018395077
    %v3040 = vmul.f32 %v3030, 0.00018395077
    %v3041 = vadd.f32 %v3033, %v199
    %v3042 = vadd.f32 %v3034, %v199
    %v3043 = vadd.f32 %v3035, %v199
    %v3044 = vadd.f32 %v3036, %v199
    %v3045 = vadd.f32 %v3037, %v199
    %v3046 = vadd.f32 %v3038, %v199
    %v3047 = vadd.f32 %v3039, %v199
    %v3048 = vadd.f32 %v3040, %v199
    %v3049 = vsel %vm1054, %v3041, -inf
    %3050 = vmax.xlane.f32.xlu0 %v3049
    %v3051 = vpop.xlane.xlu0 %3050
    %v3052 = vsel %vm1054, %v3042, -inf
    %3053 = vmax.xlane.f32.xlu0 %v3052
    %v3054 = vpop.xlane.xlu0 %3053
    %v3055 = vsel %vm1054, %v3043, -inf
    %3056 = vmax.xlane.f32.xlu0 %v3055
    %v3057 = vpop.xlane.xlu0 %3056
    %v3058 = vsel %vm1054, %v3044, -inf
    %3059 = vmax.xlane.f32.xlu0 %v3058
    %v3060 = vpop.xlane.xlu0 %3059
    %v3061 = vsel %vm1054, %v3045, -inf
    %3062 = vmax.xlane.f32.xlu0 %v3061
    %v3063 = vpop.xlane.xlu0 %3062
    %v3064 = vsel %vm1054, %v3046, -inf
    %3065 = vmax.xlane.f32.xlu0 %v3064
    %v3066 = vpop.xlane.xlu0 %3065
    %v3067 = vsel %vm1054, %v3047, -inf
    %3068 = vmax.xlane.f32.xlu0 %v3067
    %v3069 = vpop.xlane.xlu0 %3068
    %v3070 = vsel %vm1054, %v3048, -inf
    %3071 = vmax.xlane.f32.xlu0 %v3070
    %v3072 = vpop.xlane.xlu0 %3071
    %v3073 = vsub.f32 %v3041, %v3051
    %v3074 = vsub.f32 %v3042, %v3054
    %v3075 = vsub.f32 %v3043, %v3057
    %v3076 = vsub.f32 %v3044, %v3060
    %v3077 = vsub.f32 %v3045, %v3063
    %v3078 = vsub.f32 %v3046, %v3066
    %v3079 = vsub.f32 %v3047, %v3069
    %v3080 = vsub.f32 %v3048, %v3072
    %v3081 = vmul.f32 %v3073, 1.442695
    %v3082 = vpow.pop %v3081
    %v3083 = vmul.f32 %v3074, 1.442695
    %v3084 = vpow.pop %v3083
    %v3085 = vmul.f32 %v3075, 1.442695
    %v3086 = vpow.pop %v3085
    %v3087 = vmul.f32 %v3076, 1.442695
    %v3088 = vpow.pop %v3087
    %v3089 = vmul.f32 %v3077, 1.442695
    %v3090 = vpow.pop %v3089
    %v3091 = vmul.f32 %v3078, 1.442695
    %v3092 = vpow.pop %v3091
    %v3093 = vmul.f32 %v3079, 1.442695
    %v3094 = vpow.pop %v3093
    %v3095 = vmul.f32 %v3080, 1.442695
    %v3096 = vpow.pop %v3095
    %v3097 = vsel %vm1054, %v3082, 0.0
    %3098 = vadd.xlane.f32.xlu0 %v3097
    %v3099 = vpop.xlane.xlu0 %3098
    %v3100 = vsel %vm1054, %v3084, 0.0
    %3101 = vadd.xlane.f32.xlu0 %v3100
    %v3102 = vpop.xlane.xlu0 %3101
    %v3103 = vsel %vm1054, %v3086, 0.0
    %3104 = vadd.xlane.f32.xlu0 %v3103
    %v3105 = vpop.xlane.xlu0 %3104
    %v3106 = vsel %vm1054, %v3088, 0.0
    %3107 = vadd.xlane.f32.xlu0 %v3106
    %v3108 = vpop.xlane.xlu0 %3107
    %v3109 = vsel %vm1054, %v3090, 0.0
    %3110 = vadd.xlane.f32.xlu0 %v3109
    %v3111 = vpop.xlane.xlu0 %3110
    %v3112 = vsel %vm1054, %v3092, 0.0
    %3113 = vadd.xlane.f32.xlu0 %v3112
    %v3114 = vpop.xlane.xlu0 %3113
    %v3115 = vsel %vm1054, %v3094, 0.0
    %3116 = vadd.xlane.f32.xlu0 %v3115
    %v3117 = vpop.xlane.xlu0 %3116
    %v3118 = vsel %vm1054, %v3096, 0.0
    %3119 = vadd.xlane.f32.xlu0 %v3118
    %v3120 = vpop.xlane.xlu0 %3119
    %v3121 = vrcp.pop %v3099
    %v3122 = vmul.f32 %v3099, %v3121
    %v3123 = vsub.f32 1.0, %v3122
    %v3124 = vmul.f32 %v3121, %v3123
    %v3125 = vadd.f32 %v3121, %v3124
    %vm3126 = vweird.f32 %v3099
    %vm3127 = vweird.f32 %v3121
    %vm3128 = vmor %vm3126, %vm3127
    %v3129 = vsel %vm3128, %v3121, %v3125
    %v3130 = vand.u32 2147483647, %v3099
    %vm3131 = vcmp.eq.f32.partialorder %v3130, 8.507059e+37
    %v3132 = vand.u32 %v3099, 2147483648
    %v3133 = vor.u32 1.1754944e-38, %v3132
    %v3134 = vsel %vm3131, %v3133, %v3129
    %v3135 = vmul.f32 %v3082, %v3134
    %v3136 = vrcp.pop %v3102
    %v3137 = vmul.f32 %v3102, %v3136
    %v3138 = vsub.f32 1.0, %v3137
    %v3139 = vmul.f32 %v3136, %v3138
    %v3140 = vadd.f32 %v3136, %v3139
    %vm3141 = vweird.f32 %v3102
    %vm3142 = vweird.f32 %v3136
    %vm3143 = vmor %vm3141, %vm3142
    %v3144 = vsel %vm3143, %v3136, %v3140
    %v3145 = vand.u32 2147483647, %v3102
    %vm3146 = vcmp.eq.f32.partialorder %v3145, 8.507059e+37
    %v3147 = vand.u32 %v3102, 2147483648
    %v3148 = vor.u32 1.1754944e-38, %v3147
    %v3149 = vsel %vm3146, %v3148, %v3144
    %v3150 = vmul.f32 %v3084, %v3149
    %v3151 = vrcp.pop %v3105
    %v3152 = vmul.f32 %v3105, %v3151
    %v3153 = vsub.f32 1.0, %v3152
    %v3154 = vmul.f32 %v3151, %v3153
    %v3155 = vadd.f32 %v3151, %v3154
    %vm3156 = vweird.f32 %v3105
    %vm3157 = vweird.f32 %v3151
    %vm3158 = vmor %vm3156, %vm3157
    %v3159 = vsel %vm3158, %v3151, %v3155
    %v3160 = vand.u32 2147483647, %v3105
    %vm3161 = vcmp.eq.f32.partialorder %v3160, 8.507059e+37
    %v3162 = vand.u32 %v3105, 2147483648
    %v3163 = vor.u32 1.1754944e-38, %v3162
    %v3164 = vsel %vm3161, %v3163, %v3159
    %v3165 = vmul.f32 %v3086, %v3164
    %v3166 = vrcp.pop %v3108
    %v3167 = vmul.f32 %v3108, %v3166
    %v3168 = vsub.f32 1.0, %v3167
    %v3169 = vmul.f32 %v3166, %v3168
    %v3170 = vadd.f32 %v3166, %v3169
    %vm3171 = vweird.f32 %v3108
    %vm3172 = vweird.f32 %v3166
    %vm3173 = vmor %vm3171, %vm3172
    %v3174 = vsel %vm3173, %v3166, %v3170
    %v3175 = vand.u32 2147483647, %v3108
    %vm3176 = vcmp.eq.f32.partialorder %v3175, 8.507059e+37
    %v3177 = vand.u32 %v3108, 2147483648
    %v3178 = vor.u32 1.1754944e-38, %v3177
    %v3179 = vsel %vm3176, %v3178, %v3174
    %v3180 = vmul.f32 %v3088, %v3179
    %v3181 = vrcp.pop %v3111
    %v3182 = vmul.f32 %v3111, %v3181
    %v3183 = vsub.f32 1.0, %v3182
    %v3184 = vmul.f32 %v3181, %v3183
    %v3185 = vadd.f32 %v3181, %v3184
    %vm3186 = vweird.f32 %v3111
    %vm3187 = vweird.f32 %v3181
    %vm3188 = vmor %vm3186, %vm3187
    %v3189 = vsel %vm3188, %v3181, %v3185
    %v3190 = vand.u32 2147483647, %v3111
    %vm3191 = vcmp.eq.f32.partialorder %v3190, 8.507059e+37
    %v3192 = vand.u32 %v3111, 2147483648
    %v3193 = vor.u32 1.1754944e-38, %v3192
    %v3194 = vsel %vm3191, %v3193, %v3189
    %v3195 = vmul.f32 %v3090, %v3194
    %v3196 = vrcp.pop %v3114
    %v3197 = vmul.f32 %v3114, %v3196
    %v3198 = vsub.f32 1.0, %v3197
    %v3199 = vmul.f32 %v3196, %v3198
    %v3200 = vadd.f32 %v3196, %v3199
    %vm3201 = vweird.f32 %v3114
    %vm3202 = vweird.f32 %v3196
    %vm3203 = vmor %vm3201, %vm3202
    %v3204 = vsel %vm3203, %v3196, %v3200
    %v3205 = vand.u32 2147483647, %v3114
    %vm3206 = vcmp.eq.f32.partialorder %v3205, 8.507059e+37
    %v3207 = vand.u32 %v3114, 2147483648
    %v3208 = vor.u32 1.1754944e-38, %v3207
    %v3209 = vsel %vm3206, %v3208, %v3204
    %v3210 = vmul.f32 %v3092, %v3209
    %v3211 = vrcp.pop %v3117
    %v3212 = vmul.f32 %v3117, %v3211
    %v3213 = vsub.f32 1.0, %v3212
    %v3214 = vmul.f32 %v3211, %v3213
    %v3215 = vadd.f32 %v3211, %v3214
    %vm3216 = vweird.f32 %v3117
    %vm3217 = vweird.f32 %v3211
    %vm3218 = vmor %vm3216, %vm3217
    %v3219 = vsel %vm3218, %v3211, %v3215
    %v3220 = vand.u32 2147483647, %v3117
    %vm3221 = vcmp.eq.f32.partialorder %v3220, 8.507059e+37
    %v3222 = vand.u32 %v3117, 2147483648
    %v3223 = vor.u32 1.1754944e-38, %v3222
    %v3224 = vsel %vm3221, %v3223, %v3219
    %v3225 = vmul.f32 %v3094, %v3224
    %v3226 = vrcp.pop %v3120
    %v3227 = vmul.f32 %v3120, %v3226
    %v3228 = vsub.f32 1.0, %v3227
    %v3229 = vmul.f32 %v3226, %v3228
    %v3230 = vadd.f32 %v3226, %v3229
    %vm3231 = vweird.f32 %v3120
    %vm3232 = vweird.f32 %v3226
    %vm3233 = vmor %vm3231, %vm3232
    %v3234 = vsel %vm3233, %v3226, %v3230
    %v3235 = vand.u32 2147483647, %v3120
    %vm3236 = vcmp.eq.f32.partialorder %v3235, 8.507059e+37
    %v3237 = vand.u32 %v3120, 2147483648
    %v3238 = vor.u32 1.1754944e-38, %v3237
    %v3239 = vsel %vm3236, %v3238, %v3234
    %v3240 = vmul.f32 %v3096, %v3239
    %v3241 = vmax.f32 %v3135, 0.0
    %v3242 = vmax.f32 %v3150, 0.0
    %v3243 = vmax.f32 %v3165, 0.0
    %v3244 = vmax.f32 %v3180, 0.0
    %v3245 = vmax.f32 %v3195, 0.0
    %v3246 = vmax.f32 %v3210, 0.0
    %v3247 = vmax.f32 %v3225, 0.0
    %v3248 = vmax.f32 %v3240, 0.0
    %v3249 = vmin.f32 %v3241, 8.0
    %v3250 = vmin.f32 %v3242, 8.0
    %v3251 = vmin.f32 %v3243, 8.0
    %v3252 = vmin.f32 %v3244, 8.0
    %v3253 = vmin.f32 %v3245, 8.0
    %v3254 = vmin.f32 %v3246, 8.0
    %v3255 = vmin.f32 %v3247, 8.0
    %v3256 = vmin.f32 %v3248, 8.0
    %v3257 = vpack.c.bf16 %v3249, %v3249
    %v3258 = vpack.c.bf16 %v3250, %v3250
    %v3259 = vpack.c.bf16 %v3251, %v3251
    %v3260 = vpack.c.bf16 %v3252, %v3252
    %v3261 = vpack.c.bf16 %v3253, %v3253
    %v3262 = vpack.c.bf16 %v3254, %v3254
    %v3263 = vpack.c.bf16 %v3255, %v3255
    %v3264 = vpack.c.bf16 %v3256, %v3256
    %v3265 = vpack.c.bf16 %v2804, %v2804
    %v3266 = vpack.c.bf16 %v2806, %v2806
    %v3267 = vpack.c.bf16 %v2808, %v2808
    %v3268 = vpack.c.bf16 %v2810, %v2810
    %v3269 = vpack.c.bf16 %v2858, %v2858
    %v3270 = vpack.c.bf16 %v2860, %v2860
    %v3271 = vpack.c.bf16 %v2862, %v2862
    %v3272 = vpack.c.bf16 %v2864, %v2864
    %v3274 = vsel %vm1054, %v3257, 0
    %v3277 = vsel %vm1450, %v3265, 0
    %3279 = vmatpush.bf16.msra.mxu0 0
    %3280 = vmatpush.bf16.msra.mxu0 0
    %3281 = vmatpush.bf16.msra.mxu0 0
    %3282 = vmatpush.bf16.msra.mxu0 0
    %3283 = vmatpush.bf16.msra.mxu0 0
    %3284 = vmatpush.bf16.msra.mxu0 0
    %3285 = vmatpush.bf16.msra.mxu0 0
    %3286 = vmatpush.bf16.msra.mxu0 %v3277
    %3287 = vmatmul.bf16.gmra.mxu0 %v3274
    %v3288 = vpop.f32.mrf.mxu0
    %v3289 = vadd.f32 0.0, %v3288
    %v3290 = vpop.f32.mrf.mxu0
    %3291 = vdwg.mxu0
    %v3293 = vsel %vm1054, %v3258, 0
    %v3296 = vsel %vm1450, %v3266, 0
    %3298 = vmatpush.bf16.msra.mxu0 0
    %3299 = vmatpush.bf16.msra.mxu0 0
    %3300 = vmatpush.bf16.msra.mxu0 0
    %3301 = vmatpush.bf16.msra.mxu0 0
    %3302 = vmatpush.bf16.msra.mxu0 0
    %3303 = vmatpush.bf16.msra.mxu0 0
    %3304 = vmatpush.bf16.msra.mxu0 0
    %3305 = vmatpush.bf16.msra.mxu0 %v3296
    %3306 = vmatmul.bf16.gmra.mxu0 %v3293
    %v3307 = vpop.f32.mrf.mxu0
    %v3308 = vadd.f32 0.0, %v3307
    %v3309 = vpop.f32.mrf.mxu0
    %3310 = vdwg.mxu0
    %v3312 = vsel %vm1054, %v3259, 0
    %v3315 = vsel %vm1450, %v3267, 0
    %3317 = vmatpush.bf16.msra.mxu0 0
    %3318 = vmatpush.bf16.msra.mxu0 0
    %3319 = vmatpush.bf16.msra.mxu0 0
    %3320 = vmatpush.bf16.msra.mxu0 0
    %3321 = vmatpush.bf16.msra.mxu0 0
    %3322 = vmatpush.bf16.msra.mxu0 0
    %3323 = vmatpush.bf16.msra.mxu0 0
    %3324 = vmatpush.bf16.msra.mxu0 %v3315
    %3325 = vmatmul.bf16.gmra.mxu0 %v3312
    %v3326 = vpop.f32.mrf.mxu0
    %v3327 = vadd.f32 0.0, %v3326
    %v3328 = vpop.f32.mrf.mxu0
    %3329 = vdwg.mxu0
    %v3331 = vsel %vm1054, %v3260, 0
    %v3334 = vsel %vm1450, %v3268, 0
    %3336 = vmatpush.bf16.msra.mxu0 0
    %3337 = vmatpush.bf16.msra.mxu0 0
    %3338 = vmatpush.bf16.msra.mxu0 0
    %3339 = vmatpush.bf16.msra.mxu0 0
    %3340 = vmatpush.bf16.msra.mxu0 0
    %3341 = vmatpush.bf16.msra.mxu0 0
    %3342 = vmatpush.bf16.msra.mxu0 0
    %3343 = vmatpush.bf16.msra.mxu0 %v3334
    %3344 = vmatmul.bf16.gmra.mxu0 %v3331
    %v3345 = vpop.f32.mrf.mxu0
    %v3346 = vadd.f32 0.0, %v3345
    %v3347 = vpop.f32.mrf.mxu0
    %3348 = vdwg.mxu0
    %v3350 = vsel %vm1054, %v3261, 0
    %v3353 = vsel %vm1450, %v3269, 0
    %3355 = vmatpush.bf16.msra.mxu0 0
    %3356 = vmatpush.bf16.msra.mxu0 0
    %3357 = vmatpush.bf16.msra.mxu0 0
    %3358 = vmatpush.bf16.msra.mxu0 0
    %3359 = vmatpush.bf16.msra.mxu0 0
    %3360 = vmatpush.bf16.msra.mxu0 0
    %3361 = vmatpush.bf16.msra.mxu0 0
    %3362 = vmatpush.bf16.msra.mxu0 %v3353
    %3363 = vmatmul.bf16.gmra.mxu0 %v3350
    %v3364 = vpop.f32.mrf.mxu0
    %v3365 = vadd.f32 0.0, %v3364
    %v3366 = vpop.f32.mrf.mxu0
    %3367 = vdwg.mxu0
    %v3369 = vsel %vm1054, %v3262, 0
    %v3372 = vsel %vm1450, %v3270, 0
    %3374 = vmatpush.bf16.msra.mxu0 0
    %3375 = vmatpush.bf16.msra.mxu0 0
    %3376 = vmatpush.bf16.msra.mxu0 0
    %3377 = vmatpush.bf16.msra.mxu0 0
    %3378 = vmatpush.bf16.msra.mxu0 0
    %3379 = vmatpush.bf16.msra.mxu0 0
    %3380 = vmatpush.bf16.msra.mxu0 0
    %3381 = vmatpush.bf16.msra.mxu0 %v3372
    %3382 = vmatmul.bf16.gmra.mxu0 %v3369
    %v3383 = vpop.f32.mrf.mxu0
    %v3384 = vadd.f32 0.0, %v3383
    %v3385 = vpop.f32.mrf.mxu0
    %3386 = vdwg.mxu0
    %v3388 = vsel %vm1054, %v3263, 0
    %v3391 = vsel %vm1450, %v3271, 0
    %3393 = vmatpush.bf16.msra.mxu0 0
    %3394 = vmatpush.bf16.msra.mxu0 0
    %3395 = vmatpush.bf16.msra.mxu0 0
    %3396 = vmatpush.bf16.msra.mxu0 0
    %3397 = vmatpush.bf16.msra.mxu0 0
    %3398 = vmatpush.bf16.msra.mxu0 0
    %3399 = vmatpush.bf16.msra.mxu0 0
    %3400 = vmatpush.bf16.msra.mxu0 %v3391
    %3401 = vmatmul.bf16.gmra.mxu0 %v3388
    %v3402 = vpop.f32.mrf.mxu0
    %v3403 = vadd.f32 0.0, %v3402
    %v3404 = vpop.f32.mrf.mxu0
    %3405 = vdwg.mxu0
    %v3407 = vsel %vm1054, %v3264, 0
    %v3410 = vsel %vm1450, %v3272, 0
    %3412 = vmatpush.bf16.msra.mxu0 0
    %3413 = vmatpush.bf16.msra.mxu0 0
    %3414 = vmatpush.bf16.msra.mxu0 0
    %3415 = vmatpush.bf16.msra.mxu0 0
    %3416 = vmatpush.bf16.msra.mxu0 0
    %3417 = vmatpush.bf16.msra.mxu0 0
    %3418 = vmatpush.bf16.msra.mxu0 0
    %3419 = vmatpush.bf16.msra.mxu0 %v3410
    %3420 = vmatmul.bf16.gmra.mxu0 %v3407
    %v3421 = vpop.f32.mrf.mxu0
    %v3422 = vadd.f32 0.0, %v3421
    %v3423 = vpop.f32.mrf.mxu0
    %3424 = vdwg.mxu0
    %v3425 = vrot.slane %v3327, 4
    %v3426 = vsel %vm330, %v3425, %v3289
    %v3427 = vrot.slane %v3289, 4
    %v3428 = vsel %vm330, %v3327, %v3427
    %v3430 = vunpack.c.l.s4 1983009808
    %v3431 = vunpack.c.0.s8 %v3430
    %v3432 = vperm.slane %v3426, %v3431
    %v3434 = vunpack.c.l.s4 1983009808
    %v3435 = vunpack.c.0.s8 %v3434
    %v3436 = vperm.slane %v3428, %v3435
    %v3437 = vrot.slane %v3346, 4
    %v3438 = vsel %vm330, %v3437, %v3308
    %v3439 = vrot.slane %v3308, 4
    %v3440 = vsel %vm330, %v3346, %v3439
    %v3442 = vunpack.c.l.s4 1983009808
    %v3443 = vunpack.c.0.s8 %v3442
    %v3444 = vperm.slane %v3438, %v3443
    %v3446 = vunpack.c.l.s4 1983009808
    %v3447 = vunpack.c.0.s8 %v3446
    %v3448 = vperm.slane %v3440, %v3447
    %v3449 = vrot.slane %v3444, 4
    %v3450 = vsel %vm330, %v3449, %v3432
    %v3451 = vrot.slane %v3432, 4
    %v3452 = vsel %vm330, %v3444, %v3451
    %v3454 = vunpack.c.l.s4 1934713408
    %v3455 = vunpack.c.0.s8 %v3454
    %v3456 = vperm.slane %v3450, %v3455
    %v3458 = vunpack.c.l.s4 1934713408
    %v3459 = vunpack.c.0.s8 %v3458
    %v3460 = vperm.slane %v3452, %v3459
    %v3461 = vrot.slane %v3448, 4
    %v3462 = vsel %vm330, %v3461, %v3436
    %v3463 = vrot.slane %v3436, 4
    %v3464 = vsel %vm330, %v3448, %v3463
    %v3466 = vunpack.c.l.s4 1934713408
    %v3467 = vunpack.c.0.s8 %v3466
    %v3468 = vperm.slane %v3462, %v3467
    %v3470 = vunpack.c.l.s4 1934713408
    %v3471 = vunpack.c.0.s8 %v3470
    %v3472 = vperm.slane %v3464, %v3471
    %v3473 = vrot.slane %v3456, 4
    %v3474 = vsel %vm330, 0.0, %v3473
    %v3475 = vrot.slane %v3460, 4
    %v3476 = vsel %vm330, 0.0, %v3475
    %v3477 = vrot.slane %v3468, 4
    %v3478 = vsel %vm330, 0.0, %v3477
    %v3479 = vrot.slane %v3472, 4
    %v3480 = vsel %vm330, 0.0, %v3479
    %v3481 = vrot.slane %v3403, 4
    %v3482 = vsel %vm330, %v3481, %v3365
    %v3483 = vrot.slane %v3365, 4
    %v3484 = vsel %vm330, %v3403, %v3483
    %v3486 = vunpack.c.l.s4 1983009808
    %v3487 = vunpack.c.0.s8 %v3486
    %v3488 = vperm.slane %v3482, %v3487
    %v3490 = vunpack.c.l.s4 1983009808
    %v3491 = vunpack.c.0.s8 %v3490
    %v3492 = vperm.slane %v3484, %v3491
    %v3493 = vrot.slane %v3422, 4
    %v3494 = vsel %vm330, %v3493, %v3384
    %v3495 = vrot.slane %v3384, 4
    %v3496 = vsel %vm330, %v3422, %v3495
    %v3498 = vunpack.c.l.s4 1983009808
    %v3499 = vunpack.c.0.s8 %v3498
    %v3500 = vperm.slane %v3494, %v3499
    %v3502 = vunpack.c.l.s4 1983009808
    %v3503 = vunpack.c.0.s8 %v3502
    %v3504 = vperm.slane %v3496, %v3503
    %v3505 = vrot.slane %v3500, 4
    %v3506 = vsel %vm330, %v3505, %v3488
    %v3507 = vrot.slane %v3488, 4
    %v3508 = vsel %vm330, %v3500, %v3507
    %v3510 = vunpack.c.l.s4 1934713408
    %v3511 = vunpack.c.0.s8 %v3510
    %v3512 = vperm.slane %v3506, %v3511
    %v3514 = vunpack.c.l.s4 1934713408
    %v3515 = vunpack.c.0.s8 %v3514
    %v3516 = vperm.slane %v3508, %v3515
    %v3517 = vrot.slane %v3504, 4
    %v3518 = vsel %vm330, %v3517, %v3492
    %v3519 = vrot.slane %v3492, 4
    %v3520 = vsel %vm330, %v3504, %v3519
    %v3522 = vunpack.c.l.s4 1934713408
    %v3523 = vunpack.c.0.s8 %v3522
    %v3524 = vperm.slane %v3518, %v3523
    %v3526 = vunpack.c.l.s4 1934713408
    %v3527 = vunpack.c.0.s8 %v3526
    %v3528 = vperm.slane %v3520, %v3527
    %v3529 = vrot.slane %v3512, 4
    %v3530 = vsel %vm330, 0.0, %v3529
    %v3531 = vrot.slane %v3516, 4
    %v3532 = vsel %vm330, 0.0, %v3531
    %v3533 = vrot.slane %v3524, 4
    %v3534 = vsel %vm330, 0.0, %v3533
    %v3535 = vrot.slane %v3528, 4
    %v3536 = vsel %vm330, 0.0, %v3535
    %v3537 = vsel %vm330, %v3475, %v3456
    %v3539 = vunpack.c.l.s4 1983009808
    %v3540 = vunpack.c.0.s8 %v3539
    %v3541 = vperm.slane %v3537, %v3540
    %v3542 = vrot.slane %v3476, 4
    %v3543 = vsel %vm330, %v3542, %v3474
    %v3545 = vunpack.c.l.s4 1983009808
    %v3546 = vunpack.c.0.s8 %v3545
    %v3547 = vperm.slane %v3543, %v3546
    %v3548 = vsel %vm330, %v3479, %v3468
    %v3550 = vunpack.c.l.s4 1983009808
    %v3551 = vunpack.c.0.s8 %v3550
    %v3552 = vperm.slane %v3548, %v3551
    %v3553 = vrot.slane %v3480, 4
    %v3554 = vsel %vm330, %v3553, %v3478
    %v3556 = vunpack.c.l.s4 1983009808
    %v3557 = vunpack.c.0.s8 %v3556
    %v3558 = vperm.slane %v3554, %v3557
    %v3559 = vrot.slane %v3547, 4
    %v3560 = vsel %vm330, %v3559, %v3541
    %v3561 = vrot.slane %v3541, 4
    %v3562 = vsel %vm330, %v3547, %v3561
    %v3564 = vunpack.c.l.s4 1934713408
    %v3565 = vunpack.c.0.s8 %v3564
    %v3566 = vperm.slane %v3560, %v3565
    %v3568 = vunpack.c.l.s4 1934713408
    %v3569 = vunpack.c.0.s8 %v3568
    %v3570 = vperm.slane %v3562, %v3569
    %v3571 = vrot.slane %v3558, 4
    %v3572 = vsel %vm330, %v3571, %v3552
    %v3573 = vrot.slane %v3552, 4
    %v3574 = vsel %vm330, %v3558, %v3573
    %v3576 = vunpack.c.l.s4 1934713408
    %v3577 = vunpack.c.0.s8 %v3576
    %v3578 = vperm.slane %v3572, %v3577
    %v3580 = vunpack.c.l.s4 1934713408
    %v3581 = vunpack.c.0.s8 %v3580
    %v3582 = vperm.slane %v3574, %v3581
    %v3583 = vrot.slane %v3578, 4
    %v3584 = vsel %vm330, %v3583, %v3566
    %v3585 = vrot.slane %v3566, 4
    %v3586 = vsel %vm330, %v3578, %v3585
    %v3587 = vrot.slane %v3582, 4
    %v3588 = vsel %vm330, %v3587, %v3570
    %v3589 = vrot.slane %v3570, 4
    %v3590 = vsel %vm330, %v3582, %v3589
    %v3591 = vsel %vm330, %v3531, %v3512
    %v3593 = vunpack.c.l.s4 1983009808
    %v3594 = vunpack.c.0.s8 %v3593
    %v3595 = vperm.slane %v3591, %v3594
    %v3596 = vrot.slane %v3532, 4
    %v3597 = vsel %vm330, %v3596, %v3530
    %v3599 = vunpack.c.l.s4 1983009808
    %v3600 = vunpack.c.0.s8 %v3599
    %v3601 = vperm.slane %v3597, %v3600
    %v3602 = vsel %vm330, %v3535, %v3524
    %v3604 = vunpack.c.l.s4 1983009808
    %v3605 = vunpack.c.0.s8 %v3604
    %v3606 = vperm.slane %v3602, %v3605
    %v3607 = vrot.slane %v3536, 4
    %v3608 = vsel %vm330, %v3607, %v3534
    %v3610 = vunpack.c.l.s4 1983009808
    %v3611 = vunpack.c.0.s8 %v3610
    %v3612 = vperm.slane %v3608, %v3611
    %v3613 = vrot.slane %v3601, 4
    %v3614 = vsel %vm330, %v3613, %v3595
    %v3615 = vrot.slane %v3595, 4
    %v3616 = vsel %vm330, %v3601, %v3615
    %v3618 = vunpack.c.l.s4 1934713408
    %v3619 = vunpack.c.0.s8 %v3618
    %v3620 = vperm.slane %v3614, %v3619
    %v3622 = vunpack.c.l.s4 1934713408
    %v3623 = vunpack.c.0.s8 %v3622
    %v3624 = vperm.slane %v3616, %v3623
    %v3625 = vrot.slane %v3612, 4
    %v3626 = vsel %vm330, %v3625, %v3606
    %v3627 = vrot.slane %v3606, 4
    %v3628 = vsel %vm330, %v3612, %v3627
    %v3630 = vunpack.c.l.s4 1934713408
    %v3631 = vunpack.c.0.s8 %v3630
    %v3632 = vperm.slane %v3626, %v3631
    %v3634 = vunpack.c.l.s4 1934713408
    %v3635 = vunpack.c.0.s8 %v3634
    %v3636 = vperm.slane %v3628, %v3635
    %v3637 = vrot.slane %v3632, 4
    %v3638 = vsel %vm330, %v3637, %v3620
    %v3639 = vrot.slane %v3620, 4
    %v3640 = vsel %vm330, %v3632, %v3639
    %v3641 = vrot.slane %v3636, 4
    %v3642 = vsel %vm330, %v3641, %v3624
    %v3643 = vrot.slane %v3624, 4
    %v3644 = vsel %vm330, %v3636, %v3643
    %3647 = vrot.lane.b32.xlu0 %v3586, 8
    %v3648 = vpop.permute.xlu0 %3647
    %3649 = vrot.lane.b32.xlu0 %v3640, 8
    %v3650 = vpop.permute.xlu0 %3649
    %3655 = vrot.lane.b32.xlu0 %v3588, 16
    %v3656 = vpop.permute.xlu0 %3655
    %3657 = vrot.lane.b32.xlu0 %v3642, 16
    %v3658 = vpop.permute.xlu0 %3657
    %3663 = vrot.lane.b32.xlu0 %v3590, 24
    %v3664 = vpop.permute.xlu0 %3663
    %3665 = vrot.lane.b32.xlu0 %v3644, 24
    %v3666 = vpop.permute.xlu0 %3665
    %v3669 = vsel %vm1054, %v3584, %v3648
    %v3670 = vsel %vm1054, %v3638, %v3650
    %v3671 = vsel %vm1846, %v3669, %v3656
    %v3672 = vsel %vm1846, %v3670, %v3658
    %v3673 = vsel %vm1849, %v3671, %v3664
    %v3674 = vsel %vm1849, %v3672, %v3666
    %v3675 = vadd.f32 %v3673, 4.0
    %v3676 = vadd.f32 %v3674, 4.0
    %v3677 = vmul.f32 %v3675, 0.125
    %v3678 = vmul.f32 %v3676, 0.125
    %v3679 = vceil.f32 %v3677
    %v3680 = vceil.f32 %v3678
    %v3681 = vsub.f32 %v3679, 1.0
    %v3682 = vsub.f32 %v3680, 1.0
    %v3683 = vmax.f32 %v3681, 0.0
    %v3684 = vmax.f32 %v3682, 0.0
    %v3685 = vmin.f32 %v3683, 31.0
    %v3686 = vmin.f32 %v3684, 31.0
    %v3687 = vmul.f32 %v3685, 8.0
    %v3688 = vmul.f32 %v3686, 8.0
    %v3689 = vpack.c.bf16 %v3688, %v3687
    %s3690 = scalar_lea.vmem [#allocation6], 16
    %v3691 = vld [vmem:[%s3690] sm:$0xf]
    %v3692 = vld [vmem:[%s3690 + $0x4] sm:$0xf]
    %v3693 = vld [vmem:[%s3690 + $0x8] sm:$0xf]
    %v3694 = vld [vmem:[%s3690 + $0xc] sm:$0xf]
    %v3699 = vunpack.c.l.b16 %v3691
    %v3700 = vunpack.c.l.b16 %v3692
    %v3701 = vunpack.c.l.b16 %v3693
    %v3702 = vunpack.c.l.b16 %v3694
    %v3703 = vpack.c.b16 %v3700, %v3699
    %v3704 = vpack.c.b16 %v3702, %v3701
    %v3708 = vsel %vm201, %v3689, 0
    %3710 = vmatpush.bf16.msra.mxu0 0
    %3711 = vmatpush.bf16.msra.mxu0 0
    %3712 = vmatpush.bf16.msra.mxu0 0
    %3713 = vmatpush.bf16.msra.mxu0 0
    %3714 = vmatpush.bf16.msra.mxu0 0
    %3715 = vmatpush.bf16.msra.mxu0 0
    %3716 = vmatpush.bf16.msra.mxu0 %v3704
    %3717 = vmatpush.bf16.msra.mxu0 %v3703
    %3718 = vmatmul.bf16.gmra.mxu0 %v3708
    %v3719 = vpop.f32.mrf.mxu0
    %v3720 = vadd.f32 4.0, %v3719
    %v3721 = vpop.f32.mrf.mxu0
    %v3722 = vadd.f32 4.0, %v3721
    %3723 = vdwg.mxu0
    %v3724 = vmul.f32 %v3720, 0.125
    %v3725 = vmul.f32 %v3722, 0.125
    %v3726 = vceil.f32 %v3724
    %v3727 = vceil.f32 %v3725
    %v3728 = vsub.f32 %v3726, 1.0
    %v3729 = vsub.f32 %v3727, 1.0
    %v3730 = vmax.f32 %v3728, 0.0
    %v3731 = vmax.f32 %v3729, 0.0
    %v3732 = vmin.f32 %v3730, 31.0
    %v3733 = vmin.f32 %v3731, 31.0
    %v3734 = vmul.f32 %v3732, 0.2580645
    %v3735 = vmul.f32 %v3733, 0.2580645
    %v3736 = vadd.f32 %v2032, %v3734
    %v3737 = vadd.f32 %v2033, %v3735
    %v3738 = vperm.slane %v2035, 2
    %v3739 = vmul.f32 %v2078, %v3738
    %v3740 = vmul.f32 %v2079, %v3738
    %v3741 = vperm.slane %v2035, 3
    %v3742 = vadd.f32 %v3739, %v3741
    %v3743 = vadd.f32 %v3740, %v3741
    %v3744 = vpack.c.bf16 %v3743, %v3742
    %s3745 = scalar_lea.vmem %s6, 16
    %v3746 = vld [vmem:[%s3745] sm:$0xf]
    %v3747 = vld [vmem:[%s3745 + $0x4] sm:$0xf]
    %v3748 = vld [vmem:[%s3745 + $0x8] sm:$0xf]
    %v3749 = vld [vmem:[%s3745 + $0xc] sm:$0xf]
    %v3754 = vunpack.c.l.b16 %v3746
    %v3755 = vunpack.c.l.b16 %v3747
    %v3756 = vunpack.c.l.b16 %v3748
    %v3757 = vunpack.c.l.b16 %v3749
    %v3758 = vpack.c.b16 %v3755, %v3754
    %v3759 = vpack.c.b16 %v3757, %v3756
    %v3763 = vsel %vm201, %v3744, 0
    %3765 = vmatpush.bf16.msra.mxu0 0
    %3766 = vmatpush.bf16.msra.mxu0 0
    %3767 = vmatpush.bf16.msra.mxu0 0
    %3768 = vmatpush.bf16.msra.mxu0 0
    %3769 = vmatpush.bf16.msra.mxu0 0
    %3770 = vmatpush.bf16.msra.mxu0 0
    %3771 = vmatpush.bf16.msra.mxu0 %v3759
    %3772 = vmatpush.bf16.msra.mxu0 %v3758
    %3773 = vmatmul.bf16.gmra.mxu0 %v3763
    %v3774 = vpop.f32.mrf.mxu0
    %v3775 = vadd.f32 0.0, %v3774
    %v3776 = vpop.f32.mrf.mxu0
    %v3777 = vadd.f32 0.0, %v3776
    %3778 = vdwg.mxu0
    %v3779 = vmul.f32 %v3775, 31.0
    %v3780 = vmul.f32 %v3777, 31.0
    %v3781 = vadd.f32 %v3779, 4.0
    %v3782 = vadd.f32 %v3780, 4.0
    %v3783 = vmul.f32 %v3781, 0.125
    %v3784 = vmul.f32 %v3782, 0.125
    %v3785 = vceil.f32 %v3783
    %v3786 = vceil.f32 %v3784
    %v3787 = vsub.f32 %v3785, 1.0
    %v3788 = vsub.f32 %v3786, 1.0
    %v3789 = vmax.f32 %v3787, 0.0
    %v3790 = vmax.f32 %v3788, 0.0
    %v3791 = vmin.f32 %v3789, 31.0
    %v3792 = vmin.f32 %v3790, 31.0
    %v3793 = vmul.f32 %v3791, 8.0
    %v3794 = vmul.f32 %v3792, 8.0
    %v3795 = vpack.c.bf16 %v3794, %v3793
    %s3796 = scalar_lea.vmem [#allocation7], 32
    %v3797 = vld [vmem:[%s3796] sm:$0xf]
    %v3798 = vld [vmem:[%s3796 + $0x4] sm:$0xf]
    %v3799 = vld [vmem:[%s3796 + $0x8] sm:$0xf]
    %v3800 = vld [vmem:[%s3796 + $0xc] sm:$0xf]
    %v3801 = vld [vmem:[%s3796 + $0x10] sm:$0xf]
    %v3802 = vld [vmem:[%s3796 + $0x14] sm:$0xf]
    %v3803 = vld [vmem:[%s3796 + $0x18] sm:$0xf]
    %v3804 = vld [vmem:[%s3796 + $0x1c] sm:$0xf]
    %v3813 = vunpack.c.l.b16 %v3797
    %v3814 = vunpack.c.l.b16 %v3798
    %v3815 = vunpack.c.l.b16 %v3799
    %v3816 = vunpack.c.l.b16 %v3800
    %v3817 = vunpack.c.l.b16 %v3801
    %v3818 = vunpack.c.l.b16 %v3802
    %v3819 = vunpack.c.l.b16 %v3803
    %v3820 = vunpack.c.l.b16 %v3804
    %v3821 = vpack.c.b16 %v3814, %v3813
    %v3822 = vpack.c.b16 %v3816, %v3815
    %v3823 = vpack.c.b16 %v3818, %v3817
    %v3824 = vpack.c.b16 %v3820, %v3819
    %v3830 = vsel %vm162, %v3795, 0
    %3832 = vmatpush.bf16.msra.mxu0 0
    %3833 = vmatpush.bf16.msra.mxu0 0
    %3834 = vmatpush.bf16.msra.mxu0 0
    %3835 = vmatpush.bf16.msra.mxu0 0
    %3836 = vmatpush.bf16.msra.mxu0 %v3824
    %3837 = vmatpush.bf16.msra.mxu0 %v3823
    %3838 = vmatpush.bf16.msra.mxu0 %v3822
    %3839 = vmatpush.bf16.msra.mxu0 %v3821
    %3840 = vmatmul.bf16.gmra.mxu0 %v3830
    %v3841 = vpop.f32.mrf.mxu0
    %v3842 = vadd.f32 4.0, %v3841
    %v3843 = vpop.f32.mrf.mxu0
    %v3844 = vadd.f32 4.0, %v3843
    %3845 = vdwg.mxu0
    %v3846 = vmul.f32 %v3842, 0.125
    %v3847 = vmul.f32 %v3844, 0.125
    %v3848 = vceil.f32 %v3846
    %v3849 = vceil.f32 %v3847
    %v3850 = vsub.f32 %v3848, 1.0
    %v3851 = vsub.f32 %v3849, 1.0
    %v3852 = vmax.f32 %v3850, 0.0
    %v3853 = vmax.f32 %v3851, 0.0
    %v3854 = vmin.f32 %v3852, 31.0
    %v3855 = vmin.f32 %v3853, 31.0
    %v3856 = vmul.f32 %v3854, 0.2580645
    %v3857 = vmul.f32 %v3855, 0.2580645
    %v3858 = vadd.f32 %v3736, %v3856
    %v3859 = vadd.f32 %v3737, %v3857
    %v3860 = vpack.c.bf16 %v3859, %v3858
    %v3861 = vld [vmem:[#allocation9] sm:$0xf]
    %v3862 = vld [vmem:[#allocation9 + $0x4] sm:$0xf]
    %v3863 = vld [vmem:[#allocation9 + $0x8] sm:$0xf]
    %v3864 = vld [vmem:[#allocation9 + $0xc] sm:$0xf]
    %v3869 = vunpack.c.l.b16 %v3861
    %v3870 = vunpack.c.l.b16 %v3862
    %v3871 = vunpack.c.l.b16 %v3863
    %v3872 = vunpack.c.l.b16 %v3864
    %v3873 = vpack.c.b16 %v3870, %v3869
    %v3874 = vpack.c.b16 %v3872, %v3871
    %v3878 = vsel %vm201, %v3860, 0
    %3880 = vmatpush.bf16.msra.mxu0 0
    %3881 = vmatpush.bf16.msra.mxu0 0
    %3882 = vmatpush.bf16.msra.mxu0 0
    %3883 = vmatpush.bf16.msra.mxu0 0
    %3884 = vmatpush.bf16.msra.mxu0 0
    %3885 = vmatpush.bf16.msra.mxu0 0
    %3886 = vmatpush.bf16.msra.mxu0 %v3874
    %3887 = vmatpush.bf16.msra.mxu0 %v3873
    %3888 = vmatmul.bf16.gmra.mxu0 %v3878
    %v3889 = vpop.f32.mrf.mxu0
    %v3890 = vadd.f32 0.0, %v3889
    %v3891 = vpop.f32.mrf.mxu0
    %v3892 = vadd.f32 0.0, %v3891
    %3893 = vdwg.mxu0
    %3894 = vst.msk [vmem:[%s9] sm:$0xff] %vm162, %v3890
    %3895 = vst.msk [vmem:[%s9 + $0x8] sm:$0xff] %vm162, %v3892
    // Predicated region
    $region58: #{fwd.1} parent=1 // pred_check
      _
    $region59: #{fwd.1} parent=1 // pred_check_branch
      %3897 = sbr.rel (0) target = $region61
    $region60: #{fwd.1} parent=1 // pred_region
      _
    $region61: #{fwd.1} parent=1 // pred_fallthru
      _
    // Predicated region
    $region62: #{fwd.1} parent=1 // pred_check
      _
    $region63: #{fwd.1} parent=1 // pred_check_branch
      %3899 = sbr.rel (0) target = $region65
    $region64: #{fwd.1} parent=1 // pred_region
      _
    $region65: #{fwd.1} parent=1 // pred_fallthru
      _
    %3900 = vsyncpa [#allocation3], 1
    %3901 = vsyncpa [#allocation5], 1
    %3902 = vsyncpa [#allocation8], 1

</llo_original>
